<compile_context>
chip_gen: v6e
topology: v6e:2x2x1
jax: 0.10.0
libtpu: 0.0.40
codegen_flags: <defaults>
</compile_context>

<pallas_src>
import functools
import math

import jax
import jax.numpy as jnp
import numpy as np
from jax.experimental import pallas as pl
from jax.experimental.pallas import tpu as pltpu


def _default_msg_dtype():
    """bf16 message elementwise on v6e/v7x (packed VALU); f32 on v5e (no bf16 VPU)."""
    try:
        kind = jax.devices()[0].device_kind.lower()
    except Exception:
        return jnp.bfloat16
    if "v5 lite" in kind or "v5e" in kind or "v5litepod" in kind:
        return jnp.float32
    return jnp.bfloat16


def _check_tiling(N, tile_dst, src_blk):
    assert N % 8 == 0, "N must be a multiple of 8 (sublane constraint)"
    assert tile_dst % 8 == 0 and N % tile_dst == 0, "tile_dst: multiple of 8, divides N"
    assert N % src_blk == 0 and (src_blk == N or src_blk % 128 == 0), \
        "src_blk must divide N and be a multiple of 128 (or == N)"


# ---------------------------------------------------------------------------
# Shared per-(dst-tile, relation) FiLM step.
#   acc_ref: f32 [TILE_DST, C] accumulator (skip path at r==0, += relation agg).
# ---------------------------------------------------------------------------
def _film_step(x_ref, wr_ref, wfr_ref, bfr_ref, wskip_ref, adj_ref,
               inv_deg_ref, acc_ref, *, tile_dst, src_blk, msg_dtype):
    cout = wr_ref.shape[-1]
    n_src = x_ref.shape[0]
    r = pl.program_id(1)
    d0 = pl.multiple_of(pl.program_id(0) * tile_dst, tile_dst)
    x_dst = x_ref[pl.ds(d0, tile_dst), :].astype(jnp.bfloat16)        # [T, Cin]

    # Skip connection (once per dst tile): fused [W_skip | film_skip] matmul.
    @pl.when(r == 0)
    def _init():
        s = jnp.dot(x_dst, wskip_ref[...],
                    preferred_element_type=jnp.float32)               # [T, 3C]
        h_s = s[:, :cout]
        beta_s = s[:, cout:2 * cout]
        gamma_s = s[:, 2 * cout:]
        acc_ref[...] = jnp.maximum(gamma_s * h_s + beta_s, 0.0)       # act = ReLU

    # FiLM (beta, gamma) of this relation from the dst rows (PyG: beta first).
    # Weight stacks are resident; index the relation here (no per-step DMA).
    w_r = wr_ref[r]                                                   # [Cin, C]
    fb = jnp.dot(x_dst, wfr_ref[r],
                 preferred_element_type=jnp.float32) + bfr_ref[r]     # [T, 2C]
    beta = fb[:, :cout].astype(msg_dtype)
    gamma = fb[:, cout:].astype(msg_dtype)

    # Src-chunked message phase: only [T, SRC_BLK, C] is live at a time; only
    # per-chunk partial sums are converted/accumulated in f32.
    # TODO(synk): for real (sparse) graphs replace this dense O(R*N^2*C)
    # message loop with an edge-block / CSR formulation (sort edges by
    # (relation, dst block), PrefetchScalarGridSpec per-block offsets, gather
    # only src rows that carry edges) -> VALU work drops to ~E*C.
    # TODO(synk): at production widths pad C (and N on the adj lane axis) to
    # multiples of 128 for lane-dense vregs / unmasked stores.
    n_chunks = n_src // src_blk
    total = jnp.zeros((tile_dst, cout), jnp.float32)
    for c in range(n_chunks):        # static trip count -> static ref views
        s0 = c * src_blk
        x_src = x_ref[pl.ds(s0, src_blk), :].astype(jnp.bfloat16)     # [S, Cin]
        h = jnp.dot(x_src, w_r,
                    preferred_element_type=jnp.float32).astype(msg_dtype)
        # adj chunk is lane-dense over src; broadcasting it over C relayouts
        # the small [T, S] tile once per chunk (XLU, O(T*S), has slack).
        adj_c = adj_ref[:, pl.ds(s0, src_blk)].astype(msg_dtype)      # [T, S]
        msg = jnp.maximum(
            gamma[:, None, :] * h[None, :, :] + beta[:, None, :], 0.0)
        weighted = adj_c[:, :, None] * msg                            # [T, S, C]
        total = total + jnp.sum(weighted, axis=1, dtype=jnp.float32)

    # Mean aggregation: adj holds exact bf16 edge counts; normalize by 1/deg
    # once per dst tile, in f32, after the src sum (== PyG scatter-mean).
    inv = inv_deg_ref[r, pl.ds(d0, tile_dst), :]                      # [T, 1] f32
    acc_ref[...] += total * inv


# ---------------------------------------------------------------------------
# Kernel 1: one FiLMConv layer fused with eval-mode BatchNorm (hidden layers).
# ---------------------------------------------------------------------------
def film_conv_bn_kernel(x_ref, wr_ref, wfr_ref, bfr_ref, wskip_ref, adj_ref,
                        inv_deg_ref, bn_scale_ref, bn_shift_ref, o_ref,
                        acc_ref, *, tile_dst, src_blk, msg_dtype):
    _film_step(x_ref, wr_ref, wfr_ref, bfr_ref, wskip_ref, adj_ref,
               inv_deg_ref, acc_ref,
               tile_dst=tile_dst, src_blk=src_blk, msg_dtype=msg_dtype)

    @pl.when(pl.program_id(1) == pl.num_programs(1) - 1)
    def _bn():
        # Eval-mode BatchNorm folded into scale/shift; emit bf16 activations.
        o_ref[...] = (acc_ref[...] * bn_scale_ref[...]
                      + bn_shift_ref[...]).astype(o_ref.dtype)


# ---------------------------------------------------------------------------
# Kernel 2: last FiLMConv layer + BatchNorm + MLP head, fully fused.
# ---------------------------------------------------------------------------
def film_conv_bn_head_kernel(x_ref, wr_ref, wfr_ref, bfr_ref, wskip_ref,
                             adj_ref, inv_deg_ref, bn_scale_ref, bn_shift_ref,
                             w1_ref, b1_ref, w2_ref, b2_ref, o_ref, acc_ref,
                             *, tile_dst, src_blk, msg_dtype):
    _film_step(x_ref, wr_ref, wfr_ref, bfr_ref, wskip_ref, adj_ref,
               inv_deg_ref, acc_ref,
               tile_dst=tile_dst, src_blk=src_blk, msg_dtype=msg_dtype)

    @pl.when(pl.program_id(1) == pl.num_programs(1) - 1)
    def _finish():
        hidden = acc_ref[...] * bn_scale_ref[...] + bn_shift_ref[...]
        # TODO(synk): training-mode RNG dropout not implemented (eval => identity).
        z = jnp.dot(hidden.astype(jnp.bfloat16), w1_ref[...],
                    preferred_element_type=jnp.float32) + b1_ref[...]
        z = jnp.where(z > 0, z, 0.2 * z)                              # LeakyReLU(0.2)
        o_ref[...] = jnp.dot(z.astype(jnp.bfloat16), w2_ref[...],
                             preferred_element_type=jnp.float32) + b2_ref[...]


# ---------------------------------------------------------------------------
# pallas_call wrappers.
# ---------------------------------------------------------------------------
def _film_in_specs(N, cin, cout, R, tile_dst):
    return [
        pl.BlockSpec((N, cin), lambda i, r: (0, 0)),                  # x (resident)
        pl.BlockSpec((R, cin, cout), lambda i, r: (0, 0, 0)),         # W_r stack (resident)
        pl.BlockSpec((R, cin, 2 * cout), lambda i, r: (0, 0, 0)),     # film W stack
        pl.BlockSpec((R, 1, 2 * cout), lambda i, r: (0, 0, 0)),       # film bias stack
        pl.BlockSpec((cin, 3 * cout), lambda i, r: (0, 0)),           # [W_skip | film_skip]
        pl.BlockSpec((None, tile_dst, N), lambda i, r: (r, i, 0)),    # adj counts tile
        pl.BlockSpec((R, N, 1), lambda i, r: (0, 0, 0)),              # 1/deg (f32, resident)
        pl.BlockSpec((1, cout), lambda i, r: (0, 0)),                 # BN scale
        pl.BlockSpec((1, cout), lambda i, r: (0, 0)),                 # BN shift
    ]


_COMPILER_PARAMS = pltpu.CompilerParams(
    dimension_semantics=("parallel", "arbitrary"),
    vmem_limit_bytes=32 * 1024 * 1024,   # sized for v7x's 64 MiB physical VMEM
)


def film_conv_bn(x, layer, adj, inv_deg, *, tile_dst, src_blk=None,
                 msg_dtype=None):
    N, cin = x.shape
    R, _, cout = layer["wr"].shape
    src_blk = N if src_blk is None else src_blk
    msg_dtype = _default_msg_dtype() if msg_dtype is None else msg_dtype
    _check_tiling(N, tile_dst, src_blk)
    kern = functools.partial(film_conv_bn_kernel, tile_dst=tile_dst,
                             src_blk=src_blk, msg_dtype=msg_dtype)
    return pl.pallas_call(
        kern,
        out_shape=jax.ShapeDtypeStruct((N, cout), jnp.bfloat16),
        grid=(N // tile_dst, R),
        in_specs=_film_in_specs(N, cin, cout, R, tile_dst),
        out_specs=pl.BlockSpec((tile_dst, cout), lambda i, r: (i, 0)),
        scratch_shapes=[pltpu.VMEM((tile_dst, cout), jnp.float32)],
        compiler_params=_COMPILER_PARAMS,
    )(x, layer["wr"], layer["wfr"], layer["bfr"], layer["wskip"], adj,
      inv_deg, layer["bn_scale"], layer["bn_shift"])


def film_conv_bn_head(x, layer, adj, inv_deg, w1, b1, w2, b2, *, tile_dst,
                      src_blk=None, msg_dtype=None):
    N, cin = x.shape
    R, _, cout = layer["wr"].shape
    hid4 = w1.shape[-1]
    out_ch = w2.shape[-1]
    src_blk = N if src_blk is None else src_blk
    msg_dtype = _default_msg_dtype() if msg_dtype is None else msg_dtype
    _check_tiling(N, tile_dst, src_blk)
    head_specs = [
        pl.BlockSpec((cout, hid4), lambda i, r: (0, 0)),              # head w1
        pl.BlockSpec((1, hid4), lambda i, r: (0, 0)),                 # head b1
        pl.BlockSpec((hid4, out_ch), lambda i, r: (0, 0)),            # head w2
        pl.BlockSpec((1, out_ch), lambda i, r: (0, 0)),               # head b2
    ]
    kern = functools.partial(film_conv_bn_head_kernel, tile_dst=tile_dst,
                             src_blk=src_blk, msg_dtype=msg_dtype)
    # TODO(synk): at production sizes pad the narrow head output lane dim to a
    # multiple of 128 (unmasked vst) and slice after the call.
    return pl.pallas_call(
        kern,
        out_shape=jax.ShapeDtypeStruct((N, out_ch), jnp.float32),
        grid=(N // tile_dst, R),
        in_specs=_film_in_specs(N, cin, cout, R, tile_dst) + head_specs,
        out_specs=pl.BlockSpec((tile_dst, out_ch), lambda i, r: (i, 0)),
        scratch_shapes=[pltpu.VMEM((tile_dst, cout), jnp.float32)],
        compiler_params=_COMPILER_PARAMS,
    )(x, layer["wr"], layer["wfr"], layer["bfr"], layer["wskip"], adj,
      inv_deg, layer["bn_scale"], layer["bn_shift"], w1, b1, w2, b2)


# ---------------------------------------------------------------------------
# Pure-JAX f32 reference (same bf16-rounded weights / counts; only the
# in-kernel bf16 compute path differs).
# ---------------------------------------------------------------------------
def film_conv_bn_ref(x, p, adj_counts, inv_deg):
    wr = p["wr"].astype(jnp.float32)
    wfr = p["wfr"].astype(jnp.float32)
    wskip = p["wskip"].astype(jnp.float32)
    adj = adj_counts.astype(jnp.float32) * inv_deg        # mean weights [R,N,N]
    cout = wr.shape[-1]
    s = x @ wskip
    out = jnp.maximum(s[:, 2 * cout:] * s[:, :cout] + s[:, cout:2 * cout], 0.0)
    for r in range(wr.shape[0]):
        h = x @ wr[r]
        fb = x @ wfr[r] + p["bfr"][r]
        beta, gamma = fb[:, :cout], fb[:, cout:]
        msg = jnp.maximum(gamma[:, None, :] * h[None, :, :] + beta[:, None, :], 0.0)
        out = out + jnp.sum(adj[r][:, :, None] * msg, axis=1)
    return out * p["bn_scale"] + p["bn_shift"]


def mlp_head_ref(x, w1, b1, w2, b2):
    h = x @ w1.astype(jnp.float32) + b1
    h = jnp.where(h > 0, h, 0.2 * h)
    return h @ w2.astype(jnp.float32) + b2


# ---------------------------------------------------------------------------
# Deterministic parameter init & driver.
# ---------------------------------------------------------------------------
def init_film_layer(key, R, cin, cout):
    ks = jax.random.split(key, 8)
    s = 1.0 / math.sqrt(cin)
    u = lambda k, shape: jax.random.uniform(k, shape, jnp.float32, minval=-s, maxval=s)
    wr = u(ks[0], (R, cin, cout))                 # lins[r]    (no bias)
    wfr = u(ks[1], (R, cin, 2 * cout))            # films[r]   weight
    bfr = u(ks[2], (R, 1, 2 * cout))              # films[r]   bias
    ws = u(ks[3], (cin, cout))                    # lin_skip   (no bias)
    wfs = u(ks[4], (cin, 2 * cout))               # film_skip  (no bias)
    wskip = jnp.concatenate([ws, wfs], axis=1)    # fused [W_skip | film_skip]
    # BatchNorm1d (eval mode), folded into scale/shift.
    bn_w = jax.random.uniform(ks[5], (1, cout), jnp.float32, 0.5, 1.5)
    bn_b = jax.random.uniform(ks[6], (1, cout), jnp.float32, -0.1, 0.1)
    run_mean = jax.random.normal(ks[7], (1, cout), jnp.float32) * 0.1
    run_var = jnp.ones((1, cout), jnp.float32)
    eps = 1e-5
    bn_scale = bn_w / jnp.sqrt(run_var + eps)
    bn_shift = bn_b - run_mean * bn_scale
    return dict(wr=wr.astype(jnp.bfloat16), wfr=wfr.astype(jnp.bfloat16),
                bfr=bfr, wskip=wskip.astype(jnp.bfloat16),
                bn_scale=bn_scale, bn_shift=bn_shift)


if __name__ == "__main__":
    N, IN_CH, HID, OUT_CH = 64, 16, 32, 8
    R, N_LAYERS, E = 3, 2, 256
    TILE_DST = 32      # multiple of 8; raise to 128-256 at production sizes
    SRC_BLK = None     # defaults to N here; multiple of 128 at production N

    key = jax.random.PRNGKey(0)
    k_x, k_ei, k_et, k_l0, k_l1, k_w1, k_b1, k_w2, k_b2 = jax.random.split(key, 9)

    # Inputs (graph + node features).
    x = jax.random.normal(k_x, (N, IN_CH), jnp.float32)
    edge_index = jax.random.randint(k_ei, (2, E), 0, N)       # [2, E] (src, dst)
    edge_type = jax.random.randint(k_et, (E,), 0, R)          # [E]

    # Dense lane-dense adjacency of edge COUNTS A[r, dst, src] (exact in bf16)
    # plus f32 1/deg for the mean normalization applied after the src sum.
    # TODO(synk): for real (sparse) graphs, replace with a scalar-prefetched
    # CSR / edge-block formulation instead of dense O(R*N^2) adjacency.
    counts = jnp.zeros((R, N, N), jnp.float32).at[
        edge_type, edge_index[1], edge_index[0]].add(1.0)
    deg = counts.sum(axis=2, keepdims=True)                   # [R, N, 1]
    inv_deg = jnp.where(deg > 0, 1.0 / jnp.maximum(deg, 1.0), 0.0)
    adj_counts = counts.astype(jnp.bfloat16)

    # Parameters.
    layers = [init_film_layer(k_l0, R, IN_CH, HID),
              init_film_layer(k_l1, R, HID, HID)]
    sh = 1.0 / math.sqrt(HID)
    sq = 1.0 / math.sqrt(HID // 4)
    w1 = jax.random.uniform(k_w1, (HID, HID // 4), jnp.float32, -sh, sh).astype(jnp.bfloat16)
    b1 = jax.random.uniform(k_b1, (1, HID // 4), jnp.float32, -sh, sh)
    w2 = jax.random.uniform(k_w2, (HID // 4, OUT_CH), jnp.float32, -sq, sq).astype(jnp.bfloat16)
    b2 = jax.random.uniform(k_b2, (1, OUT_CH), jnp.float32, -sq, sq)

    # Forward (Pallas kernels). Dropout is identity in eval mode.
    h = x
    for p in layers[:-1]:
        h = film_conv_bn(h, p, adj_counts, inv_deg,
                         tile_dst=TILE_DST, src_blk=SRC_BLK)
    out = film_conv_bn_head(h, layers[-1], adj_counts, inv_deg,
                            w1, b1, w2, b2,
                            tile_dst=TILE_DST, src_blk=SRC_BLK)
    out = jax.block_until_ready(out)

    # Pure-JAX reference (f32 math; inter-layer activations rounded to bf16 to
    # mirror the kernel's bf16 layer outputs; tolerance covers the in-kernel
    # bf16 MXU / message-path compute).
    h_ref = x
    for li, p in enumerate(layers):
        h_ref = film_conv_bn_ref(h_ref, p, adj_counts, inv_deg)
        if li < len(layers) - 1:
            h_ref = h_ref.astype(jnp.bfloat16).astype(jnp.float32)
    out_ref = mlp_head_ref(h_ref, w1, b1, w2, b2)
    np.testing.assert_allclose(np.asarray(out), np.asarray(out_ref),
                               rtol=3e-2, atol=3e-2)

    print("KERNEL_OK")
</pallas_src>

<mosaic_0001>
module attributes {stable_mosaic.version = 11 : i64} {
  func.func @film_conv_bn_kernel(%arg0: i32, %arg1: i32, %arg2: memref<64x16xf32, #tpu.memory_space<vmem>>, %arg3: memref<3x16x32xbf16, #tpu.memory_space<vmem>>, %arg4: memref<3x16x64xbf16, #tpu.memory_space<vmem>>, %arg5: memref<3x1x64xf32, #tpu.memory_space<vmem>>, %arg6: memref<16x96xbf16, #tpu.memory_space<vmem>>, %arg7: memref<1x32x64xbf16, #tpu.memory_space<vmem>>, %arg8: memref<3x64x1xf32, #tpu.memory_space<vmem>>, %arg9: memref<1x32xf32, #tpu.memory_space<vmem>>, %arg10: memref<1x32xf32, #tpu.memory_space<vmem>>, %arg11: memref<32x32xbf16, #tpu.memory_space<vmem>>, %arg12: memref<32x32xf32, #tpu.memory_space<vmem>>) attributes {dimension_semantics = [#tpu.dimension_semantics<parallel>, #tpu.dimension_semantics<arbitrary>], iteration_bounds = array<i64: 2, 3>, scalar_prefetch = 0 : i64, scratch_operands = 1 : i64, tpu.core_type = #tpu.core_type<tc>, window_params = [{pipeline_mode = #tpu.pipeline_mode<synchronous>, transform_indices = @transform_0, window_bounds = array<i64: 64, 16>}, {pipeline_mode = #tpu.pipeline_mode<synchronous>, transform_indices = @transform_1, window_bounds = array<i64: 3, 16, 32>}, {pipeline_mode = #tpu.pipeline_mode<synchronous>, transform_indices = @transform_2, window_bounds = array<i64: 3, 16, 64>}, {pipeline_mode = #tpu.pipeline_mode<synchronous>, transform_indices = @transform_3, window_bounds = array<i64: 3, 1, 64>}, {pipeline_mode = #tpu.pipeline_mode<synchronous>, transform_indices = @transform_4, window_bounds = array<i64: 16, 96>}, {transform_indices = @transform_5, window_bounds = array<i64: 1, 32, 64>}, {pipeline_mode = #tpu.pipeline_mode<synchronous>, transform_indices = @transform_6, window_bounds = array<i64: 3, 64, 1>}, {pipeline_mode = #tpu.pipeline_mode<synchronous>, transform_indices = @transform_7, window_bounds = array<i64: 1, 32>}, {pipeline_mode = #tpu.pipeline_mode<synchronous>, transform_indices = @transform_8, window_bounds = array<i64: 1, 32>}, {transform_indices = @transform_9, window_bounds = array<i64: 32, 32>}]} {
    %c32_i32 = arith.constant 32 : i32
    %0 = arith.muli %arg0, %c32_i32 : i32
    %1 = tpu.assume_multiple %0, 32 : i32
    %2 = arith.index_cast %1 : i32 to index
    %c0 = arith.constant 0 : index
    %3 = vector.load %arg2[%2, %c0] : memref<64x16xf32, #tpu.memory_space<vmem>>, vector<32x16xf32>
    %4 = arith.truncf %3 : vector<32x16xf32> to vector<32x16xbf16>
    %c0_i32 = arith.constant 0 : i32
    %5 = arith.cmpi eq, %arg1, %c0_i32 : i32
    %6 = arith.extui %5 : i1 to i32
    %c0_i32_0 = arith.constant 0 : i32
    %7 = arith.cmpi ne, %6, %c0_i32_0 : i32
    scf.if %7 {
      %c0_22 = arith.constant 0 : index
      %c0_23 = arith.constant 0 : index
      %59 = vector.load %arg6[%c0_22, %c0_23] : memref<16x96xbf16, #tpu.memory_space<vmem>>, vector<16x96xbf16>
      %cst_24 = arith.constant dense<0.000000e+00> : vector<32x96xf32>
      %60 = tpu.matmul %4, %59, %cst_24 {dimension_numbers = #tpu.dot_dimension_numbers<[1], [0], [0], [1], [0, 0, 1, 1], [], []>} : vector<32x16xbf16>, vector<16x96xbf16>, vector<32x96xf32> -> vector<32x96xf32>
      %61 = vector.extract_strided_slice %60 {offsets = [0, 0], sizes = [32, 32], strides = [1, 1]} : vector<32x96xf32> to vector<32x32xf32>
      %62 = vector.extract_strided_slice %60 {offsets = [0, 32], sizes = [32, 32], strides = [1, 1]} : vector<32x96xf32> to vector<32x32xf32>
      %63 = vector.extract_strided_slice %60 {offsets = [0, 64], sizes = [32, 32], strides = [1, 1]} : vector<32x96xf32> to vector<32x32xf32>
      %64 = arith.mulf %63, %61 : vector<32x32xf32>
      %65 = arith.addf %64, %62 : vector<32x32xf32>
      %cst_25 = arith.constant 0.000000e+00 : f32
      %66 = vector.broadcast %cst_25 : f32 to vector<32x32xf32>
      %67 = arith.maximumf %65, %66 : vector<32x32xf32>
      %c0_26 = arith.constant 0 : index
      %c0_27 = arith.constant 0 : index
      %68 = vector.load %arg12[%c0_26, %c0_27] : memref<32x32xf32, #tpu.memory_space<vmem>>, vector<32x32xf32>
      tpu.vector_store %arg12[%c0_26, %c0_27], %67 {strides = array<i32>} : memref<32x32xf32, #tpu.memory_space<vmem>>, vector<32x32xf32>,
    } else {
    }
    %8 = arith.index_cast %arg1 : i32 to index
    %c0_1 = arith.constant 0 : index
    %c0_2 = arith.constant 0 : index
    %9 = vector.load %arg3[%8, %c0_1, %c0_2] : memref<3x16x32xbf16, #tpu.memory_space<vmem>>, vector<1x16x32xbf16>
    %10 = vector.shape_cast %9 : vector<1x16x32xbf16> to vector<16x32xbf16>
    %11 = arith.index_cast %arg1 : i32 to index
    %c0_3 = arith.constant 0 : index
    %c0_4 = arith.constant 0 : index
    %12 = vector.load %arg4[%11, %c0_3, %c0_4] : memref<3x16x64xbf16, #tpu.memory_space<vmem>>, vector<1x16x64xbf16>
    %13 = vector.shape_cast %12 : vector<1x16x64xbf16> to vector<16x64xbf16>
    %cst = arith.constant dense<0.000000e+00> : vector<32x64xf32>
    %14 = tpu.matmul %4, %13, %cst {dimension_numbers = #tpu.dot_dimension_numbers<[1], [0], [0], [1], [0, 0, 1, 1], [], []>} : vector<32x16xbf16>, vector<16x64xbf16>, vector<32x64xf32> -> vector<32x64xf32>
    %15 = arith.index_cast %arg1 : i32 to index
    %c0_5 = arith.constant 0 : index
    %c0_6 = arith.constant 0 : index
    %16 = vector.load %arg5[%15, %c0_5, %c0_6] : memref<3x1x64xf32, #tpu.memory_space<vmem>>, vector<1x1x64xf32>
    %17 = vector.shape_cast %16 : vector<1x1x64xf32> to vector<1x64xf32>
    %18 = vector.broadcast %17 : vector<1x64xf32> to vector<32x64xf32>
    %19 = arith.addf %14, %18 : vector<32x64xf32>
    %20 = vector.extract_strided_slice %19 {offsets = [0, 0], sizes = [32, 32], strides = [1, 1]} : vector<32x64xf32> to vector<32x32xf32>
    %21 = arith.truncf %20 : vector<32x32xf32> to vector<32x32xbf16>
    %22 = vector.extract_strided_slice %19 {offsets = [0, 32], sizes = [32, 32], strides = [1, 1]} : vector<32x64xf32> to vector<32x32xf32>
    %23 = arith.truncf %22 : vector<32x32xf32> to vector<32x32xbf16>
    %cst_7 = arith.constant 0.000000e+00 : f32
    %24 = vector.broadcast %cst_7 : f32 to vector<32x32xf32>
    %c0_8 = arith.constant 0 : index
    %c0_9 = arith.constant 0 : index
    %25 = vector.load %arg2[%c0_8, %c0_9] : memref<64x16xf32, #tpu.memory_space<vmem>>, vector<64x16xf32>
    %26 = arith.truncf %25 : vector<64x16xf32> to vector<64x16xbf16>
    %cst_10 = arith.constant dense<0.000000e+00> : vector<64x32xf32>
    %27 = tpu.matmul %26, %10, %cst_10 {dimension_numbers = #tpu.dot_dimension_numbers<[1], [0], [0], [1], [0, 0, 1, 1], [], []>} : vector<64x16xbf16>, vector<16x32xbf16>, vector<64x32xf32> -> vector<64x32xf32>
    %28 = arith.truncf %27 : vector<64x32xf32> to vector<64x32xbf16>
    %c0_11 = arith.constant 0 : index
    %c0_12 = arith.constant 0 : index
    %c0_13 = arith.constant 0 : index
    %29 = vector.load %arg7[%c0_11, %c0_12, %c0_13] : memref<1x32x64xbf16, #tpu.memory_space<vmem>>, vector<1x32x64xbf16>
    %30 = vector.shape_cast %29 : vector<1x32x64xbf16> to vector<32x64xbf16>
    %31 = vector.shape_cast %23 : vector<32x32xbf16> to vector<32x1x32xbf16>
    %32 = vector.shape_cast %28 : vector<64x32xbf16> to vector<1x64x32xbf16>
    %33 = vector.broadcast %31 : vector<32x1x32xbf16> to vector<32x64x32xbf16>
    %34 = vector.broadcast %32 : vector<1x64x32xbf16> to vector<32x64x32xbf16>
    %35 = arith.mulf %33, %34 : vector<32x64x32xbf16>
    %36 = vector.shape_cast %21 : vector<32x32xbf16> to vector<32x1x32xbf16>
    %37 = vector.broadcast %36 : vector<32x1x32xbf16> to vector<32x64x32xbf16>
    %38 = arith.addf %35, %37 : vector<32x64x32xbf16>
    %cst_14 = arith.constant 0.000000e+00 : bf16
    %39 = vector.broadcast %cst_14 : bf16 to vector<32x64x32xbf16>
    %40 = arith.maximumf %38, %39 : vector<32x64x32xbf16>
    %41 = vector.shape_cast %30 : vector<32x64xbf16> to vector<32x64x1xbf16>
    %42 = vector.broadcast %41 : vector<32x64x1xbf16> to vector<32x64x32xbf16>
    %43 = arith.mulf %42, %40 : vector<32x64x32xbf16>
    %44 = arith.extf %43 : vector<32x64x32xbf16> to vector<32x64x32xf32>
    %cst_15 = arith.constant dense<0.000000e+00> : vector<32x32xf32>
    %45 = vector.multi_reduction <add>, %44, %cst_15 [1] : vector<32x64x32xf32> to vector<32x32xf32>
    %46 = arith.addf %24, %45 : vector<32x32xf32>
    %47 = arith.index_cast %arg1 : i32 to index
    %48 = arith.index_cast %1 : i32 to index
    %c0_16 = arith.constant 0 : index
    %49 = vector.load %arg8[%47, %48, %c0_16] : memref<3x64x1xf32, #tpu.memory_space<vmem>>, vector<1x32x1xf32>
    %50 = vector.shape_cast %49 : vector<1x32x1xf32> to vector<32x1xf32>
    %c0_17 = arith.constant 0 : index
    %c0_18 = arith.constant 0 : index
    %51 = vector.load %arg12[%c0_17, %c0_18] : memref<32x32xf32, #tpu.memory_space<vmem>>, vector<32x32xf32>
    %52 = vector.broadcast %50 : vector<32x1xf32> to vector<32x32xf32>
    %53 = arith.mulf %46, %52 : vector<32x32xf32>
    %54 = arith.addf %51, %53 : vector<32x32xf32>
    %c0_19 = arith.constant 0 : index
    %c0_20 = arith.constant 0 : index
    %55 = vector.load %arg12[%c0_19, %c0_20] : memref<32x32xf32, #tpu.memory_space<vmem>>, vector<32x32xf32>
    tpu.vector_store %arg12[%c0_19, %c0_20], %54 {strides = array<i32>} : memref<32x32xf32, #tpu.memory_space<vmem>>, vector<32x32xf32>,
    %c2_i32 = arith.constant 2 : i32
    %56 = arith.cmpi eq, %arg1, %c2_i32 : i32
    %57 = arith.extui %56 : i1 to i32
    %c0_i32_21 = arith.constant 0 : i32
    %58 = arith.cmpi ne, %57, %c0_i32_21 : i32
    scf.if %58 {
      %c0_22 = arith.constant 0 : index
      %c0_23 = arith.constant 0 : index
      %59 = vector.load %arg12[%c0_22, %c0_23] : memref<32x32xf32, #tpu.memory_space<vmem>>, vector<32x32xf32>
      %c0_24 = arith.constant 0 : index
      %c0_25 = arith.constant 0 : index
      %60 = vector.load %arg9[%c0_24, %c0_25] : memref<1x32xf32, #tpu.memory_space<vmem>>, vector<1x32xf32>
      %61 = vector.broadcast %60 : vector<1x32xf32> to vector<32x32xf32>
      %62 = arith.mulf %59, %61 : vector<32x32xf32>
      %c0_26 = arith.constant 0 : index
      %c0_27 = arith.constant 0 : index
      %63 = vector.load %arg10[%c0_26, %c0_27] : memref<1x32xf32, #tpu.memory_space<vmem>>, vector<1x32xf32>
      %64 = vector.broadcast %63 : vector<1x32xf32> to vector<32x32xf32>
      %65 = arith.addf %62, %64 : vector<32x32xf32>
      %66 = arith.truncf %65 : vector<32x32xf32> to vector<32x32xbf16>
      %c0_28 = arith.constant 0 : index
      %c0_29 = arith.constant 0 : index
      %67 = vector.load %arg11[%c0_28, %c0_29] : memref<32x32xbf16, #tpu.memory_space<vmem>>, vector<32x32xbf16>
      tpu.vector_store %arg11[%c0_28, %c0_29], %66 {strides = array<i32>} : memref<32x32xbf16, #tpu.memory_space<vmem>>, vector<32x32xbf16>,
    } else {
    }
    return
  }
  func.func @transform_0(%arg0: i32, %arg1: i32) -> (i32, i32) {
    %c0_i32 = arith.constant 0 : i32
    %c0_i32_0 = arith.constant 0 : i32
    %c0_i32_1 = arith.constant 0 : i32
    return %c0_i32, %c0_i32_0 : i32, i32
  }
  func.func @transform_1(%arg0: i32, %arg1: i32) -> (i32, i32, i32) {
    %c0_i32 = arith.constant 0 : i32
    %c0_i32_0 = arith.constant 0 : i32
    %c0_i32_1 = arith.constant 0 : i32
    %c0_i32_2 = arith.constant 0 : i32
    return %c0_i32, %c0_i32_0, %c0_i32_1 : i32, i32, i32
  }
  func.func @transform_2(%arg0: i32, %arg1: i32) -> (i32, i32, i32) {
    %c0_i32 = arith.constant 0 : i32
    %c0_i32_0 = arith.constant 0 : i32
    %c0_i32_1 = arith.constant 0 : i32
    %c0_i32_2 = arith.constant 0 : i32
    return %c0_i32, %c0_i32_0, %c0_i32_1 : i32, i32, i32
  }
  func.func @transform_3(%arg0: i32, %arg1: i32) -> (i32, i32, i32) {
    %c0_i32 = arith.constant 0 : i32
    %c0_i32_0 = arith.constant 0 : i32
    %c0_i32_1 = arith.constant 0 : i32
    %c0_i32_2 = arith.constant 0 : i32
    return %c0_i32, %c0_i32_0, %c0_i32_1 : i32, i32, i32
  }
  func.func @transform_4(%arg0: i32, %arg1: i32) -> (i32, i32) {
    %c0_i32 = arith.constant 0 : i32
    %c0_i32_0 = arith.constant 0 : i32
    %c0_i32_1 = arith.constant 0 : i32
    return %c0_i32, %c0_i32_0 : i32, i32
  }
  func.func @transform_5(%arg0: i32, %arg1: i32) -> (i32, i32, i32) {
    %c0_i32 = arith.constant 0 : i32
    %c0_i32_0 = arith.constant 0 : i32
    return %arg1, %arg0, %c0_i32 : i32, i32, i32
  }
  func.func @transform_6(%arg0: i32, %arg1: i32) -> (i32, i32, i32) {
    %c0_i32 = arith.constant 0 : i32
    %c0_i32_0 = arith.constant 0 : i32
    %c0_i32_1 = arith.constant 0 : i32
    %c0_i32_2 = arith.constant 0 : i32
    return %c0_i32, %c0_i32_0, %c0_i32_1 : i32, i32, i32
  }
  func.func @transform_7(%arg0: i32, %arg1: i32) -> (i32, i32) {
    %c0_i32 = arith.constant 0 : i32
    %c0_i32_0 = arith.constant 0 : i32
    %c0_i32_1 = arith.constant 0 : i32
    return %c0_i32, %c0_i32_0 : i32, i32
  }
  func.func @transform_8(%arg0: i32, %arg1: i32) -> (i32, i32) {
    %c0_i32 = arith.constant 0 : i32
    %c0_i32_0 = arith.constant 0 : i32
    %c0_i32_1 = arith.constant 0 : i32
    return %c0_i32, %c0_i32_0 : i32, i32
  }
  func.func @transform_9(%arg0: i32, %arg1: i32) -> (i32, i32) {
    %c0_i32 = arith.constant 0 : i32
    %c0_i32_0 = arith.constant 0 : i32
    return %arg0, %c0_i32 : i32, i32
  }
}

</mosaic_0001>

<llo_original>
// kernel: tpu_custom_call.1
$region0: #{tpu_custom_call.1}
  #allocation0 [shape = 'u32[]', space=smem, size = 0x4, offset = 0x4, fixed_abs, tag = 'smem constant byte address 0x4 - core index']
  #allocation1 [shape = 'u32[144,128]{1,0:T(1,128)}', space=vmem, size = 0x12000, scoped, tag = 'internal scratch']
  #allocation2 [shape = 'f32[32,32]{1,0:T(8,128)}', space=vmem, size = 0x4000, scoped, tag = 'scratch operand']
  %s0 = inlined_call_operand.vmem [shape: f32[64,16], index: 0, kind: input, shape index: {}]
  %s1 = inlined_call_operand.vmem [shape: bf16[3,16,32], index: 1, kind: input, shape index: {}]
  %s2 = inlined_call_operand.vmem [shape: bf16[3,16,64], index: 2, kind: input, shape index: {}]
  %s3 = inlined_call_operand.vmem [shape: f32[3,1,64], index: 3, kind: input, shape index: {}]
  %s4 = inlined_call_operand.vmem [shape: bf16[16,96], index: 4, kind: input, shape index: {}]
  %s5 = inlined_call_operand.vmem [shape: bf16[3,64,64], index: 5, kind: input, shape index: {}]
  %s6 = inlined_call_operand.vmem [shape: f32[3,64,1], index: 6, kind: input, shape index: {}]
  %s7 = inlined_call_operand.vmem [shape: f32[1,32], index: 7, kind: input, shape index: {}]
  %s8 = inlined_call_operand.vmem [shape: f32[1,32], index: 8, kind: input, shape index: {}]
  %s9 = inlined_call_operand.vmem [shape: bf16[64,32], index: 9, kind: output, shape index: {}]
  %s10 = sld [smem:[#allocation0]]
  $region77: #{tpu_custom_call.1} parent=0
    _
  %s12 = ssub.s32 1, %s10
  %s13 = scalar_select 0, %s12, %s10
  loop: start=0, step=1, limit=8
  $region2: #{tpu_custom_call.1} parent=0 // loop_pre_header
    _
  $region3: #{tpu_custom_call.1} parent=0 // loop_header
    %s15 = sphi 0, %s19
    %p16 = scmp.ge.s32.totalorder %s15, 8
    %s22 = sphi 0, %s34
    %s23 = sphi 0, %s30
    %s24 = sphi 0, %s22
    %s25 = sphi 0, %s23
    %s26 = sphi 0, %s24
    %s27 = sphi 0, %s25
    %s35 = sphi 0, %s35
    %s37 = sphi 0, %s35
    %s38 = sphi 0, %s37
    %s52 = sphi 0, %s38
    %s56 = sphi 0, %s56
    %s58 = sphi 0, %s56
    %s59 = sphi 0, %s58
    %s73 = sphi 0, %s59
    %s77 = sphi 0, %s77
    %s79 = sphi 0, %s77
    %s80 = sphi 0, %s79
    %s94 = sphi 0, %s80
    %s98 = sphi 0, %s98
    %s100 = sphi 0, %s98
    %s101 = sphi 0, %s100
    %s115 = sphi 0, %s101
    %s119 = sphi 0, %s119
    %s121 = sphi 0, %s119
    %s122 = sphi 0, %s121
    %s136 = sphi 0, %s122
    %s144 = sphi 0, %s146
    %s147 = sphi 0, %s144
    %s148 = sphi 0, %s147
    %s164 = sphi 0, %s148
    %s168 = sphi 0, %s168
    %s170 = sphi 0, %s168
    %s171 = sphi 0, %s170
    %s185 = sphi 0, %s171
    %s189 = sphi 0, %s189
    %s191 = sphi 0, %s189
    %s192 = sphi 0, %s191
    %s206 = sphi 0, %s192
    %s210 = sphi 0, %s210
    %s212 = sphi 0, %s210
    %s213 = sphi 0, %s212
    %s227 = sphi 0, %s213
    %s233 = sphi 0, %s235
    %s236 = sphi 0, %s233
    %s237 = sphi 0, %s236
    %s253 = sphi 0, %s237
  $region4: #{tpu_custom_call.1} parent=0 // loop_header_branch
    %18 = sbr.rel (%p16) target = $region8
  $region5: #{tpu_custom_call.1} parent=0 // loop_body
    %s20 = ssub.s32 %s15, 1
    %s21 = ssub.s32 %s15, 2
    %s28 = sadd.s32 1, %s23
    %p29 = scmp.ge.s32.totalorder %s28, 3
    %s30 = scalar_select %p29, 0, %s28
    %s31 = sadd.s32 1, %s22
    %s32 = scalar_select %p29, %s31, %s22
    %p33 = scmp.ge.s32.totalorder %s32, 2
    %s34 = scalar_select %p33, 0, %s32
    %s36 = sadd.s32 %s35, 1
    %p39 = scmp.eq.s32.totalorder %s15, 5
    %p40 = scmp.ne.s32.totalorder %s35, %s37
    %p41 = scmp.eq.s32.totalorder %s15, 0
    %p42 = por %p40, %p41
    %p43 = scmp.ne.s32.totalorder %s35, %s37
    %p44 = scmp.eq.s32.totalorder %s20, 5
    %p45 = por %p43, %p44
    %p46 = scmp.ne.s32.totalorder %s37, %s38
    %p47 = scmp.eq.s32.totalorder %s20, 0
    %p48 = por %p46, %p47
    %p49 = scmp.ne.s32.totalorder %s37, %s38
    %p50 = scmp.eq.s32.totalorder %s21, 5
    %p51 = por %p49, %p50
    %p53 = scmp.ne.s32.totalorder %s38, %s52
    %p54 = scmp.eq.s32.totalorder %s21, 0
    %p55 = por %p53, %p54
    %s57 = sadd.s32 %s56, 1
    %p60 = scmp.eq.s32.totalorder %s15, 5
    %p61 = scmp.ne.s32.totalorder %s56, %s58
    %p62 = scmp.eq.s32.totalorder %s15, 0
    %p63 = por %p61, %p62
    %p64 = scmp.ne.s32.totalorder %s56, %s58
    %p65 = scmp.eq.s32.totalorder %s20, 5
    %p66 = por %p64, %p65
    %p67 = scmp.ne.s32.totalorder %s58, %s59
    %p68 = scmp.eq.s32.totalorder %s20, 0
    %p69 = por %p67, %p68
    %p70 = scmp.ne.s32.totalorder %s58, %s59
    %p71 = scmp.eq.s32.totalorder %s21, 5
    %p72 = por %p70, %p71
    %p74 = scmp.ne.s32.totalorder %s59, %s73
    %p75 = scmp.eq.s32.totalorder %s21, 0
    %p76 = por %p74, %p75
    %s78 = sadd.s32 %s77, 1
    %p81 = scmp.eq.s32.totalorder %s15, 5
    %p82 = scmp.ne.s32.totalorder %s77, %s79
    %p83 = scmp.eq.s32.totalorder %s15, 0
    %p84 = por %p82, %p83
    %p85 = scmp.ne.s32.totalorder %s77, %s79
    %p86 = scmp.eq.s32.totalorder %s20, 5
    %p87 = por %p85, %p86
    %p88 = scmp.ne.s32.totalorder %s79, %s80
    %p89 = scmp.eq.s32.totalorder %s20, 0
    %p90 = por %p88, %p89
    %p91 = scmp.ne.s32.totalorder %s79, %s80
    %p92 = scmp.eq.s32.totalorder %s21, 5
    %p93 = por %p91, %p92
    %p95 = scmp.ne.s32.totalorder %s80, %s94
    %p96 = scmp.eq.s32.totalorder %s21, 0
    %p97 = por %p95, %p96
    %s99 = sadd.s32 %s98, 1
    %p102 = scmp.eq.s32.totalorder %s15, 5
    %p103 = scmp.ne.s32.totalorder %s98, %s100
    %p104 = scmp.eq.s32.totalorder %s15, 0
    %p105 = por %p103, %p104
    %p106 = scmp.ne.s32.totalorder %s98, %s100
    %p107 = scmp.eq.s32.totalorder %s20, 5
    %p108 = por %p106, %p107
    %p109 = scmp.ne.s32.totalorder %s100, %s101
    %p110 = scmp.eq.s32.totalorder %s20, 0
    %p111 = por %p109, %p110
    %p112 = scmp.ne.s32.totalorder %s100, %s101
    %p113 = scmp.eq.s32.totalorder %s21, 5
    %p114 = por %p112, %p113
    %p116 = scmp.ne.s32.totalorder %s101, %s115
    %p117 = scmp.eq.s32.totalorder %s21, 0
    %p118 = por %p116, %p117
    %s120 = sadd.s32 %s119, 1
    %p123 = scmp.eq.s32.totalorder %s15, 5
    %p124 = scmp.ne.s32.totalorder %s119, %s121
    %p125 = scmp.eq.s32.totalorder %s15, 0
    %p126 = por %p124, %p125
    %p127 = scmp.ne.s32.totalorder %s119, %s121
    %p128 = scmp.eq.s32.totalorder %s20, 5
    %p129 = por %p127, %p128
    %p130 = scmp.ne.s32.totalorder %s121, %s122
    %p131 = scmp.eq.s32.totalorder %s20, 0
    %p132 = por %p130, %p131
    %p133 = scmp.ne.s32.totalorder %s121, %s122
    %p134 = scmp.eq.s32.totalorder %s21, 5
    %p135 = por %p133, %p134
    %p137 = scmp.ne.s32.totalorder %s122, %s136
    %p138 = scmp.eq.s32.totalorder %s21, 0
    %p139 = por %p137, %p138
    %s140 = ssub.s32 %s23, %s30
    %s141 = ssub.s32 %s22, %s34
    %s142 = sor.u32 %s140, %s141
    %p143 = scmp.eq.s32.totalorder %s142, 0
    %s145 = sadd.s32 %s144, 1
    %s146 = scalar_select %p143, %s144, %s145
    %p149 = pneg %p143
    %p150 = scmp.eq.s32.totalorder %s15, 5
    %p151 = por %p149, %p150
    %p152 = scmp.ne.s32.totalorder %s144, %s147
    %p153 = scmp.eq.s32.totalorder %s15, 0
    %p154 = por %p152, %p153
    %p155 = scmp.ne.s32.totalorder %s144, %s147
    %p156 = scmp.eq.s32.totalorder %s20, 5
    %p157 = por %p155, %p156
    %p158 = scmp.ne.s32.totalorder %s147, %s148
    %p159 = scmp.eq.s32.totalorder %s20, 0
    %p160 = por %p158, %p159
    %p161 = scmp.ne.s32.totalorder %s147, %s148
    %p162 = scmp.eq.s32.totalorder %s21, 5
    %p163 = por %p161, %p162
    %p165 = scmp.ne.s32.totalorder %s148, %s164
    %p166 = scmp.eq.s32.totalorder %s21, 0
    %p167 = por %p165, %p166
    %s169 = sadd.s32 %s168, 1
    %p172 = scmp.eq.s32.totalorder %s15, 5
    %p173 = scmp.ne.s32.totalorder %s168, %s170
    %p174 = scmp.eq.s32.totalorder %s15, 0
    %p175 = por %p173, %p174
    %p176 = scmp.ne.s32.totalorder %s168, %s170
    %p177 = scmp.eq.s32.totalorder %s20, 5
    %p178 = por %p176, %p177
    %p179 = scmp.ne.s32.totalorder %s170, %s171
    %p180 = scmp.eq.s32.totalorder %s20, 0
    %p181 = por %p179, %p180
    %p182 = scmp.ne.s32.totalorder %s170, %s171
    %p183 = scmp.eq.s32.totalorder %s21, 5
    %p184 = por %p182, %p183
    %p186 = scmp.ne.s32.totalorder %s171, %s185
    %p187 = scmp.eq.s32.totalorder %s21, 0
    %p188 = por %p186, %p187
    %s190 = sadd.s32 %s189, 1
    %p193 = scmp.eq.s32.totalorder %s15, 5
    %p194 = scmp.ne.s32.totalorder %s189, %s191
    %p195 = scmp.eq.s32.totalorder %s15, 0
    %p196 = por %p194, %p195
    %p197 = scmp.ne.s32.totalorder %s189, %s191
    %p198 = scmp.eq.s32.totalorder %s20, 5
    %p199 = por %p197, %p198
    %p200 = scmp.ne.s32.totalorder %s191, %s192
    %p201 = scmp.eq.s32.totalorder %s20, 0
    %p202 = por %p200, %p201
    %p203 = scmp.ne.s32.totalorder %s191, %s192
    %p204 = scmp.eq.s32.totalorder %s21, 5
    %p205 = por %p203, %p204
    %p207 = scmp.ne.s32.totalorder %s192, %s206
    %p208 = scmp.eq.s32.totalorder %s21, 0
    %p209 = por %p207, %p208
    %s211 = sadd.s32 %s210, 1
    %p214 = scmp.eq.s32.totalorder %s15, 5
    %p215 = scmp.ne.s32.totalorder %s210, %s212
    %p216 = scmp.eq.s32.totalorder %s15, 0
    %p217 = por %p215, %p216
    %p218 = scmp.ne.s32.totalorder %s210, %s212
    %p219 = scmp.eq.s32.totalorder %s20, 5
    %p220 = por %p218, %p219
    %p221 = scmp.ne.s32.totalorder %s212, %s213
    %p222 = scmp.eq.s32.totalorder %s20, 0
    %p223 = por %p221, %p222
    %p224 = scmp.ne.s32.totalorder %s212, %s213
    %p225 = scmp.eq.s32.totalorder %s21, 5
    %p226 = por %p224, %p225
    %p228 = scmp.ne.s32.totalorder %s213, %s227
    %p229 = scmp.eq.s32.totalorder %s21, 0
    %p230 = por %p228, %p229
    %s231 = ssub.s32 %s22, %s34
    %p232 = scmp.eq.s32.totalorder %s231, 0
    %s234 = sadd.s32 %s233, 1
    %s235 = scalar_select %p232, %s233, %s234
    %p238 = pneg %p232
    %p239 = scmp.eq.s32.totalorder %s15, 5
    %p240 = por %p238, %p239
    %p241 = scmp.ne.s32.totalorder %s233, %s236
    %p242 = scmp.eq.s32.totalorder %s15, 0
    %p243 = por %p241, %p242
    %p244 = scmp.ne.s32.totalorder %s233, %s236
    %p245 = scmp.eq.s32.totalorder %s20, 5
    %p246 = por %p244, %p245
    %p247 = scmp.ne.s32.totalorder %s236, %s237
    %p248 = scmp.eq.s32.totalorder %s20, 0
    %p249 = por %p247, %p248
    %p250 = scmp.ne.s32.totalorder %s236, %s237
    %p251 = scmp.eq.s32.totalorder %s21, 5
    %p252 = por %p250, %p251
    %p254 = scmp.ne.s32.totalorder %s237, %s253
    %p255 = scmp.eq.s32.totalorder %s21, 0
    %p256 = por %p254, %p255
    %p257 = scmp.le.s32.totalorder 1, %s15
    %p258 = scmp.lt.s32.totalorder %s15, 7
    %p259 = pnand %p257, %p258
    %p260 = pneg %p259
    // Predicated region
    $region9: #{tpu_custom_call.1} parent=5 // pred_check
      _
    $region10: #{tpu_custom_call.1} parent=5 // pred_check_branch
      %262 = sbr.rel (%p259) target = $region12
    $region11: #{tpu_custom_call.1} parent=5 // pred_region
      %s263 = ssub.s32 %s15, 1
      // Predicated region
      $region13: #{tpu_custom_call.1} parent=11 // pred_check
        %p264 = pneg %p48
      $region14: #{tpu_custom_call.1} parent=11 // pred_check_branch
        %266 = sbr.rel (%p264) target = $region16
      $region15: #{tpu_custom_call.1} parent=11 // pred_region
        _
      $region16: #{tpu_custom_call.1} parent=11 // pred_fallthru
        _
      // Predicated region
      $region17: #{tpu_custom_call.1} parent=11 // pred_check
        %p267 = pneg %p69
      $region18: #{tpu_custom_call.1} parent=11 // pred_check_branch
        %269 = sbr.rel (%p267) target = $region20
      $region19: #{tpu_custom_call.1} parent=11 // pred_region
        _
      $region20: #{tpu_custom_call.1} parent=11 // pred_fallthru
        _
      // Predicated region
      $region21: #{tpu_custom_call.1} parent=11 // pred_check
        %p270 = pneg %p90
      $region22: #{tpu_custom_call.1} parent=11 // pred_check_branch
        %272 = sbr.rel (%p270) target = $region24
      $region23: #{tpu_custom_call.1} parent=11 // pred_region
        _
      $region24: #{tpu_custom_call.1} parent=11 // pred_fallthru
        _
      // Predicated region
      $region25: #{tpu_custom_call.1} parent=11 // pred_check
        %p273 = pneg %p111
      $region26: #{tpu_custom_call.1} parent=11 // pred_check_branch
        %275 = sbr.rel (%p273) target = $region28
      $region27: #{tpu_custom_call.1} parent=11 // pred_region
        _
      $region28: #{tpu_custom_call.1} parent=11 // pred_fallthru
        _
      // Predicated region
      $region29: #{tpu_custom_call.1} parent=11 // pred_check
        %p276 = pneg %p132
      $region30: #{tpu_custom_call.1} parent=11 // pred_check_branch
        %278 = sbr.rel (%p276) target = $region32
      $region31: #{tpu_custom_call.1} parent=11 // pred_region
        _
      $region32: #{tpu_custom_call.1} parent=11 // pred_fallthru
        _
      // Predicated region
      $region33: #{tpu_custom_call.1} parent=11 // pred_check
        %p279 = pneg %p181
      $region34: #{tpu_custom_call.1} parent=11 // pred_check_branch
        %281 = sbr.rel (%p279) target = $region36
      $region35: #{tpu_custom_call.1} parent=11 // pred_region
        _
      $region36: #{tpu_custom_call.1} parent=11 // pred_fallthru
        _
      // Predicated region
      $region37: #{tpu_custom_call.1} parent=11 // pred_check
        %p282 = pneg %p202
      $region38: #{tpu_custom_call.1} parent=11 // pred_check_branch
        %284 = sbr.rel (%p282) target = $region40
      $region39: #{tpu_custom_call.1} parent=11 // pred_region
        _
      $region40: #{tpu_custom_call.1} parent=11 // pred_fallthru
        _
      // Predicated region
      $region41: #{tpu_custom_call.1} parent=11 // pred_check
        %p285 = pneg %p223
      $region42: #{tpu_custom_call.1} parent=11 // pred_check_branch
        %287 = sbr.rel (%p285) target = $region44
      $region43: #{tpu_custom_call.1} parent=11 // pred_region
        _
      $region44: #{tpu_custom_call.1} parent=11 // pred_fallthru
        _
    $region12: #{tpu_custom_call.1} parent=5 // pred_fallthru
      _
    %p288 = scmp.lt.s32.totalorder %s15, 6
    // Predicated region
    $region45: #{tpu_custom_call.1} parent=5 // pred_check
      %p289 = pneg %p288
    $region46: #{tpu_custom_call.1} parent=5 // pred_check_branch
      %291 = sbr.rel (%p289) target = $region48
    $region47: #{tpu_custom_call.1} parent=5 // pred_region
      // Predicated region
      $region49: #{tpu_custom_call.1} parent=47 // pred_check
        %p292 = pneg %p154
      $region50: #{tpu_custom_call.1} parent=47 // pred_check_branch
        %294 = sbr.rel (%p292) target = $region52
      $region51: #{tpu_custom_call.1} parent=47 // pred_region
        %s295 = smul.u32 4, %s22
        %p296 = scmp.lt.s32.totalorder %s23, 2
        %s297 = scalar_select %p296, %s23, 2
        %p298 = scmp.lt.s32.totalorder %s295, 7
        %s299 = scalar_select %p298, %s295, 7
        %s300 = smul.addr %s297, 8
        %s301 = sadd.s32 %s299, %s300
        %s302 = smul.addr %s301, 4
        %s303 = scalar_lea.vmem %s5, %s302
        %s304 = smul.u32 4, %s22
      $region52: #{tpu_custom_call.1} parent=47 // pred_fallthru
        _
    $region48: #{tpu_custom_call.1} parent=5 // pred_fallthru
      _
    %p305 = scmp.le.s32.totalorder 1, %s15
    %p306 = scmp.lt.s32.totalorder %s15, 7
    %p307 = pnand %p305, %p306
    %p308 = pneg %p307
    // Predicated region
    $region53: #{tpu_custom_call.1} parent=5 // pred_check
      _
    $region54: #{tpu_custom_call.1} parent=5 // pred_check_branch
      %310 = sbr.rel (%p307) target = $region56
    $region55: #{tpu_custom_call.1} parent=5 // pred_region
      %s311 = ssub.s32 %s15, 1
      %p312 = pneg %p48
      %p313 = pneg %p45
      %p314 = pneg %p69
      %p315 = pneg %p66
      %p316 = pneg %p90
      %p317 = pneg %p87
      %p318 = pneg %p111
      %p319 = pneg %p108
      %p320 = pneg %p132
      %p321 = pneg %p129
      %s322 = smul.u32 4, %s24
      %p323 = scmp.lt.s32.totalorder %s25, 2
      %s324 = scalar_select %p323, %s25, 2
      %p325 = scmp.lt.s32.totalorder %s322, 7
      %s326 = scalar_select %p325, %s322, 7
      %s327 = smul.addr %s324, 8
      %s328 = sadd.s32 %s326, %s327
      %s329 = smul.addr %s328, 4
      %s330 = scalar_lea.vmem %s5, %s329
      %p331 = pneg %p160
      %p332 = pneg %p157
      %p333 = pneg %p181
      %p334 = pneg %p178
      %p335 = pneg %p202
      %p336 = pneg %p199
      %p337 = pneg %p223
      %p338 = pneg %p220
      %p339 = pneg %p249
      %p340 = pneg %p246
      %s341 = smul.u32 4, %s24
      %p342 = scmp.lt.s32.totalorder %s341, 7
      %s343 = scalar_select %p342, %s341, 7
      %s344 = smul.addr %s343, 4
      %s345 = scalar_lea.vmem %s9, %s344
      %s346 = smul.u32 4, %s24
      %p347 = scmp.lt.s32.totalorder %s25, 2
      %s348 = scalar_select %p347, %s25, 2
      %p349 = scmp.lt.s32.totalorder %s346, 7
      %s350 = scalar_select %p349, %s346, 7
      %s351 = smul.addr %s348, 8
      %s352 = sadd.s32 %s350, %s351
      %s353 = smul.addr %s352, 4
      %s354 = scalar_lea.vmem %s5, %s353
      %s355 = smul.u32 4, %s24
      %s356 = smul.u32 4, %s24
      %p357 = scmp.lt.s32.totalorder %s356, 7
      %s358 = scalar_select %p357, %s356, 7
      %s359 = smul.addr %s358, 4
      %s360 = scalar_lea.vmem %s9, %s359
      %s361 = smul.u32 4, %s24
      %s363 = smul.u32 %s24, 32
      %s364 = scalar_lea.vmem %s0, %s363
      %v365 = vld [vmem:[%s364] sm:$0xff]
      %v366 = vld [vmem:[%s364 + $0x8] sm:$0xff]
      %v367 = vld [vmem:[%s364 + $0x10] sm:$0xff]
      %v368 = vld [vmem:[%s364 + $0x18] sm:$0xff]
      %v369 = vpack.c.bf16 %v366, %v365
      %v370 = vpack.c.bf16 %v368, %v367
      %p371 = scmp.eq.s32.totalorder %s25, 0
      // Predicated region
      $region57: #{tpu_custom_call.1} parent=55 // pred_check
        %p372 = pneg %p371
      $region58: #{tpu_custom_call.1} parent=55 // pred_check_branch
        %374 = sbr.rel (%p372) target = $region60
      $region59: #{tpu_custom_call.1} parent=55 // pred_region
        %v375 = vld [vmem:[%s4] sm:$0xf]
        %v376 = vld [vmem:[%s4 + $0x4] sm:$0xf]
        %v379 = vunpack.c.l.b16 %v375
        %v380 = vunpack.c.l.b16 %v376
        %v381 = vpack.c.b16 %v380, %v379
        %vm383 = vcmask 130048
        %v385 = vsel %vm383, %v369, 0
        %v388 = vsel %vm383, %v370, 0
        %390 = vmatprep.subr.bf16.mxu0 0
        %391 = vmatpush1.bf16.msra.mxu0 0
        %392 = vmatprep.subr.bf16.mxu0 0
        %393 = vmatpush1.bf16.msra.mxu0 0
        %394 = vmatprep.subr.bf16.mxu0 0
        %395 = vmatpush1.bf16.msra.mxu0 0
        %396 = vmatprep.subr.bf16.mxu0 0
        %397 = vmatpush1.bf16.msra.mxu0 0
        %398 = vmatprep.subr.bf16.mxu0 0
        %399 = vmatpush1.bf16.msra.mxu0 0
        %400 = vmatprep.subr.bf16.mxu0 0
        %401 = vmatpush1.bf16.msra.mxu0 0
        %402 = vmatprep.subr.bf16.mxu0 0
        %403 = vmatpush1.bf16.msra.mxu0 0
        %404 = vmatprep.subr.bf16.mxu0 0
        %405 = vmatpush1.bf16.msra.mxu0 %v381
        %406 = vmatprep.subr.bf16.mxu0 0
        %407 = vmatpush2.bf16.msra.mxu0 0
        %408 = vmatprep.subr.bf16.mxu0 0
        %409 = vmatpush2.bf16.msra.mxu0 0
        %410 = vmatprep.subr.bf16.mxu0 0
        %411 = vmatpush2.bf16.msra.mxu0 0
        %412 = vmatprep.subr.bf16.mxu0 0
        %413 = vmatpush2.bf16.msra.mxu0 0
        %414 = vmatprep.subr.bf16.mxu0 0
        %415 = vmatpush2.bf16.msra.mxu0 0
        %416 = vmatprep.subr.bf16.mxu0 0
        %417 = vmatpush2.bf16.msra.mxu0 0
        %418 = vmatprep.subr.bf16.mxu0 0
        %419 = vmatpush2.bf16.msra.mxu0 0
        %420 = vmatprep.subr.bf16.mxu0 0
        %421 = vmatpush2.bf16.msra.mxu0 0
        %422 = vmatprep.mubr.bf16.mxu0 0
        %423 = vmatmul.mubr.bf16.gmra.mxu0 %v385
        %v424 = vpop.f32.mrf.mxu0
        %v425 = vadd.f32 0.0, %v424
        %v426 = vpop.f32.mrf.mxu0
        %v427 = vpop.f32.mrf.mxu0
        %v428 = vadd.f32 0.0, %v427
        %v429 = vpop.f32.mrf.mxu0
        %430 = vmatprep.mubr.bf16.mxu0 0
        %431 = vmatmul.mubr.bf16.gmra.mxu0 %v388
        %v432 = vpop.f32.mrf.mxu0
        %v433 = vadd.f32 0.0, %v432
        %v434 = vpop.f32.mrf.mxu0
        %v435 = vpop.f32.mrf.mxu0
        %v436 = vadd.f32 0.0, %v435
        %v437 = vpop.f32.mrf.mxu0
        %438 = vdwg.mxu0
        %443 = vrot.lane.b32.xlu0 %v425, 64
        %v444 = vpop.permute.xlu0 %443
        %445 = vrot.lane.b32.xlu0 %v428, 64
        %v446 = vpop.permute.xlu0 %445
        %447 = vrot.lane.b32.xlu0 %v433, 64
        %v448 = vpop.permute.xlu0 %447
        %449 = vrot.lane.b32.xlu0 %v436, 64
        %v450 = vpop.permute.xlu0 %449
        %v455 = vmul.f32 %v425, %v444
        %v456 = vmul.f32 %v428, %v446
        %v457 = vmul.f32 %v433, %v448
        %v458 = vmul.f32 %v436, %v450
        %459 = vrot.lane.b32.xlu0 %v425, 32
        %v460 = vpop.permute.xlu0 %459
        %461 = vrot.lane.b32.xlu0 %v428, 32
        %v462 = vpop.permute.xlu0 %461
        %463 = vrot.lane.b32.xlu0 %v433, 32
        %v464 = vpop.permute.xlu0 %463
        %465 = vrot.lane.b32.xlu0 %v436, 32
        %v466 = vpop.permute.xlu0 %465
        %v471 = vadd.f32 %v455, %v460
        %v472 = vadd.f32 %v456, %v462
        %v473 = vadd.f32 %v457, %v464
        %v474 = vadd.f32 %v458, %v466
        %v475 = vmax.f32 %v471, 0.0
        %v476 = vmax.f32 %v472, 0.0
        %v477 = vmax.f32 %v473, 0.0
        %v478 = vmax.f32 %v474, 0.0
        %483 = vrot.lane.b32.xlu0 %v475, 64
        %v484 = vpop.permute.xlu0 %483
        %485 = vrot.lane.b32.xlu0 %v476, 64
        %v486 = vpop.permute.xlu0 %485
        %487 = vrot.lane.b32.xlu0 %v477, 64
        %v488 = vpop.permute.xlu0 %487
        %489 = vrot.lane.b32.xlu0 %v478, 64
        %v490 = vpop.permute.xlu0 %489
        %vm495 = vcmask 261120
        %496 = vst.msk [vmem:[#allocation2] sm:$0xff] %vm495, %v484
        %497 = vst.msk [vmem:[#allocation2 + $0x8] sm:$0xff] %vm495, %v486
        %498 = vst.msk [vmem:[#allocation2 + $0x10] sm:$0xff] %vm495, %v488
        %499 = vst.msk [vmem:[#allocation2 + $0x18] sm:$0xff] %vm495, %v490
      $region60: #{tpu_custom_call.1} parent=55 // pred_fallthru
        _
      %s500 = smul.u32 %s25, 2
      %s501 = smul.addr %s500, 4
      %s502 = scalar_lea.vmem %s1, %s501
      %v503 = vld [vmem:[%s502] sm:$0xf]
      %v504 = vld [vmem:[%s502 + $0x4] sm:$0xf]
      %s505 = smul.addr %s500, 4
      %s506 = scalar_lea.vmem %s2, %s505
      %v507 = vld [vmem:[%s506] sm:$0xf]
      %v508 = vld [vmem:[%s506 + $0x4] sm:$0xf]
      %s509 = scalar_lea.vmem %s3, %s25
      %v510 = vld [vmem:[%s509] sm:$0x1]
      %v512 = vlaneseq
      %v513 = vshrl.u32 %v512, 7
      %v514 = vsub.s32 0, %v513
      %v515 = vrot.slane %v510, %v514
      %v519 = vunpack.c.l.b16 %v507
      %v520 = vunpack.c.l.b16 %v508
      %v521 = vpack.c.b16 %v520, %v519
      %vm523 = vcmask 130048
      %v525 = vsel %vm523, %v369, 0
      %v528 = vsel %vm523, %v370, 0
      %530 = vmatprep.subr.bf16.mxu0 0
      %531 = vmatpush1.bf16.msra.mxu0 0
      %532 = vmatprep.subr.bf16.mxu0 0
      %533 = vmatpush1.bf16.msra.mxu0 0
      %534 = vmatprep.subr.bf16.mxu0 0
      %535 = vmatpush1.bf16.msra.mxu0 0
      %536 = vmatprep.subr.bf16.mxu0 0
      %537 = vmatpush1.bf16.msra.mxu0 0
      %538 = vmatprep.subr.bf16.mxu0 0
      %539 = vmatpush1.bf16.msra.mxu0 0
      %540 = vmatprep.subr.bf16.mxu0 0
      %541 = vmatpush1.bf16.msra.mxu0 0
      %542 = vmatprep.subr.bf16.mxu0 0
      %543 = vmatpush1.bf16.msra.mxu0 0
      %544 = vmatprep.subr.bf16.mxu0 0
      %545 = vmatpush1.bf16.msra.mxu0 %v521
      %546 = vmatprep.subr.bf16.mxu0 0
      %547 = vmatpush2.bf16.msra.mxu0 0
      %548 = vmatprep.subr.bf16.mxu0 0
      %549 = vmatpush2.bf16.msra.mxu0 0
      %550 = vmatprep.subr.bf16.mxu0 0
      %551 = vmatpush2.bf16.msra.mxu0 0
      %552 = vmatprep.subr.bf16.mxu0 0
      %553 = vmatpush2.bf16.msra.mxu0 0
      %554 = vmatprep.subr.bf16.mxu0 0
      %555 = vmatpush2.bf16.msra.mxu0 0
      %556 = vmatprep.subr.bf16.mxu0 0
      %557 = vmatpush2.bf16.msra.mxu0 0
      %558 = vmatprep.subr.bf16.mxu0 0
      %559 = vmatpush2.bf16.msra.mxu0 0
      %560 = vmatprep.subr.bf16.mxu0 0
      %561 = vmatpush2.bf16.msra.mxu0 0
      %562 = vmatprep.mubr.bf16.mxu0 0
      %563 = vmatmul.mubr.bf16.gmra.mxu0 %v525
      %v564 = vpop.f32.mrf.mxu0
      %v565 = vadd.f32 %v515, %v564
      %v566 = vpop.f32.mrf.mxu0
      %v567 = vpop.f32.mrf.mxu0
      %v568 = vadd.f32 %v515, %v567
      %v569 = vpop.f32.mrf.mxu0
      %570 = vmatprep.mubr.bf16.mxu0 0
      %571 = vmatmul.mubr.bf16.gmra.mxu0 %v528
      %v572 = vpop.f32.mrf.mxu0
      %v573 = vadd.f32 %v515, %v572
      %v574 = vpop.f32.mrf.mxu0
      %v575 = vpop.f32.mrf.mxu0
      %v576 = vadd.f32 %v515, %v575
      %v577 = vpop.f32.mrf.mxu0
      %578 = vdwg.mxu0
      %v579 = vpack.c.bf16 %v568, %v565
      %v580 = vpack.c.bf16 %v576, %v573
      %v581 = vld [vmem:[%s0] sm:$0xff]
      %v582 = vld [vmem:[%s0 + $0x8] sm:$0xff]
      %v583 = vld [vmem:[%s0 + $0x10] sm:$0xff]
      %v584 = vld [vmem:[%s0 + $0x18] sm:$0xff]
      %v585 = vld [vmem:[%s0 + $0x20] sm:$0xff]
      %v586 = vld [vmem:[%s0 + $0x28] sm:$0xff]
      %v587 = vld [vmem:[%s0 + $0x30] sm:$0xff]
      %v588 = vld [vmem:[%s0 + $0x38] sm:$0xff]
      %v589 = vpack.c.bf16 %v582, %v581
      %v590 = vpack.c.bf16 %v584, %v583
      %v591 = vpack.c.bf16 %v586, %v585
      %v592 = vpack.c.bf16 %v588, %v587
      %v595 = vunpack.c.l.b16 %v503
      %v596 = vunpack.c.l.b16 %v504
      %v597 = vpack.c.b16 %v596, %v595
      %v600 = vsel %vm523, %v589, 0
      %v603 = vsel %vm523, %v590, 0
      %v606 = vsel %vm523, %v591, 0
      %v609 = vsel %vm523, %v592, 0
      %611 = vmatprep.subr.bf16.mxu0 0
      %612 = vmatpush1.bf16.msra.mxu0 0
      %613 = vmatprep.subr.bf16.mxu0 0
      %614 = vmatpush1.bf16.msra.mxu0 0
      %615 = vmatprep.subr.bf16.mxu0 0
      %616 = vmatpush1.bf16.msra.mxu0 0
      %617 = vmatprep.subr.bf16.mxu0 0
      %618 = vmatpush1.bf16.msra.mxu0 0
      %619 = vmatprep.subr.bf16.mxu0 0
      %620 = vmatpush1.bf16.msra.mxu0 0
      %621 = vmatprep.subr.bf16.mxu0 0
      %622 = vmatpush1.bf16.msra.mxu0 0
      %623 = vmatprep.subr.bf16.mxu0 0
      %624 = vmatpush1.bf16.msra.mxu0 0
      %625 = vmatprep.subr.bf16.mxu0 0
      %626 = vmatpush1.bf16.msra.mxu0 %v597
      %627 = vmatprep.subr.bf16.mxu0 0
      %628 = vmatpush2.bf16.msra.mxu0 0
      %629 = vmatprep.subr.bf16.mxu0 0
      %630 = vmatpush2.bf16.msra.mxu0 0
      %631 = vmatprep.subr.bf16.mxu0 0
      %632 = vmatpush2.bf16.msra.mxu0 0
      %633 = vmatprep.subr.bf16.mxu0 0
      %634 = vmatpush2.bf16.msra.mxu0 0
      %635 = vmatprep.subr.bf16.mxu0 0
      %636 = vmatpush2.bf16.msra.mxu0 0
      %637 = vmatprep.subr.bf16.mxu0 0
      %638 = vmatpush2.bf16.msra.mxu0 0
      %639 = vmatprep.subr.bf16.mxu0 0
      %640 = vmatpush2.bf16.msra.mxu0 0
      %641 = vmatprep.subr.bf16.mxu0 0
      %642 = vmatpush2.bf16.msra.mxu0 0
      %643 = vmatprep.mubr.bf16.mxu0 0
      %644 = vmatmul.mubr.bf16.gmra.mxu0 %v600
      %v645 = vpop.f32.mrf.mxu0
      %v646 = vadd.f32 0.0, %v645
      %v647 = vpop.f32.mrf.mxu0
      %v648 = vpop.f32.mrf.mxu0
      %v649 = vadd.f32 0.0, %v648
      %v650 = vpop.f32.mrf.mxu0
      %651 = vmatprep.mubr.bf16.mxu0 0
      %652 = vmatmul.mubr.bf16.gmra.mxu0 %v603
      %v653 = vpop.f32.mrf.mxu0
      %v654 = vadd.f32 0.0, %v653
      %v655 = vpop.f32.mrf.mxu0
      %v656 = vpop.f32.mrf.mxu0
      %v657 = vadd.f32 0.0, %v656
      %v658 = vpop.f32.mrf.mxu0
      %659 = vmatprep.mubr.bf16.mxu0 0
      %660 = vmatmul.mubr.bf16.gmra.mxu0 %v606
      %v661 = vpop.f32.mrf.mxu0
      %v662 = vadd.f32 0.0, %v661
      %v663 = vpop.f32.mrf.mxu0
      %v664 = vpop.f32.mrf.mxu0
      %v665 = vadd.f32 0.0, %v664
      %v666 = vpop.f32.mrf.mxu0
      %667 = vmatprep.mubr.bf16.mxu0 0
      %668 = vmatmul.mubr.bf16.gmra.mxu0 %v609
      %v669 = vpop.f32.mrf.mxu0
      %v670 = vadd.f32 0.0, %v669
      %v671 = vpop.f32.mrf.mxu0
      %v672 = vpop.f32.mrf.mxu0
      %v673 = vadd.f32 0.0, %v672
      %v674 = vpop.f32.mrf.mxu0
      %675 = vdwg.mxu0
      %v676 = vpack.c.bf16 %v649, %v646
      %v677 = vpack.c.bf16 %v657, %v654
      %v678 = vpack.c.bf16 %v665, %v662
      %v679 = vpack.c.bf16 %v673, %v670
      %v680 = vld [vmem:[%s354] sm:$0xf]
      %v681 = vld [vmem:[%s354 + $0x4] sm:$0xf]
      %v682 = vld [vmem:[%s354 + $0x8] sm:$0xf]
      %v683 = vld [vmem:[%s354 + $0xc] sm:$0xf]
      %v686 = vcombine.high %v579, %v579
      %v688 = vunpack.c.l.s4 1966171168
      %v689 = vunpack.c.0.s8 %v688
      %v690 = vlaneseq
      %v691 = vshrl.u32 %v690, 7
      %v692 = vsub.s32 %v689, %v691
      %v693 = vrot.slane %v579, %v692
      %v695 = vunpack.c.l.s4 1966171168
      %v696 = vunpack.c.0.s8 %v695
      %v697 = vlaneseq
      %v698 = vshrl.u32 %v697, 7
      %v699 = vsub.s32 %v696, %v698
      %v700 = vrot.slane %v686, %v699
      %v701 = vcombine.high %v693, %v693
      %v702 = vcombine.high %v700, %v700
      %v704 = vunpack.c.l.s4 1966171168
      %v705 = vunpack.c.0.s8 %v704
      %v706 = vlaneseq
      %v707 = vshrl.u32 %v706, 7
      %v708 = vsub.s32 %v705, %v707
      %v709 = vrot.slane %v693, %v708
      %v711 = vunpack.c.l.s4 1966171168
      %v712 = vunpack.c.0.s8 %v711
      %v713 = vlaneseq
      %v714 = vshrl.u32 %v713, 7
      %v715 = vsub.s32 %v712, %v714
      %v716 = vrot.slane %v700, %v715
      %v718 = vunpack.c.l.s4 1966171168
      %v719 = vunpack.c.0.s8 %v718
      %v720 = vlaneseq
      %v721 = vshrl.u32 %v720, 7
      %v722 = vsub.s32 %v719, %v721
      %v723 = vrot.slane %v701, %v722
      %v725 = vunpack.c.l.s4 1966171168
      %v726 = vunpack.c.0.s8 %v725
      %v727 = vlaneseq
      %v728 = vshrl.u32 %v727, 7
      %v729 = vsub.s32 %v726, %v728
      %v730 = vrot.slane %v702, %v729
      %v731 = vcombine.high %v709, %v709
      %v732 = vcombine.high %v716, %v716
      %v733 = vcombine.high %v723, %v723
      %v734 = vcombine.high %v730, %v730
      %v735 = vcombine.high %v580, %v580
      %v737 = vunpack.c.l.s4 1966171168
      %v738 = vunpack.c.0.s8 %v737
      %v739 = vlaneseq
      %v740 = vshrl.u32 %v739, 7
      %v741 = vsub.s32 %v738, %v740
      %v742 = vrot.slane %v580, %v741
      %v744 = vunpack.c.l.s4 1966171168
      %v745 = vunpack.c.0.s8 %v744
      %v746 = vlaneseq
      %v747 = vshrl.u32 %v746, 7
      %v748 = vsub.s32 %v745, %v747
      %v749 = vrot.slane %v735, %v748
      %v750 = vcombine.high %v742, %v742
      %v751 = vcombine.high %v749, %v749
      %v753 = vunpack.c.l.s4 1966171168
      %v754 = vunpack.c.0.s8 %v753
      %v755 = vlaneseq
      %v756 = vshrl.u32 %v755, 7
      %v757 = vsub.s32 %v754, %v756
      %v758 = vrot.slane %v742, %v757
      %v760 = vunpack.c.l.s4 1966171168
      %v761 = vunpack.c.0.s8 %v760
      %v762 = vlaneseq
      %v763 = vshrl.u32 %v762, 7
      %v764 = vsub.s32 %v761, %v763
      %v765 = vrot.slane %v749, %v764
      %v767 = vunpack.c.l.s4 1966171168
      %v768 = vunpack.c.0.s8 %v767
      %v769 = vlaneseq
      %v770 = vshrl.u32 %v769, 7
      %v771 = vsub.s32 %v768, %v770
      %v772 = vrot.slane %v750, %v771
      %v774 = vunpack.c.l.s4 1966171168
      %v775 = vunpack.c.0.s8 %v774
      %v776 = vlaneseq
      %v777 = vshrl.u32 %v776, 7
      %v778 = vsub.s32 %v775, %v777
      %v779 = vrot.slane %v751, %v778
      %v780 = vcombine.high %v758, %v758
      %v781 = vcombine.high %v765, %v765
      %v782 = vcombine.high %v772, %v772
      %v783 = vcombine.high %v779, %v779
      %v784 = vunpack.i.l.s16 %v709
      %v785 = vunpack.i.h.s16 %v709
      %v786 = vunpack.i.l.s16 %v723
      %v787 = vunpack.i.h.s16 %v723
      %v788 = vunpack.i.l.s16 %v731
      %v789 = vunpack.i.h.s16 %v731
      %v790 = vunpack.i.l.s16 %v733
      %v791 = vunpack.i.h.s16 %v733
      %v792 = vunpack.i.l.s16 %v716
      %v793 = vunpack.i.h.s16 %v716
      %v794 = vunpack.i.l.s16 %v730
      %v795 = vunpack.i.h.s16 %v730
      %v796 = vunpack.i.l.s16 %v732
      %v797 = vunpack.i.h.s16 %v732
      %v798 = vunpack.i.l.s16 %v734
      %v799 = vunpack.i.h.s16 %v734
      %v800 = vunpack.i.l.s16 %v758
      %v801 = vunpack.i.h.s16 %v758
      %v802 = vunpack.i.l.s16 %v772
      %v803 = vunpack.i.h.s16 %v772
      %v804 = vunpack.i.l.s16 %v780
      %v805 = vunpack.i.h.s16 %v780
      %v806 = vunpack.i.l.s16 %v782
      %v807 = vunpack.i.h.s16 %v782
      %v808 = vunpack.i.l.s16 %v765
      %v809 = vunpack.i.h.s16 %v765
      %v810 = vunpack.i.l.s16 %v779
      %v811 = vunpack.i.h.s16 %v779
      %v812 = vunpack.i.l.s16 %v781
      %v813 = vunpack.i.h.s16 %v781
      %v814 = vunpack.i.l.s16 %v783
      %v815 = vunpack.i.h.s16 %v783
      %v816 = vpack.i.b16 %v784, %v784
      %v817 = vpack.i.b16 %v785, %v785
      %v818 = vpack.i.b16 %v786, %v786
      %v819 = vpack.i.b16 %v787, %v787
      %v820 = vpack.i.b16 %v788, %v788
      %v821 = vpack.i.b16 %v789, %v789
      %v822 = vpack.i.b16 %v790, %v790
      %v823 = vpack.i.b16 %v791, %v791
      %v824 = vpack.i.b16 %v792, %v792
      %v825 = vpack.i.b16 %v793, %v793
      %v826 = vpack.i.b16 %v794, %v794
      %v827 = vpack.i.b16 %v795, %v795
      %v828 = vpack.i.b16 %v796, %v796
      %v829 = vpack.i.b16 %v797, %v797
      %v830 = vpack.i.b16 %v798, %v798
      %v831 = vpack.i.b16 %v799, %v799
      %v832 = vpack.i.b16 %v800, %v800
      %v833 = vpack.i.b16 %v801, %v801
      %v834 = vpack.i.b16 %v802, %v802
      %v835 = vpack.i.b16 %v803, %v803
      %v836 = vpack.i.b16 %v804, %v804
      %v837 = vpack.i.b16 %v805, %v805
      %v838 = vpack.i.b16 %v806, %v806
      %v839 = vpack.i.b16 %v807, %v807
      %v840 = vpack.i.b16 %v808, %v808
      %v841 = vpack.i.b16 %v809, %v809
      %v842 = vpack.i.b16 %v810, %v810
      %v843 = vpack.i.b16 %v811, %v811
      %v844 = vpack.i.b16 %v812, %v812
      %v845 = vpack.i.b16 %v813, %v813
      %v846 = vpack.i.b16 %v814, %v814
      %v847 = vpack.i.b16 %v815, %v815
      %v848 = vlaneseq
      %v849 = vshrl.u32 %v848, 7
      %v850 = vsub.s32 0, %v849
      %v851 = vrot.slane %v816, %v850
      %v852 = vlaneseq
      %v853 = vshrl.u32 %v852, 7
      %v854 = vsub.s32 0, %v853
      %v855 = vrot.slane %v817, %v854
      %v856 = vlaneseq
      %v857 = vshrl.u32 %v856, 7
      %v858 = vsub.s32 0, %v857
      %v859 = vrot.slane %v818, %v858
      %v860 = vlaneseq
      %v861 = vshrl.u32 %v860, 7
      %v862 = vsub.s32 0, %v861
      %v863 = vrot.slane %v819, %v862
      %v864 = vlaneseq
      %v865 = vshrl.u32 %v864, 7
      %v866 = vsub.s32 0, %v865
      %v867 = vrot.slane %v820, %v866
      %v868 = vlaneseq
      %v869 = vshrl.u32 %v868, 7
      %v870 = vsub.s32 0, %v869
      %v871 = vrot.slane %v821, %v870
      %v872 = vlaneseq
      %v873 = vshrl.u32 %v872, 7
      %v874 = vsub.s32 0, %v873
      %v875 = vrot.slane %v822, %v874
      %v876 = vlaneseq
      %v877 = vshrl.u32 %v876, 7
      %v878 = vsub.s32 0, %v877
      %v879 = vrot.slane %v823, %v878
      %v880 = vlaneseq
      %v881 = vshrl.u32 %v880, 7
      %v882 = vsub.s32 0, %v881
      %v883 = vrot.slane %v824, %v882
      %v884 = vlaneseq
      %v885 = vshrl.u32 %v884, 7
      %v886 = vsub.s32 0, %v885
      %v887 = vrot.slane %v825, %v886
      %v888 = vlaneseq
      %v889 = vshrl.u32 %v888, 7
      %v890 = vsub.s32 0, %v889
      %v891 = vrot.slane %v826, %v890
      %v892 = vlaneseq
      %v893 = vshrl.u32 %v892, 7
      %v894 = vsub.s32 0, %v893
      %v895 = vrot.slane %v827, %v894
      %v896 = vlaneseq
      %v897 = vshrl.u32 %v896, 7
      %v898 = vsub.s32 0, %v897
      %v899 = vrot.slane %v828, %v898
      %v900 = vlaneseq
      %v901 = vshrl.u32 %v900, 7
      %v902 = vsub.s32 0, %v901
      %v903 = vrot.slane %v829, %v902
      %v904 = vlaneseq
      %v905 = vshrl.u32 %v904, 7
      %v906 = vsub.s32 0, %v905
      %v907 = vrot.slane %v830, %v906
      %v908 = vlaneseq
      %v909 = vshrl.u32 %v908, 7
      %v910 = vsub.s32 0, %v909
      %v911 = vrot.slane %v831, %v910
      %v912 = vlaneseq
      %v913 = vshrl.u32 %v912, 7
      %v914 = vsub.s32 0, %v913
      %v915 = vrot.slane %v832, %v914
      %v916 = vlaneseq
      %v917 = vshrl.u32 %v916, 7
      %v918 = vsub.s32 0, %v917
      %v919 = vrot.slane %v833, %v918
      %v920 = vlaneseq
      %v921 = vshrl.u32 %v920, 7
      %v922 = vsub.s32 0, %v921
      %v923 = vrot.slane %v834, %v922
      %v924 = vlaneseq
      %v925 = vshrl.u32 %v924, 7
      %v926 = vsub.s32 0, %v925
      %v927 = vrot.slane %v835, %v926
      %v928 = vlaneseq
      %v929 = vshrl.u32 %v928, 7
      %v930 = vsub.s32 0, %v929
      %v931 = vrot.slane %v836, %v930
      %v932 = vlaneseq
      %v933 = vshrl.u32 %v932, 7
      %v934 = vsub.s32 0, %v933
      %v935 = vrot.slane %v837, %v934
      %v936 = vlaneseq
      %v937 = vshrl.u32 %v936, 7
      %v938 = vsub.s32 0, %v937
      %v939 = vrot.slane %v838, %v938
      %v940 = vlaneseq
      %v941 = vshrl.u32 %v940, 7
      %v942 = vsub.s32 0, %v941
      %v943 = vrot.slane %v839, %v942
      %v944 = vlaneseq
      %v945 = vshrl.u32 %v944, 7
      %v946 = vsub.s32 0, %v945
      %v947 = vrot.slane %v840, %v946
      %v948 = vlaneseq
      %v949 = vshrl.u32 %v948, 7
      %v950 = vsub.s32 0, %v949
      %v951 = vrot.slane %v841, %v950
      %v952 = vlaneseq
      %v953 = vshrl.u32 %v952, 7
      %v954 = vsub.s32 0, %v953
      %v955 = vrot.slane %v842, %v954
      %v956 = vlaneseq
      %v957 = vshrl.u32 %v956, 7
      %v958 = vsub.s32 0, %v957
      %v959 = vrot.slane %v843, %v958
      %v960 = vlaneseq
      %v961 = vshrl.u32 %v960, 7
      %v962 = vsub.s32 0, %v961
      %v963 = vrot.slane %v844, %v962
      %v964 = vlaneseq
      %v965 = vshrl.u32 %v964, 7
      %v966 = vsub.s32 0, %v965
      %v967 = vrot.slane %v845, %v966
      %v968 = vlaneseq
      %v969 = vshrl.u32 %v968, 7
      %v970 = vsub.s32 0, %v969
      %v971 = vrot.slane %v846, %v970
      %v972 = vlaneseq
      %v973 = vshrl.u32 %v972, 7
      %v974 = vsub.s32 0, %v973
      %v975 = vrot.slane %v847, %v974
      %v977 = vpack.i.b16 %v851, %v851
      %v979 = vlaneseq
      %v980 = vshrl.u32 %v979, 7
      %v981 = vsub.s32 0, %v980
      %v982 = vrot.slane %v977, %v981
      %v984 = vpack.i.b16 %v855, %v855
      %v986 = vlaneseq
      %v987 = vshrl.u32 %v986, 7
      %v988 = vsub.s32 0, %v987
      %v989 = vrot.slane %v984, %v988
      %v991 = vpack.i.b16 %v859, %v859
      %v993 = vlaneseq
      %v994 = vshrl.u32 %v993, 7
      %v995 = vsub.s32 0, %v994
      %v996 = vrot.slane %v991, %v995
      %v998 = vpack.i.b16 %v863, %v863
      %v1000 = vlaneseq
      %v1001 = vshrl.u32 %v1000, 7
      %v1002 = vsub.s32 0, %v1001
      %v1003 = vrot.slane %v998, %v1002
      %v1005 = vpack.i.b16 %v867, %v867
      %v1007 = vlaneseq
      %v1008 = vshrl.u32 %v1007, 7
      %v1009 = vsub.s32 0, %v1008
      %v1010 = vrot.slane %v1005, %v1009
      %v1012 = vpack.i.b16 %v871, %v871
      %v1014 = vlaneseq
      %v1015 = vshrl.u32 %v1014, 7
      %v1016 = vsub.s32 0, %v1015
      %v1017 = vrot.slane %v1012, %v1016
      %v1019 = vpack.i.b16 %v875, %v875
      %v1021 = vlaneseq
      %v1022 = vshrl.u32 %v1021, 7
      %v1023 = vsub.s32 0, %v1022
      %v1024 = vrot.slane %v1019, %v1023
      %v1026 = vpack.i.b16 %v879, %v879
      %v1028 = vlaneseq
      %v1029 = vshrl.u32 %v1028, 7
      %v1030 = vsub.s32 0, %v1029
      %v1031 = vrot.slane %v1026, %v1030
      %v1033 = vpack.i.b16 %v883, %v883
      %v1035 = vlaneseq
      %v1036 = vshrl.u32 %v1035, 7
      %v1037 = vsub.s32 0, %v1036
      %v1038 = vrot.slane %v1033, %v1037
      %v1040 = vpack.i.b16 %v887, %v887
      %v1042 = vlaneseq
      %v1043 = vshrl.u32 %v1042, 7
      %v1044 = vsub.s32 0, %v1043
      %v1045 = vrot.slane %v1040, %v1044
      %v1047 = vpack.i.b16 %v891, %v891
      %v1049 = vlaneseq
      %v1050 = vshrl.u32 %v1049, 7
      %v1051 = vsub.s32 0, %v1050
      %v1052 = vrot.slane %v1047, %v1051
      %v1054 = vpack.i.b16 %v895, %v895
      %v1056 = vlaneseq
      %v1057 = vshrl.u32 %v1056, 7
      %v1058 = vsub.s32 0, %v1057
      %v1059 = vrot.slane %v1054, %v1058
      %v1061 = vpack.i.b16 %v899, %v899
      %v1063 = vlaneseq
      %v1064 = vshrl.u32 %v1063, 7
      %v1065 = vsub.s32 0, %v1064
      %v1066 = vrot.slane %v1061, %v1065
      %v1068 = vpack.i.b16 %v903, %v903
      %v1070 = vlaneseq
      %v1071 = vshrl.u32 %v1070, 7
      %v1072 = vsub.s32 0, %v1071
      %v1073 = vrot.slane %v1068, %v1072
      %v1075 = vpack.i.b16 %v907, %v907
      %v1077 = vlaneseq
      %v1078 = vshrl.u32 %v1077, 7
      %v1079 = vsub.s32 0, %v1078
      %v1080 = vrot.slane %v1075, %v1079
      %v1082 = vpack.i.b16 %v911, %v911
      %v1084 = vlaneseq
      %v1085 = vshrl.u32 %v1084, 7
      %v1086 = vsub.s32 0, %v1085
      %v1087 = vrot.slane %v1082, %v1086
      %v1089 = vpack.i.b16 %v915, %v915
      %v1091 = vlaneseq
      %v1092 = vshrl.u32 %v1091, 7
      %v1093 = vsub.s32 0, %v1092
      %v1094 = vrot.slane %v1089, %v1093
      %v1096 = vpack.i.b16 %v919, %v919
      %v1098 = vlaneseq
      %v1099 = vshrl.u32 %v1098, 7
      %v1100 = vsub.s32 0, %v1099
      %v1101 = vrot.slane %v1096, %v1100
      %v1103 = vpack.i.b16 %v923, %v923
      %v1105 = vlaneseq
      %v1106 = vshrl.u32 %v1105, 7
      %v1107 = vsub.s32 0, %v1106
      %v1108 = vrot.slane %v1103, %v1107
      %v1110 = vpack.i.b16 %v927, %v927
      %v1112 = vlaneseq
      %v1113 = vshrl.u32 %v1112, 7
      %v1114 = vsub.s32 0, %v1113
      %v1115 = vrot.slane %v1110, %v1114
      %v1117 = vpack.i.b16 %v931, %v931
      %v1119 = vlaneseq
      %v1120 = vshrl.u32 %v1119, 7
      %v1121 = vsub.s32 0, %v1120
      %v1122 = vrot.slane %v1117, %v1121
      %v1124 = vpack.i.b16 %v935, %v935
      %v1126 = vlaneseq
      %v1127 = vshrl.u32 %v1126, 7
      %v1128 = vsub.s32 0, %v1127
      %v1129 = vrot.slane %v1124, %v1128
      %v1131 = vpack.i.b16 %v939, %v939
      %v1133 = vlaneseq
      %v1134 = vshrl.u32 %v1133, 7
      %v1135 = vsub.s32 0, %v1134
      %v1136 = vrot.slane %v1131, %v1135
      %v1138 = vpack.i.b16 %v943, %v943
      %v1140 = vlaneseq
      %v1141 = vshrl.u32 %v1140, 7
      %v1142 = vsub.s32 0, %v1141
      %v1143 = vrot.slane %v1138, %v1142
      %v1145 = vpack.i.b16 %v947, %v947
      %v1147 = vlaneseq
      %v1148 = vshrl.u32 %v1147, 7
      %v1149 = vsub.s32 0, %v1148
      %v1150 = vrot.slane %v1145, %v1149
      %v1152 = vpack.i.b16 %v951, %v951
      %v1154 = vlaneseq
      %v1155 = vshrl.u32 %v1154, 7
      %v1156 = vsub.s32 0, %v1155
      %v1157 = vrot.slane %v1152, %v1156
      %v1159 = vpack.i.b16 %v955, %v955
      %v1161 = vlaneseq
      %v1162 = vshrl.u32 %v1161, 7
      %v1163 = vsub.s32 0, %v1162
      %v1164 = vrot.slane %v1159, %v1163
      %v1166 = vpack.i.b16 %v959, %v959
      %v1168 = vlaneseq
      %v1169 = vshrl.u32 %v1168, 7
      %v1170 = vsub.s32 0, %v1169
      %v1171 = vrot.slane %v1166, %v1170
      %v1173 = vpack.i.b16 %v963, %v963
      %v1175 = vlaneseq
      %v1176 = vshrl.u32 %v1175, 7
      %v1177 = vsub.s32 0, %v1176
      %v1178 = vrot.slane %v1173, %v1177
      %v1180 = vpack.i.b16 %v967, %v967
      %v1182 = vlaneseq
      %v1183 = vshrl.u32 %v1182, 7
      %v1184 = vsub.s32 0, %v1183
      %v1185 = vrot.slane %v1180, %v1184
      %v1187 = vpack.i.b16 %v971, %v971
      %v1189 = vlaneseq
      %v1190 = vshrl.u32 %v1189, 7
      %v1191 = vsub.s32 0, %v1190
      %v1192 = vrot.slane %v1187, %v1191
      %v1194 = vpack.i.b16 %v975, %v975
      %v1196 = vlaneseq
      %v1197 = vshrl.u32 %v1196, 7
      %v1198 = vsub.s32 0, %v1197
      %v1199 = vrot.slane %v1194, %v1198
      %1204 = vrot.lane.b32.xlu0 %v676, 32
      %v1205 = vpop.permute.xlu0 %1204
      %1206 = vrot.lane.b32.xlu0 %v677, 32
      %v1207 = vpop.permute.xlu0 %1206
      %1208 = vrot.lane.b32.xlu0 %v678, 32
      %v1209 = vpop.permute.xlu0 %1208
      %1210 = vrot.lane.b32.xlu0 %v679, 32
      %v1211 = vpop.permute.xlu0 %1210
      %v1216 = vmul.bf16 %v982, %v1205
      %v1217 = vmul.bf16 %v982, %v1207
      %v1218 = vmul.bf16 %v982, %v1209
      %v1219 = vmul.bf16 %v982, %v1211
      %v1220 = vmul.bf16 %v989, %v1205
      %v1221 = vmul.bf16 %v989, %v1207
      %v1222 = vmul.bf16 %v989, %v1209
      %v1223 = vmul.bf16 %v989, %v1211
      %v1224 = vmul.bf16 %v996, %v1205
      %v1225 = vmul.bf16 %v996, %v1207
      %v1226 = vmul.bf16 %v996, %v1209
      %v1227 = vmul.bf16 %v996, %v1211
      %v1228 = vmul.bf16 %v1003, %v1205
      %v1229 = vmul.bf16 %v1003, %v1207
      %v1230 = vmul.bf16 %v1003, %v1209
      %v1231 = vmul.bf16 %v1003, %v1211
      %v1232 = vmul.bf16 %v1010, %v1205
      %v1233 = vmul.bf16 %v1010, %v1207
      %v1234 = vmul.bf16 %v1010, %v1209
      %v1235 = vmul.bf16 %v1010, %v1211
      %v1236 = vmul.bf16 %v1017, %v1205
      %v1237 = vmul.bf16 %v1017, %v1207
      %v1238 = vmul.bf16 %v1017, %v1209
      %v1239 = vmul.bf16 %v1017, %v1211
      %v1240 = vmul.bf16 %v1024, %v1205
      %v1241 = vmul.bf16 %v1024, %v1207
      %v1242 = vmul.bf16 %v1024, %v1209
      %v1243 = vmul.bf16 %v1024, %v1211
      %v1244 = vmul.bf16 %v1031, %v1205
      %v1245 = vmul.bf16 %v1031, %v1207
      %v1246 = vmul.bf16 %v1031, %v1209
      %v1247 = vmul.bf16 %v1031, %v1211
      %v1248 = vmul.bf16 %v1038, %v1205
      %v1249 = vmul.bf16 %v1038, %v1207
      %v1250 = vmul.bf16 %v1038, %v1209
      %v1251 = vmul.bf16 %v1038, %v1211
      %v1252 = vmul.bf16 %v1045, %v1205
      %v1253 = vmul.bf16 %v1045, %v1207
      %v1254 = vmul.bf16 %v1045, %v1209
      %v1255 = vmul.bf16 %v1045, %v1211
      %v1256 = vmul.bf16 %v1052, %v1205
      %v1257 = vmul.bf16 %v1052, %v1207
      %v1258 = vmul.bf16 %v1052, %v1209
      %v1259 = vmul.bf16 %v1052, %v1211
      %v1260 = vmul.bf16 %v1059, %v1205
      %v1261 = vmul.bf16 %v1059, %v1207
      %v1262 = vmul.bf16 %v1059, %v1209
      %v1263 = vmul.bf16 %v1059, %v1211
      %v1264 = vmul.bf16 %v1066, %v1205
      %v1265 = vmul.bf16 %v1066, %v1207
      %v1266 = vmul.bf16 %v1066, %v1209
      %v1267 = vmul.bf16 %v1066, %v1211
      %v1268 = vmul.bf16 %v1073, %v1205
      %v1269 = vmul.bf16 %v1073, %v1207
      %v1270 = vmul.bf16 %v1073, %v1209
      %v1271 = vmul.bf16 %v1073, %v1211
      %v1272 = vmul.bf16 %v1080, %v1205
      %v1273 = vmul.bf16 %v1080, %v1207
      %v1274 = vmul.bf16 %v1080, %v1209
      %v1275 = vmul.bf16 %v1080, %v1211
      %v1276 = vmul.bf16 %v1087, %v1205
      %v1277 = vmul.bf16 %v1087, %v1207
      %v1278 = vmul.bf16 %v1087, %v1209
      %v1279 = vmul.bf16 %v1087, %v1211
      %v1280 = vmul.bf16 %v1094, %v1205
      %v1281 = vmul.bf16 %v1094, %v1207
      %v1282 = vmul.bf16 %v1094, %v1209
      %v1283 = vmul.bf16 %v1094, %v1211
      %v1284 = vmul.bf16 %v1101, %v1205
      %v1285 = vmul.bf16 %v1101, %v1207
      %v1286 = vmul.bf16 %v1101, %v1209
      %v1287 = vmul.bf16 %v1101, %v1211
      %v1288 = vmul.bf16 %v1108, %v1205
      %v1289 = vmul.bf16 %v1108, %v1207
      %v1290 = vmul.bf16 %v1108, %v1209
      %v1291 = vmul.bf16 %v1108, %v1211
      %v1292 = vmul.bf16 %v1115, %v1205
      %v1293 = vmul.bf16 %v1115, %v1207
      %v1294 = vmul.bf16 %v1115, %v1209
      %v1295 = vmul.bf16 %v1115, %v1211
      %v1296 = vmul.bf16 %v1122, %v1205
      %v1297 = vmul.bf16 %v1122, %v1207
      %v1298 = vmul.bf16 %v1122, %v1209
      %v1299 = vmul.bf16 %v1122, %v1211
      %v1300 = vmul.bf16 %v1129, %v1205
      %v1301 = vmul.bf16 %v1129, %v1207
      %v1302 = vmul.bf16 %v1129, %v1209
      %v1303 = vmul.bf16 %v1129, %v1211
      %v1304 = vmul.bf16 %v1136, %v1205
      %v1305 = vmul.bf16 %v1136, %v1207
      %v1306 = vmul.bf16 %v1136, %v1209
      %v1307 = vmul.bf16 %v1136, %v1211
      %v1308 = vmul.bf16 %v1143, %v1205
      %v1309 = vmul.bf16 %v1143, %v1207
      %v1310 = vmul.bf16 %v1143, %v1209
      %v1311 = vmul.bf16 %v1143, %v1211
      %v1312 = vmul.bf16 %v1150, %v1205
      %v1313 = vmul.bf16 %v1150, %v1207
      %v1314 = vmul.bf16 %v1150, %v1209
      %v1315 = vmul.bf16 %v1150, %v1211
      %v1316 = vmul.bf16 %v1157, %v1205
      %v1317 = vmul.bf16 %v1157, %v1207
      %v1318 = vmul.bf16 %v1157, %v1209
      %v1319 = vmul.bf16 %v1157, %v1211
      %v1320 = vmul.bf16 %v1164, %v1205
      %v1321 = vmul.bf16 %v1164, %v1207
      %v1322 = vmul.bf16 %v1164, %v1209
      %v1323 = vmul.bf16 %v1164, %v1211
      %v1324 = vmul.bf16 %v1171, %v1205
      %v1325 = vmul.bf16 %v1171, %v1207
      %v1326 = vmul.bf16 %v1171, %v1209
      %v1327 = vmul.bf16 %v1171, %v1211
      %v1328 = vmul.bf16 %v1178, %v1205
      %v1329 = vmul.bf16 %v1178, %v1207
      %v1330 = vmul.bf16 %v1178, %v1209
      %v1331 = vmul.bf16 %v1178, %v1211
      %v1332 = vmul.bf16 %v1185, %v1205
      %v1333 = vmul.bf16 %v1185, %v1207
      %v1334 = vmul.bf16 %v1185, %v1209
      %v1335 = vmul.bf16 %v1185, %v1211
      %v1336 = vmul.bf16 %v1192, %v1205
      %v1337 = vmul.bf16 %v1192, %v1207
      %v1338 = vmul.bf16 %v1192, %v1209
      %v1339 = vmul.bf16 %v1192, %v1211
      %v1340 = vmul.bf16 %v1199, %v1205
      %v1341 = vmul.bf16 %v1199, %v1207
      %v1342 = vmul.bf16 %v1199, %v1209
      %v1343 = vmul.bf16 %v1199, %v1211
      %1376 = vrot.lane.b32.xlu0 %v982, 32
      %v1377 = vpop.permute.xlu0 %1376
      %1378 = vrot.lane.b32.xlu0 %v989, 32
      %v1379 = vpop.permute.xlu0 %1378
      %1380 = vrot.lane.b32.xlu0 %v996, 32
      %v1381 = vpop.permute.xlu0 %1380
      %1382 = vrot.lane.b32.xlu0 %v1003, 32
      %v1383 = vpop.permute.xlu0 %1382
      %1384 = vrot.lane.b32.xlu0 %v1010, 32
      %v1385 = vpop.permute.xlu0 %1384
      %1386 = vrot.lane.b32.xlu0 %v1017, 32
      %v1387 = vpop.permute.xlu0 %1386
      %1388 = vrot.lane.b32.xlu0 %v1024, 32
      %v1389 = vpop.permute.xlu0 %1388
      %1390 = vrot.lane.b32.xlu0 %v1031, 32
      %v1391 = vpop.permute.xlu0 %1390
      %1392 = vrot.lane.b32.xlu0 %v1038, 32
      %v1393 = vpop.permute.xlu0 %1392
      %1394 = vrot.lane.b32.xlu0 %v1045, 32
      %v1395 = vpop.permute.xlu0 %1394
      %1396 = vrot.lane.b32.xlu0 %v1052, 32
      %v1397 = vpop.permute.xlu0 %1396
      %1398 = vrot.lane.b32.xlu0 %v1059, 32
      %v1399 = vpop.permute.xlu0 %1398
      %1400 = vrot.lane.b32.xlu0 %v1066, 32
      %v1401 = vpop.permute.xlu0 %1400
      %1402 = vrot.lane.b32.xlu0 %v1073, 32
      %v1403 = vpop.permute.xlu0 %1402
      %1404 = vrot.lane.b32.xlu0 %v1080, 32
      %v1405 = vpop.permute.xlu0 %1404
      %1406 = vrot.lane.b32.xlu0 %v1087, 32
      %v1407 = vpop.permute.xlu0 %1406
      %1408 = vrot.lane.b32.xlu0 %v1094, 32
      %v1409 = vpop.permute.xlu0 %1408
      %1410 = vrot.lane.b32.xlu0 %v1101, 32
      %v1411 = vpop.permute.xlu0 %1410
      %1412 = vrot.lane.b32.xlu0 %v1108, 32
      %v1413 = vpop.permute.xlu0 %1412
      %1414 = vrot.lane.b32.xlu0 %v1115, 32
      %v1415 = vpop.permute.xlu0 %1414
      %1416 = vrot.lane.b32.xlu0 %v1122, 32
      %v1417 = vpop.permute.xlu0 %1416
      %1418 = vrot.lane.b32.xlu0 %v1129, 32
      %v1419 = vpop.permute.xlu0 %1418
      %1420 = vrot.lane.b32.xlu0 %v1136, 32
      %v1421 = vpop.permute.xlu0 %1420
      %1422 = vrot.lane.b32.xlu0 %v1143, 32
      %v1423 = vpop.permute.xlu0 %1422
      %1424 = vrot.lane.b32.xlu0 %v1150, 32
      %v1425 = vpop.permute.xlu0 %1424
      %1426 = vrot.lane.b32.xlu0 %v1157, 32
      %v1427 = vpop.permute.xlu0 %1426
      %1428 = vrot.lane.b32.xlu0 %v1164, 32
      %v1429 = vpop.permute.xlu0 %1428
      %1430 = vrot.lane.b32.xlu0 %v1171, 32
      %v1431 = vpop.permute.xlu0 %1430
      %1432 = vrot.lane.b32.xlu0 %v1178, 32
      %v1433 = vpop.permute.xlu0 %1432
      %1434 = vrot.lane.b32.xlu0 %v1185, 32
      %v1435 = vpop.permute.xlu0 %1434
      %1436 = vrot.lane.b32.xlu0 %v1192, 32
      %v1437 = vpop.permute.xlu0 %1436
      %1438 = vrot.lane.b32.xlu0 %v1199, 32
      %v1439 = vpop.permute.xlu0 %1438
      %v1472 = vadd.bf16 %v1216, %v1377
      %v1473 = vadd.bf16 %v1217, %v1377
      %v1474 = vadd.bf16 %v1218, %v1377
      %v1475 = vadd.bf16 %v1219, %v1377
      %v1476 = vadd.bf16 %v1220, %v1379
      %v1477 = vadd.bf16 %v1221, %v1379
      %v1478 = vadd.bf16 %v1222, %v1379
      %v1479 = vadd.bf16 %v1223, %v1379
      %v1480 = vadd.bf16 %v1224, %v1381
      %v1481 = vadd.bf16 %v1225, %v1381
      %v1482 = vadd.bf16 %v1226, %v1381
      %v1483 = vadd.bf16 %v1227, %v1381
      %v1484 = vadd.bf16 %v1228, %v1383
      %v1485 = vadd.bf16 %v1229, %v1383
      %v1486 = vadd.bf16 %v1230, %v1383
      %v1487 = vadd.bf16 %v1231, %v1383
      %v1488 = vadd.bf16 %v1232, %v1385
      %v1489 = vadd.bf16 %v1233, %v1385
      %v1490 = vadd.bf16 %v1234, %v1385
      %v1491 = vadd.bf16 %v1235, %v1385
      %v1492 = vadd.bf16 %v1236, %v1387
      %v1493 = vadd.bf16 %v1237, %v1387
      %v1494 = vadd.bf16 %v1238, %v1387
      %v1495 = vadd.bf16 %v1239, %v1387
      %v1496 = vadd.bf16 %v1240, %v1389
      %v1497 = vadd.bf16 %v1241, %v1389
      %v1498 = vadd.bf16 %v1242, %v1389
      %v1499 = vadd.bf16 %v1243, %v1389
      %v1500 = vadd.bf16 %v1244, %v1391
      %v1501 = vadd.bf16 %v1245, %v1391
      %v1502 = vadd.bf16 %v1246, %v1391
      %v1503 = vadd.bf16 %v1247, %v1391
      %v1504 = vadd.bf16 %v1248, %v1393
      %v1505 = vadd.bf16 %v1249, %v1393
      %v1506 = vadd.bf16 %v1250, %v1393
      %v1507 = vadd.bf16 %v1251, %v1393
      %v1508 = vadd.bf16 %v1252, %v1395
      %v1509 = vadd.bf16 %v1253, %v1395
      %v1510 = vadd.bf16 %v1254, %v1395
      %v1511 = vadd.bf16 %v1255, %v1395
      %v1512 = vadd.bf16 %v1256, %v1397
      %v1513 = vadd.bf16 %v1257, %v1397
      %v1514 = vadd.bf16 %v1258, %v1397
      %v1515 = vadd.bf16 %v1259, %v1397
      %v1516 = vadd.bf16 %v1260, %v1399
      %v1517 = vadd.bf16 %v1261, %v1399
      %v1518 = vadd.bf16 %v1262, %v1399
      %v1519 = vadd.bf16 %v1263, %v1399
      %v1520 = vadd.bf16 %v1264, %v1401
      %v1521 = vadd.bf16 %v1265, %v1401
      %v1522 = vadd.bf16 %v1266, %v1401
      %v1523 = vadd.bf16 %v1267, %v1401
      %v1524 = vadd.bf16 %v1268, %v1403
      %v1525 = vadd.bf16 %v1269, %v1403
      %v1526 = vadd.bf16 %v1270, %v1403
      %v1527 = vadd.bf16 %v1271, %v1403
      %v1528 = vadd.bf16 %v1272, %v1405
      %v1529 = vadd.bf16 %v1273, %v1405
      %v1530 = vadd.bf16 %v1274, %v1405
      %v1531 = vadd.bf16 %v1275, %v1405
      %v1532 = vadd.bf16 %v1276, %v1407
      %v1533 = vadd.bf16 %v1277, %v1407
      %v1534 = vadd.bf16 %v1278, %v1407
      %v1535 = vadd.bf16 %v1279, %v1407
      %v1536 = vadd.bf16 %v1280, %v1409
      %v1537 = vadd.bf16 %v1281, %v1409
      %v1538 = vadd.bf16 %v1282, %v1409
      %v1539 = vadd.bf16 %v1283, %v1409
      %v1540 = vadd.bf16 %v1284, %v1411
      %v1541 = vadd.bf16 %v1285, %v1411
      %v1542 = vadd.bf16 %v1286, %v1411
      %v1543 = vadd.bf16 %v1287, %v1411
      %v1544 = vadd.bf16 %v1288, %v1413
      %v1545 = vadd.bf16 %v1289, %v1413
      %v1546 = vadd.bf16 %v1290, %v1413
      %v1547 = vadd.bf16 %v1291, %v1413
      %v1548 = vadd.bf16 %v1292, %v1415
      %v1549 = vadd.bf16 %v1293, %v1415
      %v1550 = vadd.bf16 %v1294, %v1415
      %v1551 = vadd.bf16 %v1295, %v1415
      %v1552 = vadd.bf16 %v1296, %v1417
      %v1553 = vadd.bf16 %v1297, %v1417
      %v1554 = vadd.bf16 %v1298, %v1417
      %v1555 = vadd.bf16 %v1299, %v1417
      %v1556 = vadd.bf16 %v1300, %v1419
      %v1557 = vadd.bf16 %v1301, %v1419
      %v1558 = vadd.bf16 %v1302, %v1419
      %v1559 = vadd.bf16 %v1303, %v1419
      %v1560 = vadd.bf16 %v1304, %v1421
      %v1561 = vadd.bf16 %v1305, %v1421
      %v1562 = vadd.bf16 %v1306, %v1421
      %v1563 = vadd.bf16 %v1307, %v1421
      %v1564 = vadd.bf16 %v1308, %v1423
      %v1565 = vadd.bf16 %v1309, %v1423
      %v1566 = vadd.bf16 %v1310, %v1423
      %v1567 = vadd.bf16 %v1311, %v1423
      %v1568 = vadd.bf16 %v1312, %v1425
      %v1569 = vadd.bf16 %v1313, %v1425
      %v1570 = vadd.bf16 %v1314, %v1425
      %v1571 = vadd.bf16 %v1315, %v1425
      %v1572 = vadd.bf16 %v1316, %v1427
      %v1573 = vadd.bf16 %v1317, %v1427
      %v1574 = vadd.bf16 %v1318, %v1427
      %v1575 = vadd.bf16 %v1319, %v1427
      %v1576 = vadd.bf16 %v1320, %v1429
      %v1577 = vadd.bf16 %v1321, %v1429
      %v1578 = vadd.bf16 %v1322, %v1429
      %v1579 = vadd.bf16 %v1323, %v1429
      %v1580 = vadd.bf16 %v1324, %v1431
      %v1581 = vadd.bf16 %v1325, %v1431
      %v1582 = vadd.bf16 %v1326, %v1431
      %v1583 = vadd.bf16 %v1327, %v1431
      %v1584 = vadd.bf16 %v1328, %v1433
      %v1585 = vadd.bf16 %v1329, %v1433
      %v1586 = vadd.bf16 %v1330, %v1433
      %v1587 = vadd.bf16 %v1331, %v1433
      %v1588 = vadd.bf16 %v1332, %v1435
      %v1589 = vadd.bf16 %v1333, %v1435
      %v1590 = vadd.bf16 %v1334, %v1435
      %v1591 = vadd.bf16 %v1335, %v1435
      %v1592 = vadd.bf16 %v1336, %v1437
      %v1593 = vadd.bf16 %v1337, %v1437
      %v1594 = vadd.bf16 %v1338, %v1437
      %v1595 = vadd.bf16 %v1339, %v1437
      %v1596 = vadd.bf16 %v1340, %v1439
      %v1597 = vadd.bf16 %v1341, %v1439
      %v1598 = vadd.bf16 %v1342, %v1439
      %v1599 = vadd.bf16 %v1343, %v1439
      %v1600 = vmax.bf16 %v1472, 0
      %v1601 = vmax.bf16 %v1473, 0
      %v1602 = vmax.bf16 %v1474, 0
      %v1603 = vmax.bf16 %v1475, 0
      %v1604 = vmax.bf16 %v1476, 0
      %v1605 = vmax.bf16 %v1477, 0
      %v1606 = vmax.bf16 %v1478, 0
      %v1607 = vmax.bf16 %v1479, 0
      %v1608 = vmax.bf16 %v1480, 0
      %v1609 = vmax.bf16 %v1481, 0
      %v1610 = vmax.bf16 %v1482, 0
      %v1611 = vmax.bf16 %v1483, 0
      %v1612 = vmax.bf16 %v1484, 0
      %v1613 = vmax.bf16 %v1485, 0
      %v1614 = vmax.bf16 %v1486, 0
      %v1615 = vmax.bf16 %v1487, 0
      %v1616 = vmax.bf16 %v1488, 0
      %v1617 = vmax.bf16 %v1489, 0
      %v1618 = vmax.bf16 %v1490, 0
      %v1619 = vmax.bf16 %v1491, 0
      %v1620 = vmax.bf16 %v1492, 0
      %v1621 = vmax.bf16 %v1493, 0
      %v1622 = vmax.bf16 %v1494, 0
      %v1623 = vmax.bf16 %v1495, 0
      %v1624 = vmax.bf16 %v1496, 0
      %v1625 = vmax.bf16 %v1497, 0
      %v1626 = vmax.bf16 %v1498, 0
      %v1627 = vmax.bf16 %v1499, 0
      %v1628 = vmax.bf16 %v1500, 0
      %v1629 = vmax.bf16 %v1501, 0
      %v1630 = vmax.bf16 %v1502, 0
      %v1631 = vmax.bf16 %v1503, 0
      %v1632 = vmax.bf16 %v1504, 0
      %v1633 = vmax.bf16 %v1505, 0
      %v1634 = vmax.bf16 %v1506, 0
      %v1635 = vmax.bf16 %v1507, 0
      %v1636 = vmax.bf16 %v1508, 0
      %v1637 = vmax.bf16 %v1509, 0
      %v1638 = vmax.bf16 %v1510, 0
      %v1639 = vmax.bf16 %v1511, 0
      %v1640 = vmax.bf16 %v1512, 0
      %v1641 = vmax.bf16 %v1513, 0
      %v1642 = vmax.bf16 %v1514, 0
      %v1643 = vmax.bf16 %v1515, 0
      %v1644 = vmax.bf16 %v1516, 0
      %v1645 = vmax.bf16 %v1517, 0
      %v1646 = vmax.bf16 %v1518, 0
      %v1647 = vmax.bf16 %v1519, 0
      %v1648 = vmax.bf16 %v1520, 0
      %v1649 = vmax.bf16 %v1521, 0
      %v1650 = vmax.bf16 %v1522, 0
      %v1651 = vmax.bf16 %v1523, 0
      %v1652 = vmax.bf16 %v1524, 0
      %v1653 = vmax.bf16 %v1525, 0
      %v1654 = vmax.bf16 %v1526, 0
      %v1655 = vmax.bf16 %v1527, 0
      %v1656 = vmax.bf16 %v1528, 0
      %v1657 = vmax.bf16 %v1529, 0
      %v1658 = vmax.bf16 %v1530, 0
      %v1659 = vmax.bf16 %v1531, 0
      %v1660 = vmax.bf16 %v1532, 0
      %v1661 = vmax.bf16 %v1533, 0
      %v1662 = vmax.bf16 %v1534, 0
      %v1663 = vmax.bf16 %v1535, 0
      %v1664 = vmax.bf16 %v1536, 0
      %v1665 = vmax.bf16 %v1537, 0
      %v1666 = vmax.bf16 %v1538, 0
      %v1667 = vmax.bf16 %v1539, 0
      %v1668 = vmax.bf16 %v1540, 0
      %v1669 = vmax.bf16 %v1541, 0
      %v1670 = vmax.bf16 %v1542, 0
      %v1671 = vmax.bf16 %v1543, 0
      %v1672 = vmax.bf16 %v1544, 0
      %v1673 = vmax.bf16 %v1545, 0
      %v1674 = vmax.bf16 %v1546, 0
      %v1675 = vmax.bf16 %v1547, 0
      %v1676 = vmax.bf16 %v1548, 0
      %v1677 = vmax.bf16 %v1549, 0
      %v1678 = vmax.bf16 %v1550, 0
      %v1679 = vmax.bf16 %v1551, 0
      %v1680 = vmax.bf16 %v1552, 0
      %v1681 = vmax.bf16 %v1553, 0
      %v1682 = vmax.bf16 %v1554, 0
      %v1683 = vmax.bf16 %v1555, 0
      %v1684 = vmax.bf16 %v1556, 0
      %v1685 = vmax.bf16 %v1557, 0
      %v1686 = vmax.bf16 %v1558, 0
      %v1687 = vmax.bf16 %v1559, 0
      %v1688 = vmax.bf16 %v1560, 0
      %v1689 = vmax.bf16 %v1561, 0
      %v1690 = vmax.bf16 %v1562, 0
      %v1691 = vmax.bf16 %v1563, 0
      %v1692 = vmax.bf16 %v1564, 0
      %v1693 = vmax.bf16 %v1565, 0
      %v1694 = vmax.bf16 %v1566, 0
      %v1695 = vmax.bf16 %v1567, 0
      %v1696 = vmax.bf16 %v1568, 0
      %v1697 = vmax.bf16 %v1569, 0
      %v1698 = vmax.bf16 %v1570, 0
      %v1699 = vmax.bf16 %v1571, 0
      %v1700 = vmax.bf16 %v1572, 0
      %v1701 = vmax.bf16 %v1573, 0
      %v1702 = vmax.bf16 %v1574, 0
      %v1703 = vmax.bf16 %v1575, 0
      %v1704 = vmax.bf16 %v1576, 0
      %v1705 = vmax.bf16 %v1577, 0
      %v1706 = vmax.bf16 %v1578, 0
      %v1707 = vmax.bf16 %v1579, 0
      %v1708 = vmax.bf16 %v1580, 0
      %v1709 = vmax.bf16 %v1581, 0
      %v1710 = vmax.bf16 %v1582, 0
      %v1711 = vmax.bf16 %v1583, 0
      %v1712 = vmax.bf16 %v1584, 0
      %v1713 = vmax.bf16 %v1585, 0
      %v1714 = vmax.bf16 %v1586, 0
      %v1715 = vmax.bf16 %v1587, 0
      %v1716 = vmax.bf16 %v1588, 0
      %v1717 = vmax.bf16 %v1589, 0
      %v1718 = vmax.bf16 %v1590, 0
      %v1719 = vmax.bf16 %v1591, 0
      %v1720 = vmax.bf16 %v1592, 0
      %v1721 = vmax.bf16 %v1593, 0
      %v1722 = vmax.bf16 %v1594, 0
      %v1723 = vmax.bf16 %v1595, 0
      %v1724 = vmax.bf16 %v1596, 0
      %v1725 = vmax.bf16 %v1597, 0
      %v1726 = vmax.bf16 %v1598, 0
      %v1727 = vmax.bf16 %v1599, 0
      %v1732 = vunpack.c.l.b16 %v680
      %v1733 = vunpack.c.l.b16 %v681
      %v1734 = vunpack.c.l.b16 %v682
      %v1735 = vunpack.c.l.b16 %v683
      %v1736 = vpack.c.b16 %v1733, %v1732
      %v1737 = vpack.c.b16 %v1735, %v1734
      %v1739 = vpack.i.b16 %v1736, %v1736
      %v1741 = vlaneseq
      %v1742 = vshrl.u32 %v1741, 7
      %v1743 = vsub.s32 0, %v1742
      %v1744 = vrot.slane %v1739, %v1743
      %1746 = vbcast.lane.c.b16.xlu0 %v1744, 256
      %v1747 = vpop.permute.xlu0 %1746
      %s1749 = sor.u32 256, 16
      %1750 = vbcast.lane.c.b16.xlu0 %v1744, %s1749
      %v1751 = vpop.permute.xlu0 %1750
      %s1753 = sor.u32 256, 32
      %1754 = vbcast.lane.c.b16.xlu0 %v1744, %s1753
      %v1755 = vpop.permute.xlu0 %1754
      %s1757 = sor.u32 256, 48
      %1758 = vbcast.lane.c.b16.xlu0 %v1744, %s1757
      %v1759 = vpop.permute.xlu0 %1758
      %v1760 = vshrl.u32 %v1736, 16
      %v1761 = vpack.i.b16 %v1760, %v1760
      %v1763 = vlaneseq
      %v1764 = vshrl.u32 %v1763, 7
      %v1765 = vsub.s32 0, %v1764
      %v1766 = vrot.slane %v1761, %v1765
      %1768 = vbcast.lane.c.b16.xlu0 %v1766, 256
      %v1769 = vpop.permute.xlu0 %1768
      %s1771 = sor.u32 256, 16
      %1772 = vbcast.lane.c.b16.xlu0 %v1766, %s1771
      %v1773 = vpop.permute.xlu0 %1772
      %s1775 = sor.u32 256, 32
      %1776 = vbcast.lane.c.b16.xlu0 %v1766, %s1775
      %v1777 = vpop.permute.xlu0 %1776
      %s1779 = sor.u32 256, 48
      %1780 = vbcast.lane.c.b16.xlu0 %v1766, %s1779
      %v1781 = vpop.permute.xlu0 %1780
      %v1782 = vlaneseq
      %v1783 = vshrl.u32 %v1782, 7
      %v1784 = vsub.s32 1, %v1783
      %v1785 = vrot.slane %v1739, %v1784
      %1787 = vbcast.lane.c.b16.xlu0 %v1785, 256
      %v1788 = vpop.permute.xlu0 %1787
      %s1790 = sor.u32 256, 16
      %1791 = vbcast.lane.c.b16.xlu0 %v1785, %s1790
      %v1792 = vpop.permute.xlu0 %1791
      %s1794 = sor.u32 256, 32
      %1795 = vbcast.lane.c.b16.xlu0 %v1785, %s1794
      %v1796 = vpop.permute.xlu0 %1795
      %s1798 = sor.u32 256, 48
      %1799 = vbcast.lane.c.b16.xlu0 %v1785, %s1798
      %v1800 = vpop.permute.xlu0 %1799
      %v1801 = vlaneseq
      %v1802 = vshrl.u32 %v1801, 7
      %v1803 = vsub.s32 1, %v1802
      %v1804 = vrot.slane %v1761, %v1803
      %1806 = vbcast.lane.c.b16.xlu0 %v1804, 256
      %v1807 = vpop.permute.xlu0 %1806
      %s1809 = sor.u32 256, 16
      %1810 = vbcast.lane.c.b16.xlu0 %v1804, %s1809
      %v1811 = vpop.permute.xlu0 %1810
      %s1813 = sor.u32 256, 32
      %1814 = vbcast.lane.c.b16.xlu0 %v1804, %s1813
      %v1815 = vpop.permute.xlu0 %1814
      %s1817 = sor.u32 256, 48
      %1818 = vbcast.lane.c.b16.xlu0 %v1804, %s1817
      %v1819 = vpop.permute.xlu0 %1818
      %v1820 = vlaneseq
      %v1821 = vshrl.u32 %v1820, 7
      %v1822 = vsub.s32 2, %v1821
      %v1823 = vrot.slane %v1739, %v1822
      %1825 = vbcast.lane.c.b16.xlu0 %v1823, 256
      %v1826 = vpop.permute.xlu0 %1825
      %s1828 = sor.u32 256, 16
      %1829 = vbcast.lane.c.b16.xlu0 %v1823, %s1828
      %v1830 = vpop.permute.xlu0 %1829
      %s1832 = sor.u32 256, 32
      %1833 = vbcast.lane.c.b16.xlu0 %v1823, %s1832
      %v1834 = vpop.permute.xlu0 %1833
      %s1836 = sor.u32 256, 48
      %1837 = vbcast.lane.c.b16.xlu0 %v1823, %s1836
      %v1838 = vpop.permute.xlu0 %1837
      %v1839 = vlaneseq
      %v1840 = vshrl.u32 %v1839, 7
      %v1841 = vsub.s32 2, %v1840
      %v1842 = vrot.slane %v1761, %v1841
      %1844 = vbcast.lane.c.b16.xlu0 %v1842, 256
      %v1845 = vpop.permute.xlu0 %1844
      %s1847 = sor.u32 256, 16
      %1848 = vbcast.lane.c.b16.xlu0 %v1842, %s1847
      %v1849 = vpop.permute.xlu0 %1848
      %s1851 = sor.u32 256, 32
      %1852 = vbcast.lane.c.b16.xlu0 %v1842, %s1851
      %v1853 = vpop.permute.xlu0 %1852
      %s1855 = sor.u32 256, 48
      %1856 = vbcast.lane.c.b16.xlu0 %v1842, %s1855
      %v1857 = vpop.permute.xlu0 %1856
      %v1858 = vlaneseq
      %v1859 = vshrl.u32 %v1858, 7
      %v1860 = vsub.s32 3, %v1859
      %v1861 = vrot.slane %v1739, %v1860
      %1863 = vbcast.lane.c.b16.xlu0 %v1861, 256
      %v1864 = vpop.permute.xlu0 %1863
      %s1866 = sor.u32 256, 16
      %1867 = vbcast.lane.c.b16.xlu0 %v1861, %s1866
      %v1868 = vpop.permute.xlu0 %1867
      %s1870 = sor.u32 256, 32
      %1871 = vbcast.lane.c.b16.xlu0 %v1861, %s1870
      %v1872 = vpop.permute.xlu0 %1871
      %s1874 = sor.u32 256, 48
      %1875 = vbcast.lane.c.b16.xlu0 %v1861, %s1874
      %v1876 = vpop.permute.xlu0 %1875
      %v1877 = vlaneseq
      %v1878 = vshrl.u32 %v1877, 7
      %v1879 = vsub.s32 3, %v1878
      %v1880 = vrot.slane %v1761, %v1879
      %1882 = vbcast.lane.c.b16.xlu0 %v1880, 256
      %v1883 = vpop.permute.xlu0 %1882
      %s1885 = sor.u32 256, 16
      %1886 = vbcast.lane.c.b16.xlu0 %v1880, %s1885
      %v1887 = vpop.permute.xlu0 %1886
      %s1889 = sor.u32 256, 32
      %1890 = vbcast.lane.c.b16.xlu0 %v1880, %s1889
      %v1891 = vpop.permute.xlu0 %1890
      %s1893 = sor.u32 256, 48
      %1894 = vbcast.lane.c.b16.xlu0 %v1880, %s1893
      %v1895 = vpop.permute.xlu0 %1894
      %v1896 = vlaneseq
      %v1897 = vshrl.u32 %v1896, 7
      %v1898 = vsub.s32 4, %v1897
      %v1899 = vrot.slane %v1739, %v1898
      %1901 = vbcast.lane.c.b16.xlu0 %v1899, 256
      %v1902 = vpop.permute.xlu0 %1901
      %s1904 = sor.u32 256, 16
      %1905 = vbcast.lane.c.b16.xlu0 %v1899, %s1904
      %v1906 = vpop.permute.xlu0 %1905
      %s1908 = sor.u32 256, 32
      %1909 = vbcast.lane.c.b16.xlu0 %v1899, %s1908
      %v1910 = vpop.permute.xlu0 %1909
      %s1912 = sor.u32 256, 48
      %1913 = vbcast.lane.c.b16.xlu0 %v1899, %s1912
      %v1914 = vpop.permute.xlu0 %1913
      %v1915 = vlaneseq
      %v1916 = vshrl.u32 %v1915, 7
      %v1917 = vsub.s32 4, %v1916
      %v1918 = vrot.slane %v1761, %v1917
      %1920 = vbcast.lane.c.b16.xlu0 %v1918, 256
      %v1921 = vpop.permute.xlu0 %1920
      %s1923 = sor.u32 256, 16
      %1924 = vbcast.lane.c.b16.xlu0 %v1918, %s1923
      %v1925 = vpop.permute.xlu0 %1924
      %s1927 = sor.u32 256, 32
      %1928 = vbcast.lane.c.b16.xlu0 %v1918, %s1927
      %v1929 = vpop.permute.xlu0 %1928
      %s1931 = sor.u32 256, 48
      %1932 = vbcast.lane.c.b16.xlu0 %v1918, %s1931
      %v1933 = vpop.permute.xlu0 %1932
      %v1934 = vlaneseq
      %v1935 = vshrl.u32 %v1934, 7
      %v1936 = vsub.s32 5, %v1935
      %v1937 = vrot.slane %v1739, %v1936
      %1939 = vbcast.lane.c.b16.xlu0 %v1937, 256
      %v1940 = vpop.permute.xlu0 %1939
      %s1942 = sor.u32 256, 16
      %1943 = vbcast.lane.c.b16.xlu0 %v1937, %s1942
      %v1944 = vpop.permute.xlu0 %1943
      %s1946 = sor.u32 256, 32
      %1947 = vbcast.lane.c.b16.xlu0 %v1937, %s1946
      %v1948 = vpop.permute.xlu0 %1947
      %s1950 = sor.u32 256, 48
      %1951 = vbcast.lane.c.b16.xlu0 %v1937, %s1950
      %v1952 = vpop.permute.xlu0 %1951
      %v1953 = vlaneseq
      %v1954 = vshrl.u32 %v1953, 7
      %v1955 = vsub.s32 5, %v1954
      %v1956 = vrot.slane %v1761, %v1955
      %1958 = vbcast.lane.c.b16.xlu0 %v1956, 256
      %v1959 = vpop.permute.xlu0 %1958
      %s1961 = sor.u32 256, 16
      %1962 = vbcast.lane.c.b16.xlu0 %v1956, %s1961
      %v1963 = vpop.permute.xlu0 %1962
      %s1965 = sor.u32 256, 32
      %1966 = vbcast.lane.c.b16.xlu0 %v1956, %s1965
      %v1967 = vpop.permute.xlu0 %1966
      %s1969 = sor.u32 256, 48
      %1970 = vbcast.lane.c.b16.xlu0 %v1956, %s1969
      %v1971 = vpop.permute.xlu0 %1970
      %v1972 = vlaneseq
      %v1973 = vshrl.u32 %v1972, 7
      %v1974 = vsub.s32 6, %v1973
      %v1975 = vrot.slane %v1739, %v1974
      %1977 = vbcast.lane.c.b16.xlu0 %v1975, 256
      %v1978 = vpop.permute.xlu0 %1977
      %s1980 = sor.u32 256, 16
      %1981 = vbcast.lane.c.b16.xlu0 %v1975, %s1980
      %v1982 = vpop.permute.xlu0 %1981
      %s1984 = sor.u32 256, 32
      %1985 = vbcast.lane.c.b16.xlu0 %v1975, %s1984
      %v1986 = vpop.permute.xlu0 %1985
      %s1988 = sor.u32 256, 48
      %1989 = vbcast.lane.c.b16.xlu0 %v1975, %s1988
      %v1990 = vpop.permute.xlu0 %1989
      %v1991 = vlaneseq
      %v1992 = vshrl.u32 %v1991, 7
      %v1993 = vsub.s32 6, %v1992
      %v1994 = vrot.slane %v1761, %v1993
      %1996 = vbcast.lane.c.b16.xlu0 %v1994, 256
      %v1997 = vpop.permute.xlu0 %1996
      %s1999 = sor.u32 256, 16
      %2000 = vbcast.lane.c.b16.xlu0 %v1994, %s1999
      %v2001 = vpop.permute.xlu0 %2000
      %s2003 = sor.u32 256, 32
      %2004 = vbcast.lane.c.b16.xlu0 %v1994, %s2003
      %v2005 = vpop.permute.xlu0 %2004
      %s2007 = sor.u32 256, 48
      %2008 = vbcast.lane.c.b16.xlu0 %v1994, %s2007
      %v2009 = vpop.permute.xlu0 %2008
      %v2010 = vlaneseq
      %v2011 = vshrl.u32 %v2010, 7
      %v2012 = vsub.s32 7, %v2011
      %v2013 = vrot.slane %v1739, %v2012
      %2015 = vbcast.lane.c.b16.xlu0 %v2013, 256
      %v2016 = vpop.permute.xlu0 %2015
      %s2018 = sor.u32 256, 16
      %2019 = vbcast.lane.c.b16.xlu0 %v2013, %s2018
      %v2020 = vpop.permute.xlu0 %2019
      %s2022 = sor.u32 256, 32
      %2023 = vbcast.lane.c.b16.xlu0 %v2013, %s2022
      %v2024 = vpop.permute.xlu0 %2023
      %s2026 = sor.u32 256, 48
      %2027 = vbcast.lane.c.b16.xlu0 %v2013, %s2026
      %v2028 = vpop.permute.xlu0 %2027
      %v2029 = vlaneseq
      %v2030 = vshrl.u32 %v2029, 7
      %v2031 = vsub.s32 7, %v2030
      %v2032 = vrot.slane %v1761, %v2031
      %2034 = vbcast.lane.c.b16.xlu0 %v2032, 256
      %v2035 = vpop.permute.xlu0 %2034
      %s2037 = sor.u32 256, 16
      %2038 = vbcast.lane.c.b16.xlu0 %v2032, %s2037
      %v2039 = vpop.permute.xlu0 %2038
      %s2041 = sor.u32 256, 32
      %2042 = vbcast.lane.c.b16.xlu0 %v2032, %s2041
      %v2043 = vpop.permute.xlu0 %2042
      %s2045 = sor.u32 256, 48
      %2046 = vbcast.lane.c.b16.xlu0 %v2032, %s2045
      %v2047 = vpop.permute.xlu0 %2046
      %v2049 = vpack.i.b16 %v1737, %v1737
      %v2051 = vlaneseq
      %v2052 = vshrl.u32 %v2051, 7
      %v2053 = vsub.s32 0, %v2052
      %v2054 = vrot.slane %v2049, %v2053
      %2056 = vbcast.lane.c.b16.xlu0 %v2054, 256
      %v2057 = vpop.permute.xlu0 %2056
      %s2059 = sor.u32 256, 16
      %2060 = vbcast.lane.c.b16.xlu0 %v2054, %s2059
      %v2061 = vpop.permute.xlu0 %2060
      %s2063 = sor.u32 256, 32
      %2064 = vbcast.lane.c.b16.xlu0 %v2054, %s2063
      %v2065 = vpop.permute.xlu0 %2064
      %s2067 = sor.u32 256, 48
      %2068 = vbcast.lane.c.b16.xlu0 %v2054, %s2067
      %v2069 = vpop.permute.xlu0 %2068
      %v2070 = vshrl.u32 %v1737, 16
      %v2071 = vpack.i.b16 %v2070, %v2070
      %v2073 = vlaneseq
      %v2074 = vshrl.u32 %v2073, 7
      %v2075 = vsub.s32 0, %v2074
      %v2076 = vrot.slane %v2071, %v2075
      %2078 = vbcast.lane.c.b16.xlu0 %v2076, 256
      %v2079 = vpop.permute.xlu0 %2078
      %s2081 = sor.u32 256, 16
      %2082 = vbcast.lane.c.b16.xlu0 %v2076, %s2081
      %v2083 = vpop.permute.xlu0 %2082
      %s2085 = sor.u32 256, 32
      %2086 = vbcast.lane.c.b16.xlu0 %v2076, %s2085
      %v2087 = vpop.permute.xlu0 %2086
      %s2089 = sor.u32 256, 48
      %2090 = vbcast.lane.c.b16.xlu0 %v2076, %s2089
      %v2091 = vpop.permute.xlu0 %2090
      %v2092 = vlaneseq
      %v2093 = vshrl.u32 %v2092, 7
      %v2094 = vsub.s32 1, %v2093
      %v2095 = vrot.slane %v2049, %v2094
      %2097 = vbcast.lane.c.b16.xlu0 %v2095, 256
      %v2098 = vpop.permute.xlu0 %2097
      %s2100 = sor.u32 256, 16
      %2101 = vbcast.lane.c.b16.xlu0 %v2095, %s2100
      %v2102 = vpop.permute.xlu0 %2101
      %s2104 = sor.u32 256, 32
      %2105 = vbcast.lane.c.b16.xlu0 %v2095, %s2104
      %v2106 = vpop.permute.xlu0 %2105
      %s2108 = sor.u32 256, 48
      %2109 = vbcast.lane.c.b16.xlu0 %v2095, %s2108
      %v2110 = vpop.permute.xlu0 %2109
      %v2111 = vlaneseq
      %v2112 = vshrl.u32 %v2111, 7
      %v2113 = vsub.s32 1, %v2112
      %v2114 = vrot.slane %v2071, %v2113
      %2116 = vbcast.lane.c.b16.xlu0 %v2114, 256
      %v2117 = vpop.permute.xlu0 %2116
      %s2119 = sor.u32 256, 16
      %2120 = vbcast.lane.c.b16.xlu0 %v2114, %s2119
      %v2121 = vpop.permute.xlu0 %2120
      %s2123 = sor.u32 256, 32
      %2124 = vbcast.lane.c.b16.xlu0 %v2114, %s2123
      %v2125 = vpop.permute.xlu0 %2124
      %s2127 = sor.u32 256, 48
      %2128 = vbcast.lane.c.b16.xlu0 %v2114, %s2127
      %v2129 = vpop.permute.xlu0 %2128
      %v2130 = vlaneseq
      %v2131 = vshrl.u32 %v2130, 7
      %v2132 = vsub.s32 2, %v2131
      %v2133 = vrot.slane %v2049, %v2132
      %2135 = vbcast.lane.c.b16.xlu0 %v2133, 256
      %v2136 = vpop.permute.xlu0 %2135
      %s2138 = sor.u32 256, 16
      %2139 = vbcast.lane.c.b16.xlu0 %v2133, %s2138
      %v2140 = vpop.permute.xlu0 %2139
      %s2142 = sor.u32 256, 32
      %2143 = vbcast.lane.c.b16.xlu0 %v2133, %s2142
      %v2144 = vpop.permute.xlu0 %2143
      %s2146 = sor.u32 256, 48
      %2147 = vbcast.lane.c.b16.xlu0 %v2133, %s2146
      %v2148 = vpop.permute.xlu0 %2147
      %v2149 = vlaneseq
      %v2150 = vshrl.u32 %v2149, 7
      %v2151 = vsub.s32 2, %v2150
      %v2152 = vrot.slane %v2071, %v2151
      %2154 = vbcast.lane.c.b16.xlu0 %v2152, 256
      %v2155 = vpop.permute.xlu0 %2154
      %s2157 = sor.u32 256, 16
      %2158 = vbcast.lane.c.b16.xlu0 %v2152, %s2157
      %v2159 = vpop.permute.xlu0 %2158
      %s2161 = sor.u32 256, 32
      %2162 = vbcast.lane.c.b16.xlu0 %v2152, %s2161
      %v2163 = vpop.permute.xlu0 %2162
      %s2165 = sor.u32 256, 48
      %2166 = vbcast.lane.c.b16.xlu0 %v2152, %s2165
      %v2167 = vpop.permute.xlu0 %2166
      %v2168 = vlaneseq
      %v2169 = vshrl.u32 %v2168, 7
      %v2170 = vsub.s32 3, %v2169
      %v2171 = vrot.slane %v2049, %v2170
      %2173 = vbcast.lane.c.b16.xlu0 %v2171, 256
      %v2174 = vpop.permute.xlu0 %2173
      %s2176 = sor.u32 256, 16
      %2177 = vbcast.lane.c.b16.xlu0 %v2171, %s2176
      %v2178 = vpop.permute.xlu0 %2177
      %s2180 = sor.u32 256, 32
      %2181 = vbcast.lane.c.b16.xlu0 %v2171, %s2180
      %v2182 = vpop.permute.xlu0 %2181
      %s2184 = sor.u32 256, 48
      %2185 = vbcast.lane.c.b16.xlu0 %v2171, %s2184
      %v2186 = vpop.permute.xlu0 %2185
      %v2187 = vlaneseq
      %v2188 = vshrl.u32 %v2187, 7
      %v2189 = vsub.s32 3, %v2188
      %v2190 = vrot.slane %v2071, %v2189
      %2192 = vbcast.lane.c.b16.xlu0 %v2190, 256
      %v2193 = vpop.permute.xlu0 %2192
      %s2195 = sor.u32 256, 16
      %2196 = vbcast.lane.c.b16.xlu0 %v2190, %s2195
      %v2197 = vpop.permute.xlu0 %2196
      %s2199 = sor.u32 256, 32
      %2200 = vbcast.lane.c.b16.xlu0 %v2190, %s2199
      %v2201 = vpop.permute.xlu0 %2200
      %s2203 = sor.u32 256, 48
      %2204 = vbcast.lane.c.b16.xlu0 %v2190, %s2203
      %v2205 = vpop.permute.xlu0 %2204
      %v2206 = vlaneseq
      %v2207 = vshrl.u32 %v2206, 7
      %v2208 = vsub.s32 4, %v2207
      %v2209 = vrot.slane %v2049, %v2208
      %2211 = vbcast.lane.c.b16.xlu0 %v2209, 256
      %v2212 = vpop.permute.xlu0 %2211
      %s2214 = sor.u32 256, 16
      %2215 = vbcast.lane.c.b16.xlu0 %v2209, %s2214
      %v2216 = vpop.permute.xlu0 %2215
      %s2218 = sor.u32 256, 32
      %2219 = vbcast.lane.c.b16.xlu0 %v2209, %s2218
      %v2220 = vpop.permute.xlu0 %2219
      %s2222 = sor.u32 256, 48
      %2223 = vbcast.lane.c.b16.xlu0 %v2209, %s2222
      %v2224 = vpop.permute.xlu0 %2223
      %v2225 = vlaneseq
      %v2226 = vshrl.u32 %v2225, 7
      %v2227 = vsub.s32 4, %v2226
      %v2228 = vrot.slane %v2071, %v2227
      %2230 = vbcast.lane.c.b16.xlu0 %v2228, 256
      %v2231 = vpop.permute.xlu0 %2230
      %s2233 = sor.u32 256, 16
      %2234 = vbcast.lane.c.b16.xlu0 %v2228, %s2233
      %v2235 = vpop.permute.xlu0 %2234
      %s2237 = sor.u32 256, 32
      %2238 = vbcast.lane.c.b16.xlu0 %v2228, %s2237
      %v2239 = vpop.permute.xlu0 %2238
      %s2241 = sor.u32 256, 48
      %2242 = vbcast.lane.c.b16.xlu0 %v2228, %s2241
      %v2243 = vpop.permute.xlu0 %2242
      %v2244 = vlaneseq
      %v2245 = vshrl.u32 %v2244, 7
      %v2246 = vsub.s32 5, %v2245
      %v2247 = vrot.slane %v2049, %v2246
      %2249 = vbcast.lane.c.b16.xlu0 %v2247, 256
      %v2250 = vpop.permute.xlu0 %2249
      %s2252 = sor.u32 256, 16
      %2253 = vbcast.lane.c.b16.xlu0 %v2247, %s2252
      %v2254 = vpop.permute.xlu0 %2253
      %s2256 = sor.u32 256, 32
      %2257 = vbcast.lane.c.b16.xlu0 %v2247, %s2256
      %v2258 = vpop.permute.xlu0 %2257
      %s2260 = sor.u32 256, 48
      %2261 = vbcast.lane.c.b16.xlu0 %v2247, %s2260
      %v2262 = vpop.permute.xlu0 %2261
      %v2263 = vlaneseq
      %v2264 = vshrl.u32 %v2263, 7
      %v2265 = vsub.s32 5, %v2264
      %v2266 = vrot.slane %v2071, %v2265
      %2268 = vbcast.lane.c.b16.xlu0 %v2266, 256
      %v2269 = vpop.permute.xlu0 %2268
      %s2271 = sor.u32 256, 16
      %2272 = vbcast.lane.c.b16.xlu0 %v2266, %s2271
      %v2273 = vpop.permute.xlu0 %2272
      %s2275 = sor.u32 256, 32
      %2276 = vbcast.lane.c.b16.xlu0 %v2266, %s2275
      %v2277 = vpop.permute.xlu0 %2276
      %s2279 = sor.u32 256, 48
      %2280 = vbcast.lane.c.b16.xlu0 %v2266, %s2279
      %v2281 = vpop.permute.xlu0 %2280
      %v2282 = vlaneseq
      %v2283 = vshrl.u32 %v2282, 7
      %v2284 = vsub.s32 6, %v2283
      %v2285 = vrot.slane %v2049, %v2284
      %2287 = vbcast.lane.c.b16.xlu0 %v2285, 256
      %v2288 = vpop.permute.xlu0 %2287
      %s2290 = sor.u32 256, 16
      %2291 = vbcast.lane.c.b16.xlu0 %v2285, %s2290
      %v2292 = vpop.permute.xlu0 %2291
      %s2294 = sor.u32 256, 32
      %2295 = vbcast.lane.c.b16.xlu0 %v2285, %s2294
      %v2296 = vpop.permute.xlu0 %2295
      %s2298 = sor.u32 256, 48
      %2299 = vbcast.lane.c.b16.xlu0 %v2285, %s2298
      %v2300 = vpop.permute.xlu0 %2299
      %v2301 = vlaneseq
      %v2302 = vshrl.u32 %v2301, 7
      %v2303 = vsub.s32 6, %v2302
      %v2304 = vrot.slane %v2071, %v2303
      %2306 = vbcast.lane.c.b16.xlu0 %v2304, 256
      %v2307 = vpop.permute.xlu0 %2306
      %s2309 = sor.u32 256, 16
      %2310 = vbcast.lane.c.b16.xlu0 %v2304, %s2309
      %v2311 = vpop.permute.xlu0 %2310
      %s2313 = sor.u32 256, 32
      %2314 = vbcast.lane.c.b16.xlu0 %v2304, %s2313
      %v2315 = vpop.permute.xlu0 %2314
      %s2317 = sor.u32 256, 48
      %2318 = vbcast.lane.c.b16.xlu0 %v2304, %s2317
      %v2319 = vpop.permute.xlu0 %2318
      %v2320 = vlaneseq
      %v2321 = vshrl.u32 %v2320, 7
      %v2322 = vsub.s32 7, %v2321
      %v2323 = vrot.slane %v2049, %v2322
      %2325 = vbcast.lane.c.b16.xlu0 %v2323, 256
      %v2326 = vpop.permute.xlu0 %2325
      %s2328 = sor.u32 256, 16
      %2329 = vbcast.lane.c.b16.xlu0 %v2323, %s2328
      %v2330 = vpop.permute.xlu0 %2329
      %s2332 = sor.u32 256, 32
      %2333 = vbcast.lane.c.b16.xlu0 %v2323, %s2332
      %v2334 = vpop.permute.xlu0 %2333
      %s2336 = sor.u32 256, 48
      %2337 = vbcast.lane.c.b16.xlu0 %v2323, %s2336
      %v2338 = vpop.permute.xlu0 %2337
      %v2339 = vlaneseq
      %v2340 = vshrl.u32 %v2339, 7
      %v2341 = vsub.s32 7, %v2340
      %v2342 = vrot.slane %v2071, %v2341
      %2344 = vbcast.lane.c.b16.xlu0 %v2342, 256
      %v2345 = vpop.permute.xlu0 %2344
      %s2347 = sor.u32 256, 16
      %2348 = vbcast.lane.c.b16.xlu0 %v2342, %s2347
      %v2349 = vpop.permute.xlu0 %2348
      %s2351 = sor.u32 256, 32
      %2352 = vbcast.lane.c.b16.xlu0 %v2342, %s2351
      %v2353 = vpop.permute.xlu0 %2352
      %s2355 = sor.u32 256, 48
      %2356 = vbcast.lane.c.b16.xlu0 %v2342, %s2355
      %v2357 = vpop.permute.xlu0 %2356
      %v2358 = vmul.bf16 %v1747, %v1600
      %v2359 = vmul.bf16 %v1751, %v1601
      %v2360 = vmul.bf16 %v1755, %v1602
      %v2361 = vmul.bf16 %v1759, %v1603
      %v2362 = vmul.bf16 %v1769, %v1604
      %v2363 = vmul.bf16 %v1773, %v1605
      %v2364 = vmul.bf16 %v1777, %v1606
      %v2365 = vmul.bf16 %v1781, %v1607
      %v2366 = vmul.bf16 %v1788, %v1608
      %v2367 = vmul.bf16 %v1792, %v1609
      %v2368 = vmul.bf16 %v1796, %v1610
      %v2369 = vmul.bf16 %v1800, %v1611
      %v2370 = vmul.bf16 %v1807, %v1612
      %v2371 = vmul.bf16 %v1811, %v1613
      %v2372 = vmul.bf16 %v1815, %v1614
      %v2373 = vmul.bf16 %v1819, %v1615
      %v2374 = vmul.bf16 %v1826, %v1616
      %v2375 = vmul.bf16 %v1830, %v1617
      %v2376 = vmul.bf16 %v1834, %v1618
      %v2377 = vmul.bf16 %v1838, %v1619
      %v2378 = vmul.bf16 %v1845, %v1620
      %v2379 = vmul.bf16 %v1849, %v1621
      %v2380 = vmul.bf16 %v1853, %v1622
      %v2381 = vmul.bf16 %v1857, %v1623
      %v2382 = vmul.bf16 %v1864, %v1624
      %v2383 = vmul.bf16 %v1868, %v1625
      %v2384 = vmul.bf16 %v1872, %v1626
      %v2385 = vmul.bf16 %v1876, %v1627
      %v2386 = vmul.bf16 %v1883, %v1628
      %v2387 = vmul.bf16 %v1887, %v1629
      %v2388 = vmul.bf16 %v1891, %v1630
      %v2389 = vmul.bf16 %v1895, %v1631
      %v2390 = vmul.bf16 %v1902, %v1632
      %v2391 = vmul.bf16 %v1906, %v1633
      %v2392 = vmul.bf16 %v1910, %v1634
      %v2393 = vmul.bf16 %v1914, %v1635
      %v2394 = vmul.bf16 %v1921, %v1636
      %v2395 = vmul.bf16 %v1925, %v1637
      %v2396 = vmul.bf16 %v1929, %v1638
      %v2397 = vmul.bf16 %v1933, %v1639
      %v2398 = vmul.bf16 %v1940, %v1640
      %v2399 = vmul.bf16 %v1944, %v1641
      %v2400 = vmul.bf16 %v1948, %v1642
      %v2401 = vmul.bf16 %v1952, %v1643
      %v2402 = vmul.bf16 %v1959, %v1644
      %v2403 = vmul.bf16 %v1963, %v1645
      %v2404 = vmul.bf16 %v1967, %v1646
      %v2405 = vmul.bf16 %v1971, %v1647
      %v2406 = vmul.bf16 %v1978, %v1648
      %v2407 = vmul.bf16 %v1982, %v1649
      %v2408 = vmul.bf16 %v1986, %v1650
      %v2409 = vmul.bf16 %v1990, %v1651
      %v2410 = vmul.bf16 %v1997, %v1652
      %v2411 = vmul.bf16 %v2001, %v1653
      %v2412 = vmul.bf16 %v2005, %v1654
      %v2413 = vmul.bf16 %v2009, %v1655
      %v2414 = vmul.bf16 %v2016, %v1656
      %v2415 = vmul.bf16 %v2020, %v1657
      %v2416 = vmul.bf16 %v2024, %v1658
      %v2417 = vmul.bf16 %v2028, %v1659
      %v2418 = vmul.bf16 %v2035, %v1660
      %v2419 = vmul.bf16 %v2039, %v1661
      %v2420 = vmul.bf16 %v2043, %v1662
      %v2421 = vmul.bf16 %v2047, %v1663
      %v2422 = vmul.bf16 %v2057, %v1664
      %v2423 = vmul.bf16 %v2061, %v1665
      %v2424 = vmul.bf16 %v2065, %v1666
      %v2425 = vmul.bf16 %v2069, %v1667
      %v2426 = vmul.bf16 %v2079, %v1668
      %v2427 = vmul.bf16 %v2083, %v1669
      %v2428 = vmul.bf16 %v2087, %v1670
      %v2429 = vmul.bf16 %v2091, %v1671
      %v2430 = vmul.bf16 %v2098, %v1672
      %v2431 = vmul.bf16 %v2102, %v1673
      %v2432 = vmul.bf16 %v2106, %v1674
      %v2433 = vmul.bf16 %v2110, %v1675
      %v2434 = vmul.bf16 %v2117, %v1676
      %v2435 = vmul.bf16 %v2121, %v1677
      %v2436 = vmul.bf16 %v2125, %v1678
      %v2437 = vmul.bf16 %v2129, %v1679
      %v2438 = vmul.bf16 %v2136, %v1680
      %v2439 = vmul.bf16 %v2140, %v1681
      %v2440 = vmul.bf16 %v2144, %v1682
      %v2441 = vmul.bf16 %v2148, %v1683
      %v2442 = vmul.bf16 %v2155, %v1684
      %v2443 = vmul.bf16 %v2159, %v1685
      %v2444 = vmul.bf16 %v2163, %v1686
      %v2445 = vmul.bf16 %v2167, %v1687
      %v2446 = vmul.bf16 %v2174, %v1688
      %v2447 = vmul.bf16 %v2178, %v1689
      %v2448 = vmul.bf16 %v2182, %v1690
      %v2449 = vmul.bf16 %v2186, %v1691
      %v2450 = vmul.bf16 %v2193, %v1692
      %v2451 = vmul.bf16 %v2197, %v1693
      %v2452 = vmul.bf16 %v2201, %v1694
      %v2453 = vmul.bf16 %v2205, %v1695
      %v2454 = vmul.bf16 %v2212, %v1696
      %v2455 = vmul.bf16 %v2216, %v1697
      %v2456 = vmul.bf16 %v2220, %v1698
      %v2457 = vmul.bf16 %v2224, %v1699
      %v2458 = vmul.bf16 %v2231, %v1700
      %v2459 = vmul.bf16 %v2235, %v1701
      %v2460 = vmul.bf16 %v2239, %v1702
      %v2461 = vmul.bf16 %v2243, %v1703
      %v2462 = vmul.bf16 %v2250, %v1704
      %v2463 = vmul.bf16 %v2254, %v1705
      %v2464 = vmul.bf16 %v2258, %v1706
      %v2465 = vmul.bf16 %v2262, %v1707
      %v2466 = vmul.bf16 %v2269, %v1708
      %v2467 = vmul.bf16 %v2273, %v1709
      %v2468 = vmul.bf16 %v2277, %v1710
      %v2469 = vmul.bf16 %v2281, %v1711
      %v2470 = vmul.bf16 %v2288, %v1712
      %v2471 = vmul.bf16 %v2292, %v1713
      %v2472 = vmul.bf16 %v2296, %v1714
      %v2473 = vmul.bf16 %v2300, %v1715
      %v2474 = vmul.bf16 %v2307, %v1716
      %v2475 = vmul.bf16 %v2311, %v1717
      %v2476 = vmul.bf16 %v2315, %v1718
      %v2477 = vmul.bf16 %v2319, %v1719
      %v2478 = vmul.bf16 %v2326, %v1720
      %v2479 = vmul.bf16 %v2330, %v1721
      %v2480 = vmul.bf16 %v2334, %v1722
      %v2481 = vmul.bf16 %v2338, %v1723
      %v2482 = vmul.bf16 %v2345, %v1724
      %v2483 = vmul.bf16 %v2349, %v1725
      %v2484 = vmul.bf16 %v2353, %v1726
      %v2485 = vmul.bf16 %v2357, %v1727
      %v2486 = vunpack.c.l.bf16 %v2358
      %v2487 = vunpack.c.h.bf16 %v2358
      %v2488 = vunpack.c.l.bf16 %v2359
      %v2489 = vunpack.c.h.bf16 %v2359
      %v2490 = vunpack.c.l.bf16 %v2360
      %v2491 = vunpack.c.h.bf16 %v2360
      %v2492 = vunpack.c.l.bf16 %v2361
      %v2493 = vunpack.c.h.bf16 %v2361
      %v2494 = vunpack.c.l.bf16 %v2362
      %v2495 = vunpack.c.h.bf16 %v2362
      %v2496 = vunpack.c.l.bf16 %v2363
      %v2497 = vunpack.c.h.bf16 %v2363
      %v2498 = vunpack.c.l.bf16 %v2364
      %v2499 = vunpack.c.h.bf16 %v2364
      %v2500 = vunpack.c.l.bf16 %v2365
      %v2501 = vunpack.c.h.bf16 %v2365
      %v2502 = vunpack.c.l.bf16 %v2366
      %v2503 = vunpack.c.h.bf16 %v2366
      %v2504 = vunpack.c.l.bf16 %v2367
      %v2505 = vunpack.c.h.bf16 %v2367
      %v2506 = vunpack.c.l.bf16 %v2368
      %v2507 = vunpack.c.h.bf16 %v2368
      %v2508 = vunpack.c.l.bf16 %v2369
      %v2509 = vunpack.c.h.bf16 %v2369
      %v2510 = vunpack.c.l.bf16 %v2370
      %v2511 = vunpack.c.h.bf16 %v2370
      %v2512 = vunpack.c.l.bf16 %v2371
      %v2513 = vunpack.c.h.bf16 %v2371
      %v2514 = vunpack.c.l.bf16 %v2372
      %v2515 = vunpack.c.h.bf16 %v2372
      %v2516 = vunpack.c.l.bf16 %v2373
      %v2517 = vunpack.c.h.bf16 %v2373
      %v2518 = vunpack.c.l.bf16 %v2374
      %v2519 = vunpack.c.h.bf16 %v2374
      %v2520 = vunpack.c.l.bf16 %v2375
      %v2521 = vunpack.c.h.bf16 %v2375
      %v2522 = vunpack.c.l.bf16 %v2376
      %v2523 = vunpack.c.h.bf16 %v2376
      %v2524 = vunpack.c.l.bf16 %v2377
      %v2525 = vunpack.c.h.bf16 %v2377
      %v2526 = vunpack.c.l.bf16 %v2378
      %v2527 = vunpack.c.h.bf16 %v2378
      %v2528 = vunpack.c.l.bf16 %v2379
      %v2529 = vunpack.c.h.bf16 %v2379
      %v2530 = vunpack.c.l.bf16 %v2380
      %v2531 = vunpack.c.h.bf16 %v2380
      %v2532 = vunpack.c.l.bf16 %v2381
      %v2533 = vunpack.c.h.bf16 %v2381
      %v2534 = vunpack.c.l.bf16 %v2382
      %v2535 = vunpack.c.h.bf16 %v2382
      %v2536 = vunpack.c.l.bf16 %v2383
      %v2537 = vunpack.c.h.bf16 %v2383
      %v2538 = vunpack.c.l.bf16 %v2384
      %v2539 = vunpack.c.h.bf16 %v2384
      %v2540 = vunpack.c.l.bf16 %v2385
      %v2541 = vunpack.c.h.bf16 %v2385
      %v2542 = vunpack.c.l.bf16 %v2386
      %v2543 = vunpack.c.h.bf16 %v2386
      %v2544 = vunpack.c.l.bf16 %v2387
      %v2545 = vunpack.c.h.bf16 %v2387
      %v2546 = vunpack.c.l.bf16 %v2388
      %v2547 = vunpack.c.h.bf16 %v2388
      %v2548 = vunpack.c.l.bf16 %v2389
      %v2549 = vunpack.c.h.bf16 %v2389
      %v2550 = vunpack.c.l.bf16 %v2390
      %v2551 = vunpack.c.h.bf16 %v2390
      %v2552 = vunpack.c.l.bf16 %v2391
      %v2553 = vunpack.c.h.bf16 %v2391
      %v2554 = vunpack.c.l.bf16 %v2392
      %v2555 = vunpack.c.h.bf16 %v2392
      %v2556 = vunpack.c.l.bf16 %v2393
      %v2557 = vunpack.c.h.bf16 %v2393
      %v2558 = vunpack.c.l.bf16 %v2394
      %v2559 = vunpack.c.h.bf16 %v2394
      %v2560 = vunpack.c.l.bf16 %v2395
      %v2561 = vunpack.c.h.bf16 %v2395
      %v2562 = vunpack.c.l.bf16 %v2396
      %v2563 = vunpack.c.h.bf16 %v2396
      %v2564 = vunpack.c.l.bf16 %v2397
      %v2565 = vunpack.c.h.bf16 %v2397
      %v2566 = vunpack.c.l.bf16 %v2398
      %v2567 = vunpack.c.h.bf16 %v2398
      %v2568 = vunpack.c.l.bf16 %v2399
      %v2569 = vunpack.c.h.bf16 %v2399
      %v2570 = vunpack.c.l.bf16 %v2400
      %v2571 = vunpack.c.h.bf16 %v2400
      %v2572 = vunpack.c.l.bf16 %v2401
      %v2573 = vunpack.c.h.bf16 %v2401
      %v2574 = vunpack.c.l.bf16 %v2402
      %v2575 = vunpack.c.h.bf16 %v2402
      %v2576 = vunpack.c.l.bf16 %v2403
      %v2577 = vunpack.c.h.bf16 %v2403
      %v2578 = vunpack.c.l.bf16 %v2404
      %v2579 = vunpack.c.h.bf16 %v2404
      %v2580 = vunpack.c.l.bf16 %v2405
      %v2581 = vunpack.c.h.bf16 %v2405
      %v2582 = vunpack.c.l.bf16 %v2406
      %v2583 = vunpack.c.h.bf16 %v2406
      %v2584 = vunpack.c.l.bf16 %v2407
      %v2585 = vunpack.c.h.bf16 %v2407
      %v2586 = vunpack.c.l.bf16 %v2408
      %v2587 = vunpack.c.h.bf16 %v2408
      %v2588 = vunpack.c.l.bf16 %v2409
      %v2589 = vunpack.c.h.bf16 %v2409
      %v2590 = vunpack.c.l.bf16 %v2410
      %v2591 = vunpack.c.h.bf16 %v2410
      %v2592 = vunpack.c.l.bf16 %v2411
      %v2593 = vunpack.c.h.bf16 %v2411
      %v2594 = vunpack.c.l.bf16 %v2412
      %v2595 = vunpack.c.h.bf16 %v2412
      %v2596 = vunpack.c.l.bf16 %v2413
      %v2597 = vunpack.c.h.bf16 %v2413
      %v2598 = vunpack.c.l.bf16 %v2414
      %v2599 = vunpack.c.h.bf16 %v2414
      %v2600 = vunpack.c.l.bf16 %v2415
      %v2601 = vunpack.c.h.bf16 %v2415
      %v2602 = vunpack.c.l.bf16 %v2416
      %v2603 = vunpack.c.h.bf16 %v2416
      %v2604 = vunpack.c.l.bf16 %v2417
      %v2605 = vunpack.c.h.bf16 %v2417
      %v2606 = vunpack.c.l.bf16 %v2418
      %v2607 = vunpack.c.h.bf16 %v2418
      %v2608 = vunpack.c.l.bf16 %v2419
      %v2609 = vunpack.c.h.bf16 %v2419
      %v2610 = vunpack.c.l.bf16 %v2420
      %v2611 = vunpack.c.h.bf16 %v2420
      %v2612 = vunpack.c.l.bf16 %v2421
      %v2613 = vunpack.c.h.bf16 %v2421
      %v2614 = vunpack.c.l.bf16 %v2422
      %v2615 = vunpack.c.h.bf16 %v2422
      %v2616 = vunpack.c.l.bf16 %v2423
      %v2617 = vunpack.c.h.bf16 %v2423
      %v2618 = vunpack.c.l.bf16 %v2424
      %v2619 = vunpack.c.h.bf16 %v2424
      %v2620 = vunpack.c.l.bf16 %v2425
      %v2621 = vunpack.c.h.bf16 %v2425
      %v2622 = vunpack.c.l.bf16 %v2426
      %v2623 = vunpack.c.h.bf16 %v2426
      %v2624 = vunpack.c.l.bf16 %v2427
      %v2625 = vunpack.c.h.bf16 %v2427
      %v2626 = vunpack.c.l.bf16 %v2428
      %v2627 = vunpack.c.h.bf16 %v2428
      %v2628 = vunpack.c.l.bf16 %v2429
      %v2629 = vunpack.c.h.bf16 %v2429
      %v2630 = vunpack.c.l.bf16 %v2430
      %v2631 = vunpack.c.h.bf16 %v2430
      %v2632 = vunpack.c.l.bf16 %v2431
      %v2633 = vunpack.c.h.bf16 %v2431
      %v2634 = vunpack.c.l.bf16 %v2432
      %v2635 = vunpack.c.h.bf16 %v2432
      %v2636 = vunpack.c.l.bf16 %v2433
      %v2637 = vunpack.c.h.bf16 %v2433
      %v2638 = vunpack.c.l.bf16 %v2434
      %v2639 = vunpack.c.h.bf16 %v2434
      %v2640 = vunpack.c.l.bf16 %v2435
      %v2641 = vunpack.c.h.bf16 %v2435
      %v2642 = vunpack.c.l.bf16 %v2436
      %v2643 = vunpack.c.h.bf16 %v2436
      %v2644 = vunpack.c.l.bf16 %v2437
      %v2645 = vunpack.c.h.bf16 %v2437
      %v2646 = vunpack.c.l.bf16 %v2438
      %v2647 = vunpack.c.h.bf16 %v2438
      %v2648 = vunpack.c.l.bf16 %v2439
      %v2649 = vunpack.c.h.bf16 %v2439
      %v2650 = vunpack.c.l.bf16 %v2440
      %v2651 = vunpack.c.h.bf16 %v2440
      %v2652 = vunpack.c.l.bf16 %v2441
      %v2653 = vunpack.c.h.bf16 %v2441
      %v2654 = vunpack.c.l.bf16 %v2442
      %v2655 = vunpack.c.h.bf16 %v2442
      %v2656 = vunpack.c.l.bf16 %v2443
      %v2657 = vunpack.c.h.bf16 %v2443
      %v2658 = vunpack.c.l.bf16 %v2444
      %v2659 = vunpack.c.h.bf16 %v2444
      %v2660 = vunpack.c.l.bf16 %v2445
      %v2661 = vunpack.c.h.bf16 %v2445
      %v2662 = vunpack.c.l.bf16 %v2446
      %v2663 = vunpack.c.h.bf16 %v2446
      %v2664 = vunpack.c.l.bf16 %v2447
      %v2665 = vunpack.c.h.bf16 %v2447
      %v2666 = vunpack.c.l.bf16 %v2448
      %v2667 = vunpack.c.h.bf16 %v2448
      %v2668 = vunpack.c.l.bf16 %v2449
      %v2669 = vunpack.c.h.bf16 %v2449
      %v2670 = vunpack.c.l.bf16 %v2450
      %v2671 = vunpack.c.h.bf16 %v2450
      %v2672 = vunpack.c.l.bf16 %v2451
      %v2673 = vunpack.c.h.bf16 %v2451
      %v2674 = vunpack.c.l.bf16 %v2452
      %v2675 = vunpack.c.h.bf16 %v2452
      %v2676 = vunpack.c.l.bf16 %v2453
      %v2677 = vunpack.c.h.bf16 %v2453
      %v2678 = vunpack.c.l.bf16 %v2454
      %v2679 = vunpack.c.h.bf16 %v2454
      %v2680 = vunpack.c.l.bf16 %v2455
      %v2681 = vunpack.c.h.bf16 %v2455
      %v2682 = vunpack.c.l.bf16 %v2456
      %v2683 = vunpack.c.h.bf16 %v2456
      %v2684 = vunpack.c.l.bf16 %v2457
      %v2685 = vunpack.c.h.bf16 %v2457
      %v2686 = vunpack.c.l.bf16 %v2458
      %v2687 = vunpack.c.h.bf16 %v2458
      %v2688 = vunpack.c.l.bf16 %v2459
      %v2689 = vunpack.c.h.bf16 %v2459
      %v2690 = vunpack.c.l.bf16 %v2460
      %v2691 = vunpack.c.h.bf16 %v2460
      %v2692 = vunpack.c.l.bf16 %v2461
      %v2693 = vunpack.c.h.bf16 %v2461
      %v2694 = vunpack.c.l.bf16 %v2462
      %v2695 = vunpack.c.h.bf16 %v2462
      %v2696 = vunpack.c.l.bf16 %v2463
      %v2697 = vunpack.c.h.bf16 %v2463
      %v2698 = vunpack.c.l.bf16 %v2464
      %v2699 = vunpack.c.h.bf16 %v2464
      %v2700 = vunpack.c.l.bf16 %v2465
      %v2701 = vunpack.c.h.bf16 %v2465
      %v2702 = vunpack.c.l.bf16 %v2466
      %v2703 = vunpack.c.h.bf16 %v2466
      %v2704 = vunpack.c.l.bf16 %v2467
      %v2705 = vunpack.c.h.bf16 %v2467
      %v2706 = vunpack.c.l.bf16 %v2468
      %v2707 = vunpack.c.h.bf16 %v2468
      %v2708 = vunpack.c.l.bf16 %v2469
      %v2709 = vunpack.c.h.bf16 %v2469
      %v2710 = vunpack.c.l.bf16 %v2470
      %v2711 = vunpack.c.h.bf16 %v2470
      %v2712 = vunpack.c.l.bf16 %v2471
      %v2713 = vunpack.c.h.bf16 %v2471
      %v2714 = vunpack.c.l.bf16 %v2472
      %v2715 = vunpack.c.h.bf16 %v2472
      %v2716 = vunpack.c.l.bf16 %v2473
      %v2717 = vunpack.c.h.bf16 %v2473
      %v2718 = vunpack.c.l.bf16 %v2474
      %v2719 = vunpack.c.h.bf16 %v2474
      %v2720 = vunpack.c.l.bf16 %v2475
      %v2721 = vunpack.c.h.bf16 %v2475
      %v2722 = vunpack.c.l.bf16 %v2476
      %v2723 = vunpack.c.h.bf16 %v2476
      %v2724 = vunpack.c.l.bf16 %v2477
      %v2725 = vunpack.c.h.bf16 %v2477
      %v2726 = vunpack.c.l.bf16 %v2478
      %v2727 = vunpack.c.h.bf16 %v2478
      %v2728 = vunpack.c.l.bf16 %v2479
      %v2729 = vunpack.c.h.bf16 %v2479
      %v2730 = vunpack.c.l.bf16 %v2480
      %v2731 = vunpack.c.h.bf16 %v2480
      %v2732 = vunpack.c.l.bf16 %v2481
      %v2733 = vunpack.c.h.bf16 %v2481
      %v2734 = vunpack.c.l.bf16 %v2482
      %v2735 = vunpack.c.h.bf16 %v2482
      %v2736 = vunpack.c.l.bf16 %v2483
      %v2737 = vunpack.c.h.bf16 %v2483
      %v2738 = vunpack.c.l.bf16 %v2484
      %v2739 = vunpack.c.h.bf16 %v2484
      %v2740 = vunpack.c.l.bf16 %v2485
      %v2741 = vunpack.c.h.bf16 %v2485
      %vm2742 = vcmask 523520
      %v2743 = vsel %vm2742, %v2486, 0.0
      %v2744 = vsel %vm2742, %v2487, 0.0
      %v2745 = vadd.f32 %v2743, %v2744
      %v2746 = vsel %vm2742, %v2488, 0.0
      %v2747 = vadd.f32 %v2745, %v2746
      %v2748 = vsel %vm2742, %v2489, 0.0
      %v2749 = vadd.f32 %v2747, %v2748
      %v2750 = vsel %vm2742, %v2490, 0.0
      %v2751 = vadd.f32 %v2749, %v2750
      %v2752 = vsel %vm2742, %v2491, 0.0
      %v2753 = vadd.f32 %v2751, %v2752
      %v2754 = vsel %vm2742, %v2492, 0.0
      %v2755 = vadd.f32 %v2753, %v2754
      %v2756 = vsel %vm2742, %v2493, 0.0
      %v2757 = vadd.f32 %v2755, %v2756
      %v2758 = vrot.slane %v2757, 4
      %v2759 = vadd.f32 %v2757, %v2758
      %v2760 = vrot.slane %v2759, 2
      %v2761 = vadd.f32 %v2759, %v2760
      %v2762 = vrot.slane %v2761, 1
      %v2763 = vadd.f32 %v2761, %v2762
      %v2764 = vsel %vm2742, %v2494, 0.0
      %v2765 = vsel %vm2742, %v2495, 0.0
      %v2766 = vadd.f32 %v2764, %v2765
      %v2767 = vsel %vm2742, %v2496, 0.0
      %v2768 = vadd.f32 %v2766, %v2767
      %v2769 = vsel %vm2742, %v2497, 0.0
      %v2770 = vadd.f32 %v2768, %v2769
      %v2771 = vsel %vm2742, %v2498, 0.0
      %v2772 = vadd.f32 %v2770, %v2771
      %v2773 = vsel %vm2742, %v2499, 0.0
      %v2774 = vadd.f32 %v2772, %v2773
      %v2775 = vsel %vm2742, %v2500, 0.0
      %v2776 = vadd.f32 %v2774, %v2775
      %v2777 = vsel %vm2742, %v2501, 0.0
      %v2778 = vadd.f32 %v2776, %v2777
      %v2779 = vrot.slane %v2778, 4
      %v2780 = vadd.f32 %v2778, %v2779
      %v2781 = vrot.slane %v2780, 2
      %v2782 = vadd.f32 %v2780, %v2781
      %v2783 = vrot.slane %v2782, 1
      %v2784 = vadd.f32 %v2782, %v2783
      %v2785 = vsel %vm2742, %v2502, 0.0
      %v2786 = vsel %vm2742, %v2503, 0.0
      %v2787 = vadd.f32 %v2785, %v2786
      %v2788 = vsel %vm2742, %v2504, 0.0
      %v2789 = vadd.f32 %v2787, %v2788
      %v2790 = vsel %vm2742, %v2505, 0.0
      %v2791 = vadd.f32 %v2789, %v2790
      %v2792 = vsel %vm2742, %v2506, 0.0
      %v2793 = vadd.f32 %v2791, %v2792
      %v2794 = vsel %vm2742, %v2507, 0.0
      %v2795 = vadd.f32 %v2793, %v2794
      %v2796 = vsel %vm2742, %v2508, 0.0
      %v2797 = vadd.f32 %v2795, %v2796
      %v2798 = vsel %vm2742, %v2509, 0.0
      %v2799 = vadd.f32 %v2797, %v2798
      %v2800 = vrot.slane %v2799, 4
      %v2801 = vadd.f32 %v2799, %v2800
      %v2802 = vrot.slane %v2801, 2
      %v2803 = vadd.f32 %v2801, %v2802
      %v2804 = vrot.slane %v2803, 1
      %v2805 = vadd.f32 %v2803, %v2804
      %v2806 = vsel %vm2742, %v2510, 0.0
      %v2807 = vsel %vm2742, %v2511, 0.0
      %v2808 = vadd.f32 %v2806, %v2807
      %v2809 = vsel %vm2742, %v2512, 0.0
      %v2810 = vadd.f32 %v2808, %v2809
      %v2811 = vsel %vm2742, %v2513, 0.0
      %v2812 = vadd.f32 %v2810, %v2811
      %v2813 = vsel %vm2742, %v2514, 0.0
      %v2814 = vadd.f32 %v2812, %v2813
      %v2815 = vsel %vm2742, %v2515, 0.0
      %v2816 = vadd.f32 %v2814, %v2815
      %v2817 = vsel %vm2742, %v2516, 0.0
      %v2818 = vadd.f32 %v2816, %v2817
      %v2819 = vsel %vm2742, %v2517, 0.0
      %v2820 = vadd.f32 %v2818, %v2819
      %v2821 = vrot.slane %v2820, 4
      %v2822 = vadd.f32 %v2820, %v2821
      %v2823 = vrot.slane %v2822, 2
      %v2824 = vadd.f32 %v2822, %v2823
      %v2825 = vrot.slane %v2824, 1
      %v2826 = vadd.f32 %v2824, %v2825
      %v2827 = vsel %vm2742, %v2518, 0.0
      %v2828 = vsel %vm2742, %v2519, 0.0
      %v2829 = vadd.f32 %v2827, %v2828
      %v2830 = vsel %vm2742, %v2520, 0.0
      %v2831 = vadd.f32 %v2829, %v2830
      %v2832 = vsel %vm2742, %v2521, 0.0
      %v2833 = vadd.f32 %v2831, %v2832
      %v2834 = vsel %vm2742, %v2522, 0.0
      %v2835 = vadd.f32 %v2833, %v2834
      %v2836 = vsel %vm2742, %v2523, 0.0
      %v2837 = vadd.f32 %v2835, %v2836
      %v2838 = vsel %vm2742, %v2524, 0.0
      %v2839 = vadd.f32 %v2837, %v2838
      %v2840 = vsel %vm2742, %v2525, 0.0
      %v2841 = vadd.f32 %v2839, %v2840
      %v2842 = vrot.slane %v2841, 4
      %v2843 = vadd.f32 %v2841, %v2842
      %v2844 = vrot.slane %v2843, 2
      %v2845 = vadd.f32 %v2843, %v2844
      %v2846 = vrot.slane %v2845, 1
      %v2847 = vadd.f32 %v2845, %v2846
      %v2848 = vsel %vm2742, %v2526, 0.0
      %v2849 = vsel %vm2742, %v2527, 0.0
      %v2850 = vadd.f32 %v2848, %v2849
      %v2851 = vsel %vm2742, %v2528, 0.0
      %v2852 = vadd.f32 %v2850, %v2851
      %v2853 = vsel %vm2742, %v2529, 0.0
      %v2854 = vadd.f32 %v2852, %v2853
      %v2855 = vsel %vm2742, %v2530, 0.0
      %v2856 = vadd.f32 %v2854, %v2855
      %v2857 = vsel %vm2742, %v2531, 0.0
      %v2858 = vadd.f32 %v2856, %v2857
      %v2859 = vsel %vm2742, %v2532, 0.0
      %v2860 = vadd.f32 %v2858, %v2859
      %v2861 = vsel %vm2742, %v2533, 0.0
      %v2862 = vadd.f32 %v2860, %v2861
      %v2863 = vrot.slane %v2862, 4
      %v2864 = vadd.f32 %v2862, %v2863
      %v2865 = vrot.slane %v2864, 2
      %v2866 = vadd.f32 %v2864, %v2865
      %v2867 = vrot.slane %v2866, 1
      %v2868 = vadd.f32 %v2866, %v2867
      %v2869 = vsel %vm2742, %v2534, 0.0
      %v2870 = vsel %vm2742, %v2535, 0.0
      %v2871 = vadd.f32 %v2869, %v2870
      %v2872 = vsel %vm2742, %v2536, 0.0
      %v2873 = vadd.f32 %v2871, %v2872
      %v2874 = vsel %vm2742, %v2537, 0.0
      %v2875 = vadd.f32 %v2873, %v2874
      %v2876 = vsel %vm2742, %v2538, 0.0
      %v2877 = vadd.f32 %v2875, %v2876
      %v2878 = vsel %vm2742, %v2539, 0.0
      %v2879 = vadd.f32 %v2877, %v2878
      %v2880 = vsel %vm2742, %v2540, 0.0
      %v2881 = vadd.f32 %v2879, %v2880
      %v2882 = vsel %vm2742, %v2541, 0.0
      %v2883 = vadd.f32 %v2881, %v2882
      %v2884 = vrot.slane %v2883, 4
      %v2885 = vadd.f32 %v2883, %v2884
      %v2886 = vrot.slane %v2885, 2
      %v2887 = vadd.f32 %v2885, %v2886
      %v2888 = vrot.slane %v2887, 1
      %v2889 = vadd.f32 %v2887, %v2888
      %v2890 = vsel %vm2742, %v2542, 0.0
      %v2891 = vsel %vm2742, %v2543, 0.0
      %v2892 = vadd.f32 %v2890, %v2891
      %v2893 = vsel %vm2742, %v2544, 0.0
      %v2894 = vadd.f32 %v2892, %v2893
      %v2895 = vsel %vm2742, %v2545, 0.0
      %v2896 = vadd.f32 %v2894, %v2895
      %v2897 = vsel %vm2742, %v2546, 0.0
      %v2898 = vadd.f32 %v2896, %v2897
      %v2899 = vsel %vm2742, %v2547, 0.0
      %v2900 = vadd.f32 %v2898, %v2899
      %v2901 = vsel %vm2742, %v2548, 0.0
      %v2902 = vadd.f32 %v2900, %v2901
      %v2903 = vsel %vm2742, %v2549, 0.0
      %v2904 = vadd.f32 %v2902, %v2903
      %v2905 = vrot.slane %v2904, 4
      %v2906 = vadd.f32 %v2904, %v2905
      %v2907 = vrot.slane %v2906, 2
      %v2908 = vadd.f32 %v2906, %v2907
      %v2909 = vrot.slane %v2908, 1
      %v2910 = vadd.f32 %v2908, %v2909
      %v2911 = vsel %vm2742, %v2550, 0.0
      %v2912 = vsel %vm2742, %v2551, 0.0
      %v2913 = vadd.f32 %v2911, %v2912
      %v2914 = vsel %vm2742, %v2552, 0.0
      %v2915 = vadd.f32 %v2913, %v2914
      %v2916 = vsel %vm2742, %v2553, 0.0
      %v2917 = vadd.f32 %v2915, %v2916
      %v2918 = vsel %vm2742, %v2554, 0.0
      %v2919 = vadd.f32 %v2917, %v2918
      %v2920 = vsel %vm2742, %v2555, 0.0
      %v2921 = vadd.f32 %v2919, %v2920
      %v2922 = vsel %vm2742, %v2556, 0.0
      %v2923 = vadd.f32 %v2921, %v2922
      %v2924 = vsel %vm2742, %v2557, 0.0
      %v2925 = vadd.f32 %v2923, %v2924
      %v2926 = vrot.slane %v2925, 4
      %v2927 = vadd.f32 %v2925, %v2926
      %v2928 = vrot.slane %v2927, 2
      %v2929 = vadd.f32 %v2927, %v2928
      %v2930 = vrot.slane %v2929, 1
      %v2931 = vadd.f32 %v2929, %v2930
      %v2932 = vsel %vm2742, %v2558, 0.0
      %v2933 = vsel %vm2742, %v2559, 0.0
      %v2934 = vadd.f32 %v2932, %v2933
      %v2935 = vsel %vm2742, %v2560, 0.0
      %v2936 = vadd.f32 %v2934, %v2935
      %v2937 = vsel %vm2742, %v2561, 0.0
      %v2938 = vadd.f32 %v2936, %v2937
      %v2939 = vsel %vm2742, %v2562, 0.0
      %v2940 = vadd.f32 %v2938, %v2939
      %v2941 = vsel %vm2742, %v2563, 0.0
      %v2942 = vadd.f32 %v2940, %v2941
      %v2943 = vsel %vm2742, %v2564, 0.0
      %v2944 = vadd.f32 %v2942, %v2943
      %v2945 = vsel %vm2742, %v2565, 0.0
      %v2946 = vadd.f32 %v2944, %v2945
      %v2947 = vrot.slane %v2946, 4
      %v2948 = vadd.f32 %v2946, %v2947
      %v2949 = vrot.slane %v2948, 2
      %v2950 = vadd.f32 %v2948, %v2949
      %v2951 = vrot.slane %v2950, 1
      %v2952 = vadd.f32 %v2950, %v2951
      %v2953 = vsel %vm2742, %v2566, 0.0
      %v2954 = vsel %vm2742, %v2567, 0.0
      %v2955 = vadd.f32 %v2953, %v2954
      %v2956 = vsel %vm2742, %v2568, 0.0
      %v2957 = vadd.f32 %v2955, %v2956
      %v2958 = vsel %vm2742, %v2569, 0.0
      %v2959 = vadd.f32 %v2957, %v2958
      %v2960 = vsel %vm2742, %v2570, 0.0
      %v2961 = vadd.f32 %v2959, %v2960
      %v2962 = vsel %vm2742, %v2571, 0.0
      %v2963 = vadd.f32 %v2961, %v2962
      %v2964 = vsel %vm2742, %v2572, 0.0
      %v2965 = vadd.f32 %v2963, %v2964
      %v2966 = vsel %vm2742, %v2573, 0.0
      %v2967 = vadd.f32 %v2965, %v2966
      %v2968 = vrot.slane %v2967, 4
      %v2969 = vadd.f32 %v2967, %v2968
      %v2970 = vrot.slane %v2969, 2
      %v2971 = vadd.f32 %v2969, %v2970
      %v2972 = vrot.slane %v2971, 1
      %v2973 = vadd.f32 %v2971, %v2972
      %v2974 = vsel %vm2742, %v2574, 0.0
      %v2975 = vsel %vm2742, %v2575, 0.0
      %v2976 = vadd.f32 %v2974, %v2975
      %v2977 = vsel %vm2742, %v2576, 0.0
      %v2978 = vadd.f32 %v2976, %v2977
      %v2979 = vsel %vm2742, %v2577, 0.0
      %v2980 = vadd.f32 %v2978, %v2979
      %v2981 = vsel %vm2742, %v2578, 0.0
      %v2982 = vadd.f32 %v2980, %v2981
      %v2983 = vsel %vm2742, %v2579, 0.0
      %v2984 = vadd.f32 %v2982, %v2983
      %v2985 = vsel %vm2742, %v2580, 0.0
      %v2986 = vadd.f32 %v2984, %v2985
      %v2987 = vsel %vm2742, %v2581, 0.0
      %v2988 = vadd.f32 %v2986, %v2987
      %v2989 = vrot.slane %v2988, 4
      %v2990 = vadd.f32 %v2988, %v2989
      %v2991 = vrot.slane %v2990, 2
      %v2992 = vadd.f32 %v2990, %v2991
      %v2993 = vrot.slane %v2992, 1
      %v2994 = vadd.f32 %v2992, %v2993
      %v2995 = vsel %vm2742, %v2582, 0.0
      %v2996 = vsel %vm2742, %v2583, 0.0
      %v2997 = vadd.f32 %v2995, %v2996
      %v2998 = vsel %vm2742, %v2584, 0.0
      %v2999 = vadd.f32 %v2997, %v2998
      %v3000 = vsel %vm2742, %v2585, 0.0
      %v3001 = vadd.f32 %v2999, %v3000
      %v3002 = vsel %vm2742, %v2586, 0.0
      %v3003 = vadd.f32 %v3001, %v3002
      %v3004 = vsel %vm2742, %v2587, 0.0
      %v3005 = vadd.f32 %v3003, %v3004
      %v3006 = vsel %vm2742, %v2588, 0.0
      %v3007 = vadd.f32 %v3005, %v3006
      %v3008 = vsel %vm2742, %v2589, 0.0
      %v3009 = vadd.f32 %v3007, %v3008
      %v3010 = vrot.slane %v3009, 4
      %v3011 = vadd.f32 %v3009, %v3010
      %v3012 = vrot.slane %v3011, 2
      %v3013 = vadd.f32 %v3011, %v3012
      %v3014 = vrot.slane %v3013, 1
      %v3015 = vadd.f32 %v3013, %v3014
      %v3016 = vsel %vm2742, %v2590, 0.0
      %v3017 = vsel %vm2742, %v2591, 0.0
      %v3018 = vadd.f32 %v3016, %v3017
      %v3019 = vsel %vm2742, %v2592, 0.0
      %v3020 = vadd.f32 %v3018, %v3019
      %v3021 = vsel %vm2742, %v2593, 0.0
      %v3022 = vadd.f32 %v3020, %v3021
      %v3023 = vsel %vm2742, %v2594, 0.0
      %v3024 = vadd.f32 %v3022, %v3023
      %v3025 = vsel %vm2742, %v2595, 0.0
      %v3026 = vadd.f32 %v3024, %v3025
      %v3027 = vsel %vm2742, %v2596, 0.0
      %v3028 = vadd.f32 %v3026, %v3027
      %v3029 = vsel %vm2742, %v2597, 0.0
      %v3030 = vadd.f32 %v3028, %v3029
      %v3031 = vrot.slane %v3030, 4
      %v3032 = vadd.f32 %v3030, %v3031
      %v3033 = vrot.slane %v3032, 2
      %v3034 = vadd.f32 %v3032, %v3033
      %v3035 = vrot.slane %v3034, 1
      %v3036 = vadd.f32 %v3034, %v3035
      %v3037 = vsel %vm2742, %v2598, 0.0
      %v3038 = vsel %vm2742, %v2599, 0.0
      %v3039 = vadd.f32 %v3037, %v3038
      %v3040 = vsel %vm2742, %v2600, 0.0
      %v3041 = vadd.f32 %v3039, %v3040
      %v3042 = vsel %vm2742, %v2601, 0.0
      %v3043 = vadd.f32 %v3041, %v3042
      %v3044 = vsel %vm2742, %v2602, 0.0
      %v3045 = vadd.f32 %v3043, %v3044
      %v3046 = vsel %vm2742, %v2603, 0.0
      %v3047 = vadd.f32 %v3045, %v3046
      %v3048 = vsel %vm2742, %v2604, 0.0
      %v3049 = vadd.f32 %v3047, %v3048
      %v3050 = vsel %vm2742, %v2605, 0.0
      %v3051 = vadd.f32 %v3049, %v3050
      %v3052 = vrot.slane %v3051, 4
      %v3053 = vadd.f32 %v3051, %v3052
      %v3054 = vrot.slane %v3053, 2
      %v3055 = vadd.f32 %v3053, %v3054
      %v3056 = vrot.slane %v3055, 1
      %v3057 = vadd.f32 %v3055, %v3056
      %v3058 = vsel %vm2742, %v2606, 0.0
      %v3059 = vsel %vm2742, %v2607, 0.0
      %v3060 = vadd.f32 %v3058, %v3059
      %v3061 = vsel %vm2742, %v2608, 0.0
      %v3062 = vadd.f32 %v3060, %v3061
      %v3063 = vsel %vm2742, %v2609, 0.0
      %v3064 = vadd.f32 %v3062, %v3063
      %v3065 = vsel %vm2742, %v2610, 0.0
      %v3066 = vadd.f32 %v3064, %v3065
      %v3067 = vsel %vm2742, %v2611, 0.0
      %v3068 = vadd.f32 %v3066, %v3067
      %v3069 = vsel %vm2742, %v2612, 0.0
      %v3070 = vadd.f32 %v3068, %v3069
      %v3071 = vsel %vm2742, %v2613, 0.0
      %v3072 = vadd.f32 %v3070, %v3071
      %v3073 = vrot.slane %v3072, 4
      %v3074 = vadd.f32 %v3072, %v3073
      %v3075 = vrot.slane %v3074, 2
      %v3076 = vadd.f32 %v3074, %v3075
      %v3077 = vrot.slane %v3076, 1
      %v3078 = vadd.f32 %v3076, %v3077
      %v3079 = vsel %vm2742, %v2614, 0.0
      %v3080 = vsel %vm2742, %v2615, 0.0
      %v3081 = vadd.f32 %v3079, %v3080
      %v3082 = vsel %vm2742, %v2616, 0.0
      %v3083 = vadd.f32 %v3081, %v3082
      %v3084 = vsel %vm2742, %v2617, 0.0
      %v3085 = vadd.f32 %v3083, %v3084
      %v3086 = vsel %vm2742, %v2618, 0.0
      %v3087 = vadd.f32 %v3085, %v3086
      %v3088 = vsel %vm2742, %v2619, 0.0
      %v3089 = vadd.f32 %v3087, %v3088
      %v3090 = vsel %vm2742, %v2620, 0.0
      %v3091 = vadd.f32 %v3089, %v3090
      %v3092 = vsel %vm2742, %v2621, 0.0
      %v3093 = vadd.f32 %v3091, %v3092
      %v3094 = vrot.slane %v3093, 4
      %v3095 = vadd.f32 %v3093, %v3094
      %v3096 = vrot.slane %v3095, 2
      %v3097 = vadd.f32 %v3095, %v3096
      %v3098 = vrot.slane %v3097, 1
      %v3099 = vadd.f32 %v3097, %v3098
      %v3100 = vsel %vm2742, %v2622, 0.0
      %v3101 = vsel %vm2742, %v2623, 0.0
      %v3102 = vadd.f32 %v3100, %v3101
      %v3103 = vsel %vm2742, %v2624, 0.0
      %v3104 = vadd.f32 %v3102, %v3103
      %v3105 = vsel %vm2742, %v2625, 0.0
      %v3106 = vadd.f32 %v3104, %v3105
      %v3107 = vsel %vm2742, %v2626, 0.0
      %v3108 = vadd.f32 %v3106, %v3107
      %v3109 = vsel %vm2742, %v2627, 0.0
      %v3110 = vadd.f32 %v3108, %v3109
      %v3111 = vsel %vm2742, %v2628, 0.0
      %v3112 = vadd.f32 %v3110, %v3111
      %v3113 = vsel %vm2742, %v2629, 0.0
      %v3114 = vadd.f32 %v3112, %v3113
      %v3115 = vrot.slane %v3114, 4
      %v3116 = vadd.f32 %v3114, %v3115
      %v3117 = vrot.slane %v3116, 2
      %v3118 = vadd.f32 %v3116, %v3117
      %v3119 = vrot.slane %v3118, 1
      %v3120 = vadd.f32 %v3118, %v3119
      %v3121 = vsel %vm2742, %v2630, 0.0
      %v3122 = vsel %vm2742, %v2631, 0.0
      %v3123 = vadd.f32 %v3121, %v3122
      %v3124 = vsel %vm2742, %v2632, 0.0
      %v3125 = vadd.f32 %v3123, %v3124
      %v3126 = vsel %vm2742, %v2633, 0.0
      %v3127 = vadd.f32 %v3125, %v3126
      %v3128 = vsel %vm2742, %v2634, 0.0
      %v3129 = vadd.f32 %v3127, %v3128
      %v3130 = vsel %vm2742, %v2635, 0.0
      %v3131 = vadd.f32 %v3129, %v3130
      %v3132 = vsel %vm2742, %v2636, 0.0
      %v3133 = vadd.f32 %v3131, %v3132
      %v3134 = vsel %vm2742, %v2637, 0.0
      %v3135 = vadd.f32 %v3133, %v3134
      %v3136 = vrot.slane %v3135, 4
      %v3137 = vadd.f32 %v3135, %v3136
      %v3138 = vrot.slane %v3137, 2
      %v3139 = vadd.f32 %v3137, %v3138
      %v3140 = vrot.slane %v3139, 1
      %v3141 = vadd.f32 %v3139, %v3140
      %v3142 = vsel %vm2742, %v2638, 0.0
      %v3143 = vsel %vm2742, %v2639, 0.0
      %v3144 = vadd.f32 %v3142, %v3143
      %v3145 = vsel %vm2742, %v2640, 0.0
      %v3146 = vadd.f32 %v3144, %v3145
      %v3147 = vsel %vm2742, %v2641, 0.0
      %v3148 = vadd.f32 %v3146, %v3147
      %v3149 = vsel %vm2742, %v2642, 0.0
      %v3150 = vadd.f32 %v3148, %v3149
      %v3151 = vsel %vm2742, %v2643, 0.0
      %v3152 = vadd.f32 %v3150, %v3151
      %v3153 = vsel %vm2742, %v2644, 0.0
      %v3154 = vadd.f32 %v3152, %v3153
      %v3155 = vsel %vm2742, %v2645, 0.0
      %v3156 = vadd.f32 %v3154, %v3155
      %v3157 = vrot.slane %v3156, 4
      %v3158 = vadd.f32 %v3156, %v3157
      %v3159 = vrot.slane %v3158, 2
      %v3160 = vadd.f32 %v3158, %v3159
      %v3161 = vrot.slane %v3160, 1
      %v3162 = vadd.f32 %v3160, %v3161
      %v3163 = vsel %vm2742, %v2646, 0.0
      %v3164 = vsel %vm2742, %v2647, 0.0
      %v3165 = vadd.f32 %v3163, %v3164
      %v3166 = vsel %vm2742, %v2648, 0.0
      %v3167 = vadd.f32 %v3165, %v3166
      %v3168 = vsel %vm2742, %v2649, 0.0
      %v3169 = vadd.f32 %v3167, %v3168
      %v3170 = vsel %vm2742, %v2650, 0.0
      %v3171 = vadd.f32 %v3169, %v3170
      %v3172 = vsel %vm2742, %v2651, 0.0
      %v3173 = vadd.f32 %v3171, %v3172
      %v3174 = vsel %vm2742, %v2652, 0.0
      %v3175 = vadd.f32 %v3173, %v3174
      %v3176 = vsel %vm2742, %v2653, 0.0
      %v3177 = vadd.f32 %v3175, %v3176
      %v3178 = vrot.slane %v3177, 4
      %v3179 = vadd.f32 %v3177, %v3178
      %v3180 = vrot.slane %v3179, 2
      %v3181 = vadd.f32 %v3179, %v3180
      %v3182 = vrot.slane %v3181, 1
      %v3183 = vadd.f32 %v3181, %v3182
      %v3184 = vsel %vm2742, %v2654, 0.0
      %v3185 = vsel %vm2742, %v2655, 0.0
      %v3186 = vadd.f32 %v3184, %v3185
      %v3187 = vsel %vm2742, %v2656, 0.0
      %v3188 = vadd.f32 %v3186, %v3187
      %v3189 = vsel %vm2742, %v2657, 0.0
      %v3190 = vadd.f32 %v3188, %v3189
      %v3191 = vsel %vm2742, %v2658, 0.0
      %v3192 = vadd.f32 %v3190, %v3191
      %v3193 = vsel %vm2742, %v2659, 0.0
      %v3194 = vadd.f32 %v3192, %v3193
      %v3195 = vsel %vm2742, %v2660, 0.0
      %v3196 = vadd.f32 %v3194, %v3195
      %v3197 = vsel %vm2742, %v2661, 0.0
      %v3198 = vadd.f32 %v3196, %v3197
      %v3199 = vrot.slane %v3198, 4
      %v3200 = vadd.f32 %v3198, %v3199
      %v3201 = vrot.slane %v3200, 2
      %v3202 = vadd.f32 %v3200, %v3201
      %v3203 = vrot.slane %v3202, 1
      %v3204 = vadd.f32 %v3202, %v3203
      %v3205 = vsel %vm2742, %v2662, 0.0
      %v3206 = vsel %vm2742, %v2663, 0.0
      %v3207 = vadd.f32 %v3205, %v3206
      %v3208 = vsel %vm2742, %v2664, 0.0
      %v3209 = vadd.f32 %v3207, %v3208
      %v3210 = vsel %vm2742, %v2665, 0.0
      %v3211 = vadd.f32 %v3209, %v3210
      %v3212 = vsel %vm2742, %v2666, 0.0
      %v3213 = vadd.f32 %v3211, %v3212
      %v3214 = vsel %vm2742, %v2667, 0.0
      %v3215 = vadd.f32 %v3213, %v3214
      %v3216 = vsel %vm2742, %v2668, 0.0
      %v3217 = vadd.f32 %v3215, %v3216
      %v3218 = vsel %vm2742, %v2669, 0.0
      %v3219 = vadd.f32 %v3217, %v3218
      %v3220 = vrot.slane %v3219, 4
      %v3221 = vadd.f32 %v3219, %v3220
      %v3222 = vrot.slane %v3221, 2
      %v3223 = vadd.f32 %v3221, %v3222
      %v3224 = vrot.slane %v3223, 1
      %v3225 = vadd.f32 %v3223, %v3224
      %v3226 = vsel %vm2742, %v2670, 0.0
      %v3227 = vsel %vm2742, %v2671, 0.0
      %v3228 = vadd.f32 %v3226, %v3227
      %v3229 = vsel %vm2742, %v2672, 0.0
      %v3230 = vadd.f32 %v3228, %v3229
      %v3231 = vsel %vm2742, %v2673, 0.0
      %v3232 = vadd.f32 %v3230, %v3231
      %v3233 = vsel %vm2742, %v2674, 0.0
      %v3234 = vadd.f32 %v3232, %v3233
      %v3235 = vsel %vm2742, %v2675, 0.0
      %v3236 = vadd.f32 %v3234, %v3235
      %v3237 = vsel %vm2742, %v2676, 0.0
      %v3238 = vadd.f32 %v3236, %v3237
      %v3239 = vsel %vm2742, %v2677, 0.0
      %v3240 = vadd.f32 %v3238, %v3239
      %v3241 = vrot.slane %v3240, 4
      %v3242 = vadd.f32 %v3240, %v3241
      %v3243 = vrot.slane %v3242, 2
      %v3244 = vadd.f32 %v3242, %v3243
      %v3245 = vrot.slane %v3244, 1
      %v3246 = vadd.f32 %v3244, %v3245
      %v3247 = vsel %vm2742, %v2678, 0.0
      %v3248 = vsel %vm2742, %v2679, 0.0
      %v3249 = vadd.f32 %v3247, %v3248
      %v3250 = vsel %vm2742, %v2680, 0.0
      %v3251 = vadd.f32 %v3249, %v3250
      %v3252 = vsel %vm2742, %v2681, 0.0
      %v3253 = vadd.f32 %v3251, %v3252
      %v3254 = vsel %vm2742, %v2682, 0.0
      %v3255 = vadd.f32 %v3253, %v3254
      %v3256 = vsel %vm2742, %v2683, 0.0
      %v3257 = vadd.f32 %v3255, %v3256
      %v3258 = vsel %vm2742, %v2684, 0.0
      %v3259 = vadd.f32 %v3257, %v3258
      %v3260 = vsel %vm2742, %v2685, 0.0
      %v3261 = vadd.f32 %v3259, %v3260
      %v3262 = vrot.slane %v3261, 4
      %v3263 = vadd.f32 %v3261, %v3262
      %v3264 = vrot.slane %v3263, 2
      %v3265 = vadd.f32 %v3263, %v3264
      %v3266 = vrot.slane %v3265, 1
      %v3267 = vadd.f32 %v3265, %v3266
      %v3268 = vsel %vm2742, %v2686, 0.0
      %v3269 = vsel %vm2742, %v2687, 0.0
      %v3270 = vadd.f32 %v3268, %v3269
      %v3271 = vsel %vm2742, %v2688, 0.0
      %v3272 = vadd.f32 %v3270, %v3271
      %v3273 = vsel %vm2742, %v2689, 0.0
      %v3274 = vadd.f32 %v3272, %v3273
      %v3275 = vsel %vm2742, %v2690, 0.0
      %v3276 = vadd.f32 %v3274, %v3275
      %v3277 = vsel %vm2742, %v2691, 0.0
      %v3278 = vadd.f32 %v3276, %v3277
      %v3279 = vsel %vm2742, %v2692, 0.0
      %v3280 = vadd.f32 %v3278, %v3279
      %v3281 = vsel %vm2742, %v2693, 0.0
      %v3282 = vadd.f32 %v3280, %v3281
      %v3283 = vrot.slane %v3282, 4
      %v3284 = vadd.f32 %v3282, %v3283
      %v3285 = vrot.slane %v3284, 2
      %v3286 = vadd.f32 %v3284, %v3285
      %v3287 = vrot.slane %v3286, 1
      %v3288 = vadd.f32 %v3286, %v3287
      %v3289 = vsel %vm2742, %v2694, 0.0
      %v3290 = vsel %vm2742, %v2695, 0.0
      %v3291 = vadd.f32 %v3289, %v3290
      %v3292 = vsel %vm2742, %v2696, 0.0
      %v3293 = vadd.f32 %v3291, %v3292
      %v3294 = vsel %vm2742, %v2697, 0.0
      %v3295 = vadd.f32 %v3293, %v3294
      %v3296 = vsel %vm2742, %v2698, 0.0
      %v3297 = vadd.f32 %v3295, %v3296
      %v3298 = vsel %vm2742, %v2699, 0.0
      %v3299 = vadd.f32 %v3297, %v3298
      %v3300 = vsel %vm2742, %v2700, 0.0
      %v3301 = vadd.f32 %v3299, %v3300
      %v3302 = vsel %vm2742, %v2701, 0.0
      %v3303 = vadd.f32 %v3301, %v3302
      %v3304 = vrot.slane %v3303, 4
      %v3305 = vadd.f32 %v3303, %v3304
      %v3306 = vrot.slane %v3305, 2
      %v3307 = vadd.f32 %v3305, %v3306
      %v3308 = vrot.slane %v3307, 1
      %v3309 = vadd.f32 %v3307, %v3308
      %v3310 = vsel %vm2742, %v2702, 0.0
      %v3311 = vsel %vm2742, %v2703, 0.0
      %v3312 = vadd.f32 %v3310, %v3311
      %v3313 = vsel %vm2742, %v2704, 0.0
      %v3314 = vadd.f32 %v3312, %v3313
      %v3315 = vsel %vm2742, %v2705, 0.0
      %v3316 = vadd.f32 %v3314, %v3315
      %v3317 = vsel %vm2742, %v2706, 0.0
      %v3318 = vadd.f32 %v3316, %v3317
      %v3319 = vsel %vm2742, %v2707, 0.0
      %v3320 = vadd.f32 %v3318, %v3319
      %v3321 = vsel %vm2742, %v2708, 0.0
      %v3322 = vadd.f32 %v3320, %v3321
      %v3323 = vsel %vm2742, %v2709, 0.0
      %v3324 = vadd.f32 %v3322, %v3323
      %v3325 = vrot.slane %v3324, 4
      %v3326 = vadd.f32 %v3324, %v3325
      %v3327 = vrot.slane %v3326, 2
      %v3328 = vadd.f32 %v3326, %v3327
      %v3329 = vrot.slane %v3328, 1
      %v3330 = vadd.f32 %v3328, %v3329
      %v3331 = vsel %vm2742, %v2710, 0.0
      %v3332 = vsel %vm2742, %v2711, 0.0
      %v3333 = vadd.f32 %v3331, %v3332
      %v3334 = vsel %vm2742, %v2712, 0.0
      %v3335 = vadd.f32 %v3333, %v3334
      %v3336 = vsel %vm2742, %v2713, 0.0
      %v3337 = vadd.f32 %v3335, %v3336
      %v3338 = vsel %vm2742, %v2714, 0.0
      %v3339 = vadd.f32 %v3337, %v3338
      %v3340 = vsel %vm2742, %v2715, 0.0
      %v3341 = vadd.f32 %v3339, %v3340
      %v3342 = vsel %vm2742, %v2716, 0.0
      %v3343 = vadd.f32 %v3341, %v3342
      %v3344 = vsel %vm2742, %v2717, 0.0
      %v3345 = vadd.f32 %v3343, %v3344
      %v3346 = vrot.slane %v3345, 4
      %v3347 = vadd.f32 %v3345, %v3346
      %v3348 = vrot.slane %v3347, 2
      %v3349 = vadd.f32 %v3347, %v3348
      %v3350 = vrot.slane %v3349, 1
      %v3351 = vadd.f32 %v3349, %v3350
      %v3352 = vsel %vm2742, %v2718, 0.0
      %v3353 = vsel %vm2742, %v2719, 0.0
      %v3354 = vadd.f32 %v3352, %v3353
      %v3355 = vsel %vm2742, %v2720, 0.0
      %v3356 = vadd.f32 %v3354, %v3355
      %v3357 = vsel %vm2742, %v2721, 0.0
      %v3358 = vadd.f32 %v3356, %v3357
      %v3359 = vsel %vm2742, %v2722, 0.0
      %v3360 = vadd.f32 %v3358, %v3359
      %v3361 = vsel %vm2742, %v2723, 0.0
      %v3362 = vadd.f32 %v3360, %v3361
      %v3363 = vsel %vm2742, %v2724, 0.0
      %v3364 = vadd.f32 %v3362, %v3363
      %v3365 = vsel %vm2742, %v2725, 0.0
      %v3366 = vadd.f32 %v3364, %v3365
      %v3367 = vrot.slane %v3366, 4
      %v3368 = vadd.f32 %v3366, %v3367
      %v3369 = vrot.slane %v3368, 2
      %v3370 = vadd.f32 %v3368, %v3369
      %v3371 = vrot.slane %v3370, 1
      %v3372 = vadd.f32 %v3370, %v3371
      %v3373 = vsel %vm2742, %v2726, 0.0
      %v3374 = vsel %vm2742, %v2727, 0.0
      %v3375 = vadd.f32 %v3373, %v3374
      %v3376 = vsel %vm2742, %v2728, 0.0
      %v3377 = vadd.f32 %v3375, %v3376
      %v3378 = vsel %vm2742, %v2729, 0.0
      %v3379 = vadd.f32 %v3377, %v3378
      %v3380 = vsel %vm2742, %v2730, 0.0
      %v3381 = vadd.f32 %v3379, %v3380
      %v3382 = vsel %vm2742, %v2731, 0.0
      %v3383 = vadd.f32 %v3381, %v3382
      %v3384 = vsel %vm2742, %v2732, 0.0
      %v3385 = vadd.f32 %v3383, %v3384
      %v3386 = vsel %vm2742, %v2733, 0.0
      %v3387 = vadd.f32 %v3385, %v3386
      %v3388 = vrot.slane %v3387, 4
      %v3389 = vadd.f32 %v3387, %v3388
      %v3390 = vrot.slane %v3389, 2
      %v3391 = vadd.f32 %v3389, %v3390
      %v3392 = vrot.slane %v3391, 1
      %v3393 = vadd.f32 %v3391, %v3392
      %v3394 = vsel %vm2742, %v2734, 0.0
      %v3395 = vsel %vm2742, %v2735, 0.0
      %v3396 = vadd.f32 %v3394, %v3395
      %v3397 = vsel %vm2742, %v2736, 0.0
      %v3398 = vadd.f32 %v3396, %v3397
      %v3399 = vsel %vm2742, %v2737, 0.0
      %v3400 = vadd.f32 %v3398, %v3399
      %v3401 = vsel %vm2742, %v2738, 0.0
      %v3402 = vadd.f32 %v3400, %v3401
      %v3403 = vsel %vm2742, %v2739, 0.0
      %v3404 = vadd.f32 %v3402, %v3403
      %v3405 = vsel %vm2742, %v2740, 0.0
      %v3406 = vadd.f32 %v3404, %v3405
      %v3407 = vsel %vm2742, %v2741, 0.0
      %v3408 = vadd.f32 %v3406, %v3407
      %v3409 = vrot.slane %v3408, 4
      %v3410 = vadd.f32 %v3408, %v3409
      %v3411 = vrot.slane %v3410, 2
      %v3412 = vadd.f32 %v3410, %v3411
      %v3413 = vrot.slane %v3412, 1
      %v3414 = vadd.f32 %v3412, %v3413
      %v3415 = vadd.f32 %v2763, 0.0
      %v3416 = vadd.f32 %v2784, 0.0
      %v3417 = vadd.f32 %v2805, 0.0
      %v3418 = vadd.f32 %v2826, 0.0
      %v3419 = vadd.f32 %v2847, 0.0
      %v3420 = vadd.f32 %v2868, 0.0
      %v3421 = vadd.f32 %v2889, 0.0
      %v3422 = vadd.f32 %v2910, 0.0
      %v3423 = vadd.f32 %v2931, 0.0
      %v3424 = vadd.f32 %v2952, 0.0
      %v3425 = vadd.f32 %v2973, 0.0
      %v3426 = vadd.f32 %v2994, 0.0
      %v3427 = vadd.f32 %v3015, 0.0
      %v3428 = vadd.f32 %v3036, 0.0
      %v3429 = vadd.f32 %v3057, 0.0
      %v3430 = vadd.f32 %v3078, 0.0
      %v3431 = vadd.f32 %v3099, 0.0
      %v3432 = vadd.f32 %v3120, 0.0
      %v3433 = vadd.f32 %v3141, 0.0
      %v3434 = vadd.f32 %v3162, 0.0
      %v3435 = vadd.f32 %v3183, 0.0
      %v3436 = vadd.f32 %v3204, 0.0
      %v3437 = vadd.f32 %v3225, 0.0
      %v3438 = vadd.f32 %v3246, 0.0
      %v3439 = vadd.f32 %v3267, 0.0
      %v3440 = vadd.f32 %v3288, 0.0
      %v3441 = vadd.f32 %v3309, 0.0
      %v3442 = vadd.f32 %v3330, 0.0
      %v3443 = vadd.f32 %v3351, 0.0
      %v3444 = vadd.f32 %v3372, 0.0
      %v3445 = vadd.f32 %v3393, 0.0
      %v3446 = vadd.f32 %v3414, 0.0
      %s3447 = smul.u32 %s25, 64
      %s3448 = sadd.s32 %s363, %s3447
      %s3449 = scalar_lea.vmem %s6, %s3448
      %v3450 = vld [vmem:[%s3449] sm:$0xff]
      %v3451 = vld [vmem:[%s3449 + $0x8] sm:$0xff]
      %v3452 = vld [vmem:[%s3449 + $0x10] sm:$0xff]
      %v3453 = vld [vmem:[%s3449 + $0x18] sm:$0xff]
      %v3454 = vld [vmem:[#allocation2] sm:$0xff]
      %v3455 = vld [vmem:[#allocation2 + $0x8] sm:$0xff]
      %v3456 = vld [vmem:[#allocation2 + $0x10] sm:$0xff]
      %v3457 = vld [vmem:[#allocation2 + $0x18] sm:$0xff]
      %3459 = vset.pattern.permute.xlu0 0
      %3460 = vperm.xlu0 %3459, %v3450
      %v3461 = vpop.permute.xlu0 %3460
      %3463 = vset.pattern.permute.xlu0 0
      %3464 = vperm.xlu0 %3463, %v3451
      %v3465 = vpop.permute.xlu0 %3464
      %3467 = vset.pattern.permute.xlu0 0
      %3468 = vperm.xlu0 %3467, %v3452
      %v3469 = vpop.permute.xlu0 %3468
      %3471 = vset.pattern.permute.xlu0 0
      %3472 = vperm.xlu0 %3471, %v3453
      %v3473 = vpop.permute.xlu0 %3472
      %v3474 = vrot.slane %v3461, 1
      %v3475 = vrot.slane %v3461, 2
      %v3476 = vrot.slane %v3461, 3
      %v3477 = vrot.slane %v3461, 4
      %v3478 = vrot.slane %v3461, 5
      %v3479 = vrot.slane %v3461, 6
      %v3480 = vrot.slane %v3461, 7
      %v3481 = vrot.slane %v3465, 1
      %v3482 = vrot.slane %v3465, 2
      %v3483 = vrot.slane %v3465, 3
      %v3484 = vrot.slane %v3465, 4
      %v3485 = vrot.slane %v3465, 5
      %v3486 = vrot.slane %v3465, 6
      %v3487 = vrot.slane %v3465, 7
      %v3488 = vrot.slane %v3469, 1
      %v3489 = vrot.slane %v3469, 2
      %v3490 = vrot.slane %v3469, 3
      %v3491 = vrot.slane %v3469, 4
      %v3492 = vrot.slane %v3469, 5
      %v3493 = vrot.slane %v3469, 6
      %v3494 = vrot.slane %v3469, 7
      %v3495 = vrot.slane %v3473, 1
      %v3496 = vrot.slane %v3473, 2
      %v3497 = vrot.slane %v3473, 3
      %v3498 = vrot.slane %v3473, 4
      %v3499 = vrot.slane %v3473, 5
      %v3500 = vrot.slane %v3473, 6
      %v3501 = vrot.slane %v3473, 7
      %v3534 = vmul.f32 %v3415, %v3461
      %v3535 = vmul.f32 %v3416, %v3474
      %v3536 = vmul.f32 %v3417, %v3475
      %v3537 = vmul.f32 %v3418, %v3476
      %v3538 = vmul.f32 %v3419, %v3477
      %v3539 = vmul.f32 %v3420, %v3478
      %v3540 = vmul.f32 %v3421, %v3479
      %v3541 = vmul.f32 %v3422, %v3480
      %v3542 = vmul.f32 %v3423, %v3465
      %v3543 = vmul.f32 %v3424, %v3481
      %v3544 = vmul.f32 %v3425, %v3482
      %v3545 = vmul.f32 %v3426, %v3483
      %v3546 = vmul.f32 %v3427, %v3484
      %v3547 = vmul.f32 %v3428, %v3485
      %v3548 = vmul.f32 %v3429, %v3486
      %v3549 = vmul.f32 %v3430, %v3487
      %v3550 = vmul.f32 %v3431, %v3469
      %v3551 = vmul.f32 %v3432, %v3488
      %v3552 = vmul.f32 %v3433, %v3489
      %v3553 = vmul.f32 %v3434, %v3490
      %v3554 = vmul.f32 %v3435, %v3491
      %v3555 = vmul.f32 %v3436, %v3492
      %v3556 = vmul.f32 %v3437, %v3493
      %v3557 = vmul.f32 %v3438, %v3494
      %v3558 = vmul.f32 %v3439, %v3473
      %v3559 = vmul.f32 %v3440, %v3495
      %v3560 = vmul.f32 %v3441, %v3496
      %v3561 = vmul.f32 %v3442, %v3497
      %v3562 = vmul.f32 %v3443, %v3498
      %v3563 = vmul.f32 %v3444, %v3499
      %v3564 = vmul.f32 %v3445, %v3500
      %v3565 = vmul.f32 %v3446, %v3501
      %v3598 = vrot.slane %v3535, 7
      %vm3599 = vcmask 1041409
      %v3600 = vsel %vm3599, %v3598, %v3534
      %v3601 = vrot.slane %v3536, 6
      %vm3602 = vcmask 1042434
      %v3603 = vsel %vm3602, %v3601, %v3600
      %v3604 = vrot.slane %v3537, 5
      %vm3605 = vcmask 1043459
      %v3606 = vsel %vm3605, %v3604, %v3603
      %v3607 = vrot.slane %v3538, 4
      %vm3608 = vcmask 1044484
      %v3609 = vsel %vm3608, %v3607, %v3606
      %v3610 = vrot.slane %v3539, 3
      %vm3611 = vcmask 1045509
      %v3612 = vsel %vm3611, %v3610, %v3609
      %v3613 = vrot.slane %v3540, 2
      %vm3614 = vcmask 1046534
      %v3615 = vsel %vm3614, %v3613, %v3612
      %v3616 = vrot.slane %v3541, 1
      %vm3617 = vcmask 1047559
      %v3618 = vsel %vm3617, %v3616, %v3615
      %v3619 = vrot.slane %v3543, 7
      %v3620 = vsel %vm3599, %v3619, %v3542
      %v3621 = vrot.slane %v3544, 6
      %v3622 = vsel %vm3602, %v3621, %v3620
      %v3623 = vrot.slane %v3545, 5
      %v3624 = vsel %vm3605, %v3623, %v3622
      %v3625 = vrot.slane %v3546, 4
      %v3626 = vsel %vm3608, %v3625, %v3624
      %v3627 = vrot.slane %v3547, 3
      %v3628 = vsel %vm3611, %v3627, %v3626
      %v3629 = vrot.slane %v3548, 2
      %v3630 = vsel %vm3614, %v3629, %v3628
      %v3631 = vrot.slane %v3549, 1
      %v3632 = vsel %vm3617, %v3631, %v3630
      %v3633 = vrot.slane %v3551, 7
      %v3634 = vsel %vm3599, %v3633, %v3550
      %v3635 = vrot.slane %v3552, 6
      %v3636 = vsel %vm3602, %v3635, %v3634
      %v3637 = vrot.slane %v3553, 5
      %v3638 = vsel %vm3605, %v3637, %v3636
      %v3639 = vrot.slane %v3554, 4
      %v3640 = vsel %vm3608, %v3639, %v3638
      %v3641 = vrot.slane %v3555, 3
      %v3642 = vsel %vm3611, %v3641, %v3640
      %v3643 = vrot.slane %v3556, 2
      %v3644 = vsel %vm3614, %v3643, %v3642
      %v3645 = vrot.slane %v3557, 1
      %v3646 = vsel %vm3617, %v3645, %v3644
      %v3647 = vrot.slane %v3559, 7
      %v3648 = vsel %vm3599, %v3647, %v3558
      %v3649 = vrot.slane %v3560, 6
      %v3650 = vsel %vm3602, %v3649, %v3648
      %v3651 = vrot.slane %v3561, 5
      %v3652 = vsel %vm3605, %v3651, %v3650
      %v3653 = vrot.slane %v3562, 4
      %v3654 = vsel %vm3608, %v3653, %v3652
      %v3655 = vrot.slane %v3563, 3
      %v3656 = vsel %vm3611, %v3655, %v3654
      %v3657 = vrot.slane %v3564, 2
      %v3658 = vsel %vm3614, %v3657, %v3656
      %v3659 = vrot.slane %v3565, 1
      %v3660 = vsel %vm3617, %v3659, %v3658
      %3661 = vrot.lane.b32.xlu0 %v3618, 96
      %v3662 = vpop.permute.xlu0 %3661
      %3663 = vrot.lane.b32.xlu0 %v3632, 96
      %v3664 = vpop.permute.xlu0 %3663
      %3665 = vrot.lane.b32.xlu0 %v3646, 96
      %v3666 = vpop.permute.xlu0 %3665
      %3667 = vrot.lane.b32.xlu0 %v3660, 96
      %v3668 = vpop.permute.xlu0 %3667
      %v3673 = vadd.f32 %v3454, %v3662
      %v3674 = vadd.f32 %v3455, %v3664
      %v3675 = vadd.f32 %v3456, %v3666
      %v3676 = vadd.f32 %v3457, %v3668
      %vm3677 = vcmask 261120
      %3678 = vst.msk [vmem:[#allocation2] sm:$0xff] %vm3677, %v3673
      %3679 = vst.msk [vmem:[#allocation2 + $0x8] sm:$0xff] %vm3677, %v3674
      %3680 = vst.msk [vmem:[#allocation2 + $0x10] sm:$0xff] %vm3677, %v3675
      %3681 = vst.msk [vmem:[#allocation2 + $0x18] sm:$0xff] %vm3677, %v3676
      %p3682 = scmp.eq.s32.totalorder %s25, 2
      // Predicated region
      $region61: #{tpu_custom_call.1} parent=55 // pred_check
        %p3683 = pneg %p3682
      $region62: #{tpu_custom_call.1} parent=55 // pred_check_branch
        %3685 = sbr.rel (%p3683) target = $region64
      $region63: #{tpu_custom_call.1} parent=55 // pred_region
        %v3686 = vld [vmem:[#allocation2] sm:$0xff]
        %v3687 = vld [vmem:[#allocation2 + $0x8] sm:$0xff]
        %v3688 = vld [vmem:[#allocation2 + $0x10] sm:$0xff]
        %v3689 = vld [vmem:[#allocation2 + $0x18] sm:$0xff]
        %v3690 = vld [vmem:[%s7] sm:$0x1]
        %v3692 = vlaneseq
        %v3693 = vshrl.u32 %v3692, 7
        %v3694 = vsub.s32 0, %v3693
        %v3695 = vrot.slane %v3690, %v3694
        %v3697 = vmul.f32 %v3686, %v3695
        %v3698 = vmul.f32 %v3687, %v3695
        %v3699 = vmul.f32 %v3688, %v3695
        %v3700 = vmul.f32 %v3689, %v3695
        %v3701 = vld [vmem:[%s8] sm:$0x1]
        %v3703 = vlaneseq
        %v3704 = vshrl.u32 %v3703, 7
        %v3705 = vsub.s32 0, %v3704
        %v3706 = vrot.slane %v3701, %v3705
        %v3708 = vadd.f32 %v3697, %v3706
        %v3709 = vadd.f32 %v3698, %v3706
        %v3710 = vadd.f32 %v3699, %v3706
        %v3711 = vadd.f32 %v3700, %v3706
        %v3712 = vpack.c.bf16 %v3709, %v3708
        %v3713 = vpack.c.bf16 %v3711, %v3710
        %v3716 = vunpack.c.l.b16 %v3712
        %v3717 = vunpack.c.h.b16 %v3712
        %v3718 = vunpack.c.l.b16 %v3713
        %v3719 = vunpack.c.h.b16 %v3713
        %v3720 = vpack.c.b16 %v3716, %v3716
        %v3721 = vpack.c.b16 %v3717, %v3717
        %v3722 = vpack.c.b16 %v3718, %v3718
        %v3723 = vpack.c.b16 %v3719, %v3719
        %vm3728 = vcmask 257024
        %3729 = vst.msk [vmem:[%s360] sm:$0xf] %vm3728, %v3720
        %3730 = vst.msk [vmem:[%s360 + $0x4] sm:$0xf] %vm3728, %v3721
        %3731 = vst.msk [vmem:[%s360 + $0x8] sm:$0xf] %vm3728, %v3722
        %3732 = vst.msk [vmem:[%s360 + $0xc] sm:$0xf] %vm3728, %v3723
      $region64: #{tpu_custom_call.1} parent=55 // pred_fallthru
        _
      %s3733 = smul.u32 4, %s24
      %p3734 = scmp.lt.s32.totalorder %s3733, 7
      %s3735 = scalar_select %p3734, %s3733, 7
      %s3736 = smul.addr %s3735, 4
      %s3737 = scalar_lea.vmem %s9, %s3736
      // Predicated region
      $region65: #{tpu_custom_call.1} parent=55 // pred_check
        %p3738 = pneg %p246
      $region66: #{tpu_custom_call.1} parent=55 // pred_check_branch
        %3740 = sbr.rel (%p3738) target = $region68
      $region67: #{tpu_custom_call.1} parent=55 // pred_region
        %s3741 = smul.u32 4, %s24
      $region68: #{tpu_custom_call.1} parent=55 // pred_fallthru
        _
    $region56: #{tpu_custom_call.1} parent=5 // pred_fallthru
      _
    %p3742 = scmp.le.s32.totalorder 2, %s15
    // Predicated region
    $region69: #{tpu_custom_call.1} parent=5 // pred_check
      %p3743 = pneg %p3742
    $region70: #{tpu_custom_call.1} parent=5 // pred_check_branch
      %3745 = sbr.rel (%p3743) target = $region72
    $region71: #{tpu_custom_call.1} parent=5 // pred_region
      %s3746 = ssub.s32 %s15, 2
      // Predicated region
      $region73: #{tpu_custom_call.1} parent=71 // pred_check
        %p3747 = pneg %p252
      $region74: #{tpu_custom_call.1} parent=71 // pred_check_branch
        %3749 = sbr.rel (%p3747) target = $region76
      $region75: #{tpu_custom_call.1} parent=71 // pred_region
        %s3750 = smul.u32 4, %s26
        %p3751 = scmp.lt.s32.totalorder %s3750, 7
        %s3752 = scalar_select %p3751, %s3750, 7
        %s3753 = smul.addr %s3752, 4
        %s3754 = scalar_lea.vmem %s9, %s3753
      $region76: #{tpu_custom_call.1} parent=71 // pred_fallthru
        _
    $region72: #{tpu_custom_call.1} parent=5 // pred_fallthru
      _
  $region6: #{tpu_custom_call.1} parent=0 // loop_footer
    %s19 = sadd.s32 1, %s15
  $region7: #{tpu_custom_call.1} parent=0 // loop_footer_branch
    %14 = sbr.rel target = $region3
  $region8: #{tpu_custom_call.1} parent=0 // loop_exit
    _

</llo_original>
